<compile_context>
chip_gen: v5e
topology: v5e:2x2
jax: 0.10.0
libtpu: 0.0.40
codegen_flags: <defaults>
</compile_context>

<pallas_src>
import functools

import jax
import jax.numpy as jnp
from jax.experimental import pallas as pl
from jax.experimental.pallas import tpu as pltpu


# ---------------------------------------------------------------------------
# Config (scaled-down ViT-B/32-style encoder + trainable linear head)
# ---------------------------------------------------------------------------
class Config:
    image_size = 32
    patch = 16
    in_ch = 3
    width = 128          # transformer width (768 in real ViT-B/32) -> lane-dense
    heads = 4
    layers = 2
    embed_dim = 128      # CLIP image-feature dim (512 real) -> lane-dense
    num_classes = 10
    classes_padded = 128  # classifier zero-padded to a full lane group


def _ln(x, g, b, eps=1e-5):
    """LayerNorm over the last dim, f32 arithmetic; g/b broadcast (.., 1, D)."""
    mean = jnp.mean(x, axis=-1, keepdims=True)
    xc = x - mean
    var = jnp.mean(xc * xc, axis=-1, keepdims=True)
    return xc * jax.lax.rsqrt(var + eps) * g + b


# ---------------------------------------------------------------------------
# The fused kernel: embed prologue + L transformer blocks + head epilogue.
# grid = (batch_tiles, layers); tokens live in a VMEM scratch across layers.
# ---------------------------------------------------------------------------
def _clip_forward_kernel(
    patch_ref,                       # (bb, nP, CPP)   bf16
    conv_w_ref,                      # (CPP, D)        bf16
    cls_emb_ref, pos_emb_ref,        # (1, D), (T, D)  f32
    ln_pre_g_ref, ln_pre_b_ref,      # (1, D)          f32
    ln1_g_ref, ln1_b_ref,            # (1, 1, D)       f32
    wq_ref, bq_ref,                  # (1, H, D, dh) bf16 / (1, H, 1, dh) f32
    wk_ref, bk_ref,
    wv_ref, bv_ref,
    wo_ref, bo_ref,                  # (1, H, dh, D) bf16 / (1, 1, D) f32
    ln2_g_ref, ln2_b_ref,            # (1, 1, D)
    wfc_ref, bfc_ref,                # (1, D, 4D) bf16 / (1, 1, 4D)
    wpr_ref, bpr_ref,                # (1, 4D, D) bf16 / (1, 1, D)
    ln_post_g_ref, ln_post_b_ref,    # (1, D)
    proj_ref,                        # (D, E)          bf16
    cls_w_ref, cls_b_ref,            # (E, Cp) f32 / (1, Cp) f32
    feat_ref,                        # out: (1, bb, E)  f32
    logit_ref,                       # out: (1, bb, Cp) f32
    tok_ref,                         # scratch: (bb*T, D) f32
    *, bb, T, heads):
    layer = pl.program_id(1)
    last_layer = pl.num_programs(1) - 1
    bf16 = jnp.bfloat16
    f32 = jnp.float32

    # -- prologue (layer 0): patch embed + class token + pos emb + ln_pre ----
    @pl.when(layer == 0)
    def _embed():
        cls_tok = cls_emb_ref[...]
        pos = pos_emb_ref[...]
        g, b = ln_pre_g_ref[...], ln_pre_b_ref[...]
        for i in range(bb):
            y = jnp.dot(patch_ref[i], conv_w_ref[...],
                        preferred_element_type=f32)              # (nP, D)
            t = jnp.concatenate([cls_tok, y], axis=0) + pos       # (T, D)
            tok_ref[i * T:(i + 1) * T, :] = _ln(t, g, b)

    # -- one transformer residual block (runs on every (b, layer) step) ------
    x = tok_ref[...]                                              # (bb*T, D) f32

    # attention branch; batch folded into the matmul row dimension
    h16 = _ln(x, ln1_g_ref[0], ln1_b_ref[0]).astype(bf16)
    attn = jnp.zeros_like(x)
    for hd in range(heads):              # heads sliced on leading dims (free)
        q = jnp.dot(h16, wq_ref[0, hd], preferred_element_type=f32) + bq_ref[0, hd]
        k = jnp.dot(h16, wk_ref[0, hd], preferred_element_type=f32) + bk_ref[0, hd]
        v = jnp.dot(h16, wv_ref[0, hd], preferred_element_type=f32) + bv_ref[0, hd]
        outs = []
        for i in range(bb):              # softmax is per sequence
            qi = q[i * T:(i + 1) * T].astype(bf16)   # 1/sqrt(dh) pre-folded in wq/bq
            ki = k[i * T:(i + 1) * T].astype(bf16)
            vi = v[i * T:(i + 1) * T].astype(bf16)
            s = jax.lax.dot_general(qi, ki, (((1,), (1,)), ((), ())),
                                    preferred_element_type=f32)   # (T, T)
            s = s - jnp.max(s, axis=-1, keepdims=True)
            p = jnp.exp(s)
            p = p * pl.reciprocal(jnp.sum(p, axis=-1, keepdims=True), approx=True)
            outs.append(jnp.dot(p.astype(bf16), vi,
                                preferred_element_type=f32))      # (T, dh)
        o_h = outs[0] if bb == 1 else jnp.concatenate(outs, axis=0)   # (bb*T, dh)
        # out-proj accumulated per head: sum_h o_h @ Wo[h] == concat_h(o_h) @ Wo
        attn = attn + jnp.dot(o_h.astype(bf16), wo_ref[0, hd],
                              preferred_element_type=f32)
    x = x + attn + bo_ref[0]

    # MLP branch (QuickGELU); elementwise math kept in f32 (no bf16 VPU on v5e)
    h = _ln(x, ln2_g_ref[0], ln2_b_ref[0])
    h = jnp.dot(h.astype(bf16), wfc_ref[0], preferred_element_type=f32) + bfc_ref[0]
    h = h * jax.nn.sigmoid(1.702 * h)
    h = jnp.dot(h.astype(bf16), wpr_ref[0], preferred_element_type=f32) + bpr_ref[0]
    tok_ref[...] = x + h

    # -- epilogue (last layer): ln_post -> proj -> L2-normalize -> classifier -
    @pl.when(layer == last_layer)
    def _head():
        rows = [tok_ref[i * T:i * T + 1, :] for i in range(bb)]   # class tokens
        ct = rows[0] if bb == 1 else jnp.concatenate(rows, axis=0)  # (bb, D)
        hh = _ln(ct, ln_post_g_ref[...], ln_post_b_ref[...])
        feat = jnp.dot(hh.astype(bf16), proj_ref[...],
                       preferred_element_type=f32)                # (bb, E)
        feat = feat * jax.lax.rsqrt(
            jnp.sum(feat * feat, axis=-1, keepdims=True) + 1e-12)
        feat_ref[0] = feat
        # classifier is the trainable part -> stays in f32
        logit_ref[0] = jnp.dot(feat, cls_w_ref[...],
                               preferred_element_type=f32) + cls_b_ref[...]


# ---------------------------------------------------------------------------
# pallas_call wrapper
# ---------------------------------------------------------------------------
def _pick_batch_tile(B, T, target_rows=128):
    """Largest batch tile with bb*T <= target_rows that divides B while keeping
    >= 2 steps on the 'parallel' batch grid axis (v7x has 2 TensorCores)."""
    if B == 1:
        return 1
    best = 1
    for bb in range(1, B // 2 + 1):
        if B % bb == 0 and bb * T <= max(T, target_rows):
            best = bb
    return best


def clip_forward_fused(patches, params, cfg, *, batch_tile=None):
    B, nP, CPP = patches.shape
    D, H, L, E = cfg.width, cfg.heads, cfg.layers, cfg.embed_dim
    dh = D // H
    T = nP + 1
    Cp = params["cls_w"].shape[1]

    bb = batch_tile if batch_tile is not None else _pick_batch_tile(B, T)
    assert B % bb == 0
    nB = B // bb

    kern = functools.partial(_clip_forward_kernel, bb=bb, T=T, heads=H)

    def const(*shape):
        # Grid-invariant weights: DMA'd once; single-buffered so the pipeline
        # never allocates a useless second copy (matters on v7x's 64 MiB VMEM).
        return pl.BlockSpec(shape, lambda b, l: (0,) * len(shape),
                            pipeline_mode=pl.Buffered(1))

    def per_layer(*tail):
        # Per-layer weights stacked on a leading [L] axis, streamed over the
        # "arbitrary" layer axis (layer l+1 DMA overlaps layer l compute).
        return pl.BlockSpec((1,) + tail, lambda b, l: (l,) + (0,) * len(tail))

    # NOTE: at real ViT-B/32 scale (D=768) raise vmem_limit_bytes via
    # pltpu.CompilerParams and/or tile w_fc / w_pr along the 4D hidden dim.
    feat, logits = pl.pallas_call(
        kern,
        out_shape=(jax.ShapeDtypeStruct((nB, bb, E), jnp.float32),
                   jax.ShapeDtypeStruct((nB, bb, Cp), jnp.float32)),
        grid=(nB, L),
        in_specs=[
            pl.BlockSpec((bb, nP, CPP), lambda b, l: (b, 0, 0)),   # patches
            const(CPP, D), const(1, D), const(T, D),               # conv_w, cls, pos
            const(1, D), const(1, D),                              # ln_pre
            per_layer(1, D), per_layer(1, D),                      # ln1
            per_layer(H, D, dh), per_layer(H, 1, dh),              # w_q, b_q
            per_layer(H, D, dh), per_layer(H, 1, dh),              # w_k, b_k
            per_layer(H, D, dh), per_layer(H, 1, dh),              # w_v, b_v
            per_layer(H, dh, D), per_layer(1, D),                  # w_o, b_o
            per_layer(1, D), per_layer(1, D),                      # ln2
            per_layer(D, 4 * D), per_layer(1, 4 * D),              # mlp fc
            per_layer(4 * D, D), per_layer(1, D),                  # mlp proj
            const(1, D), const(1, D),                              # ln_post
            const(D, E),                                           # image proj
            const(E, Cp), const(1, Cp),                            # classifier
        ],
        out_specs=(pl.BlockSpec((1, bb, E), lambda b, l: (b, 0, 0)),
                   pl.BlockSpec((1, bb, Cp), lambda b, l: (b, 0, 0))),
        scratch_shapes=[pltpu.VMEM((bb * T, D), jnp.float32)],
        compiler_params=pltpu.CompilerParams(
            dimension_semantics=("parallel", "arbitrary")),
    )(patches,
      params["conv_w"], params["class_emb"], params["pos_emb"],
      params["ln_pre_g"], params["ln_pre_b"],
      params["ln1_g"], params["ln1_b"],
      params["w_q"], params["b_q"], params["w_k"], params["b_k"],
      params["w_v"], params["b_v"], params["w_o"], params["b_o"],
      params["ln2_g"], params["ln2_b"],
      params["w_fc"], params["b_fc"], params["w_pr"], params["b_pr"],
      params["ln_post_g"], params["ln_post_b"], params["proj"],
      params["cls_w"], params["cls_b"])

    return feat.reshape(B, E), logits.reshape(B, Cp)


# ---------------------------------------------------------------------------
# Parameter construction ("natural" checkpoint layout -> packed kernel layout)
# ---------------------------------------------------------------------------
def pack_blocks(blocks, H, dh):
    """Offline packing of the frozen per-layer CLIP weights:
       * stack on a leading [L] axis (streamed over the layer grid axis)
       * split QKV / out-proj per head onto leading axes (no in-kernel lane slicing)
       * fold the attention 1/sqrt(dh) scale into the Q projection
       * MXU weight operands -> bf16; biases / LN params stay f32, shaped (.., 1, N)
    """
    L = len(blocks)
    D = blocks[0]["w_qkv"].shape[0]
    scale = dh ** -0.5
    st = lambda k: jnp.stack([blk[k] for blk in blocks])          # (L, ...)

    w_qkv = st("w_qkv").reshape(L, D, 3, H, dh)                   # cols: [Q|K|V], head-major
    b_qkv = st("b_qkv").reshape(L, 3, H, 1, dh)
    head_major = lambda i: jnp.transpose(w_qkv[:, :, i], (0, 2, 1, 3))  # (L, H, D, dh)

    return dict(
        ln1_g=st("ln1_g")[:, None, :], ln1_b=st("ln1_b")[:, None, :],
        ln2_g=st("ln2_g")[:, None, :], ln2_b=st("ln2_b")[:, None, :],
        w_q=(head_major(0) * scale).astype(jnp.bfloat16), b_q=b_qkv[:, 0] * scale,
        w_k=head_major(1).astype(jnp.bfloat16), b_k=b_qkv[:, 1],
        w_v=head_major(2).astype(jnp.bfloat16), b_v=b_qkv[:, 2],
        w_o=st("w_o").reshape(L, H, dh, D).astype(jnp.bfloat16),
        b_o=st("b_o")[:, None, :],
        w_fc=st("w_fc").astype(jnp.bfloat16), b_fc=st("b_fc")[:, None, :],
        w_pr=st("w_pr").astype(jnp.bfloat16), b_pr=st("b_pr")[:, None, :],
    )


def init_params(key, cfg):
    # TODO(synk): real CLIP ViT-B/32 pretrained weights (clip.load) cannot be
    # loaded in a self-contained script; weights are random at scaled shapes.
    D, H, L, E = cfg.width, cfg.heads, cfg.layers, cfg.embed_dim
    dh = D // H
    CPP = cfg.in_ch * cfg.patch * cfg.patch
    T = (cfg.image_size // cfg.patch) ** 2 + 1
    Cp = cfg.classes_padded
    ks = iter(jax.random.split(key, 8 * L + 16))

    def rnd(shape, scale=0.02):
        return scale * jax.random.normal(next(ks), shape, jnp.float32)

    p = {
        # frozen CLIP weights: MXU weight operands stored bf16, rest f32
        "conv_w": rnd((CPP, D)).astype(jnp.bfloat16),
        "class_emb": rnd((1, D), D ** -0.5),
        "pos_emb": rnd((T, D), D ** -0.5),
        "ln_pre_g": jnp.ones((1, D), jnp.float32),
        "ln_pre_b": jnp.zeros((1, D), jnp.float32),
        "ln_post_g": jnp.ones((1, D), jnp.float32),
        "ln_post_b": jnp.zeros((1, D), jnp.float32),
        "proj": rnd((D, E), D ** -0.5).astype(jnp.bfloat16),
        # trainable classifier, zero-padded to 128 lanes (real logits sliced out)
        "cls_w": jnp.zeros((E, Cp), jnp.float32).at[:, :cfg.num_classes].set(
            rnd((E, cfg.num_classes))),
        "cls_b": jnp.zeros((1, Cp), jnp.float32),
    }
    blocks = []
    for _ in range(L):
        blocks.append(dict(
            ln1_g=jnp.ones((D,)), ln1_b=jnp.zeros((D,)),
            w_qkv=rnd((D, 3 * D)), b_qkv=jnp.zeros((3 * D,)),
            w_o=rnd((D, D)), b_o=jnp.zeros((D,)),
            ln2_g=jnp.ones((D,)), ln2_b=jnp.zeros((D,)),
            w_fc=rnd((D, 4 * D)), b_fc=jnp.zeros((4 * D,)),
            w_pr=rnd((4 * D, D)), b_pr=jnp.zeros((D,)),
        ))
    p.update(pack_blocks(blocks, H, dh))
    return p


# ---------------------------------------------------------------------------
# Forward (mirrors LinearCLIP.forward) + pure-JAX reference for validation
# ---------------------------------------------------------------------------
def patchify(x, P):
    """NCHW image -> [B, n_patches, C*P*P] with (c, kh, kw) flattening order,
    matching Conv2d(kernel=P, stride=P) weight.reshape(out, -1).T."""
    B, C, Hh, W = x.shape
    gh, gw = Hh // P, W // P
    p = x.reshape(B, C, gh, P, gw, P)
    p = p.transpose(0, 2, 4, 1, 3, 5)          # layout plumbing only
    return p.reshape(B, gh * gw, C * P * P)


def linear_clip_forward(x, params, cfg, out_feature=False):
    """encode_image -> L2 normalize -> linear classifier (one fused kernel)."""
    patches = patchify(x, cfg.patch).astype(jnp.bfloat16)   # pre-cast: halves DMA
    feat, logits_pad = clip_forward_fused(patches, params, cfg)
    logits = logits_pad[:, :cfg.num_classes]                # drop zero padding
    if out_feature:
        return feat, logits
    return logits


def reference_forward(x, p, cfg):
    """Pure-JAX mirror of the fused kernel (same packed bf16 weights)."""
    D, H, L = cfg.width, cfg.heads, cfg.layers
    bf16, f32 = jnp.bfloat16, jnp.float32
    mm = functools.partial(jnp.einsum, preferred_element_type=f32)

    patches = patchify(x, cfg.patch).astype(bf16)
    B = patches.shape[0]
    y = mm('bpc,cd->bpd', patches, p["conv_w"])
    cls = jnp.broadcast_to(p["class_emb"][None], (B, 1, D))
    t = jnp.concatenate([cls, y], axis=1) + p["pos_emb"][None]
    t = _ln(t, p["ln_pre_g"], p["ln_pre_b"])
    for l in range(L):
        h = _ln(t, p["ln1_g"][l], p["ln1_b"][l]).astype(bf16)
        attn = jnp.zeros_like(t)
        for hd in range(H):
            q = mm('btd,df->btf', h, p["w_q"][l, hd]) + p["b_q"][l, hd]
            k = mm('btd,df->btf', h, p["w_k"][l, hd]) + p["b_k"][l, hd]
            v = mm('btd,df->btf', h, p["w_v"][l, hd]) + p["b_v"][l, hd]
            s = mm('bqf,bkf->bqk', q.astype(bf16), k.astype(bf16))
            s = jax.nn.softmax(s, axis=-1)
            o = mm('bqk,bkf->bqf', s.astype(bf16), v.astype(bf16))
            attn = attn + mm('btf,fd->btd', o.astype(bf16), p["w_o"][l, hd])
        t = t + attn + p["b_o"][l]
        h = _ln(t, p["ln2_g"][l], p["ln2_b"][l])
        h = mm('btd,de->bte', h.astype(bf16), p["w_fc"][l]) + p["b_fc"][l]
        h = h * jax.nn.sigmoid(1.702 * h)
        h = mm('bte,ed->btd', h.astype(bf16), p["w_pr"][l]) + p["b_pr"][l]
        t = t + h
    ct = _ln(t[:, 0, :], p["ln_post_g"], p["ln_post_b"])
    feat = mm('bd,de->be', ct.astype(bf16), p["proj"])
    feat = feat / jnp.linalg.norm(feat, axis=-1, keepdims=True)
    logits = feat @ p["cls_w"] + p["cls_b"]
    return feat, logits[:, :cfg.num_classes]


if __name__ == "__main__":
    cfg = Config()
    key = jax.random.PRNGKey(0)
    k_param, k_input = jax.random.split(key)
    params = init_params(k_param, cfg)

    # NCHW input, like the PyTorch module.
    x = jax.random.normal(
        k_input, (2, cfg.in_ch, cfg.image_size, cfg.image_size), dtype=jnp.float32)

    fwd = jax.jit(functools.partial(linear_clip_forward, cfg=cfg, out_feature=True))
    feats, logits = fwd(x, params)
    jax.block_until_ready((feats, logits))

    assert feats.shape == (2, cfg.embed_dim)
    assert logits.shape == (2, cfg.num_classes)
    norms = jnp.linalg.norm(feats, axis=-1)
    assert jnp.allclose(norms, 1.0, atol=5e-3), norms   # features L2-normalized

    # semantic check against a pure-JAX reference on the same packed weights
    ref_feats, ref_logits = reference_forward(x, params, cfg)
    assert jnp.max(jnp.abs(feats - ref_feats)) < 2e-2
    assert jnp.max(jnp.abs(logits - ref_logits)) < 2e-2

    print("KERNEL_OK")
</pallas_src>

<mosaic_0001>
module attributes {stable_mosaic.version = 11 : i64} {
  func.func @_clip_forward_kernel(%arg0: i32, %arg1: i32, %arg2: memref<1x4x768xbf16, #tpu.memory_space<vmem>>, %arg3: memref<768x128xbf16, #tpu.memory_space<vmem>>, %arg4: memref<1x128xf32, #tpu.memory_space<vmem>>, %arg5: memref<5x128xf32, #tpu.memory_space<vmem>>, %arg6: memref<1x128xf32, #tpu.memory_space<vmem>>, %arg7: memref<1x128xf32, #tpu.memory_space<vmem>>, %arg8: memref<1x1x128xf32, #tpu.memory_space<vmem>>, %arg9: memref<1x1x128xf32, #tpu.memory_space<vmem>>, %arg10: memref<1x4x128x32xbf16, #tpu.memory_space<vmem>>, %arg11: memref<1x4x1x32xf32, #tpu.memory_space<vmem>>, %arg12: memref<1x4x128x32xbf16, #tpu.memory_space<vmem>>, %arg13: memref<1x4x1x32xf32, #tpu.memory_space<vmem>>, %arg14: memref<1x4x128x32xbf16, #tpu.memory_space<vmem>>, %arg15: memref<1x4x1x32xf32, #tpu.memory_space<vmem>>, %arg16: memref<1x4x32x128xbf16, #tpu.memory_space<vmem>>, %arg17: memref<1x1x128xf32, #tpu.memory_space<vmem>>, %arg18: memref<1x1x128xf32, #tpu.memory_space<vmem>>, %arg19: memref<1x1x128xf32, #tpu.memory_space<vmem>>, %arg20: memref<1x128x512xbf16, #tpu.memory_space<vmem>>, %arg21: memref<1x1x512xf32, #tpu.memory_space<vmem>>, %arg22: memref<1x512x128xbf16, #tpu.memory_space<vmem>>, %arg23: memref<1x1x128xf32, #tpu.memory_space<vmem>>, %arg24: memref<1x128xf32, #tpu.memory_space<vmem>>, %arg25: memref<1x128xf32, #tpu.memory_space<vmem>>, %arg26: memref<128x128xbf16, #tpu.memory_space<vmem>>, %arg27: memref<128x128xf32, #tpu.memory_space<vmem>>, %arg28: memref<1x128xf32, #tpu.memory_space<vmem>>, %arg29: memref<1x1x128xf32, #tpu.memory_space<vmem>>, %arg30: memref<1x1x128xf32, #tpu.memory_space<vmem>>, %arg31: memref<5x128xf32, #tpu.memory_space<vmem>>) attributes {dimension_semantics = [#tpu.dimension_semantics<parallel>, #tpu.dimension_semantics<arbitrary>], iteration_bounds = array<i64: 2, 2>, scalar_prefetch = 0 : i64, scratch_operands = 1 : i64, tpu.core_type = #tpu.core_type<tc>, window_params = [{transform_indices = @transform_0, window_bounds = array<i64: 1, 4, 768>}, {pipeline_mode = #tpu.pipeline_mode<synchronous>, transform_indices = @transform_1, window_bounds = array<i64: 768, 128>}, {pipeline_mode = #tpu.pipeline_mode<synchronous>, transform_indices = @transform_2, window_bounds = array<i64: 1, 128>}, {pipeline_mode = #tpu.pipeline_mode<synchronous>, transform_indices = @transform_3, window_bounds = array<i64: 5, 128>}, {pipeline_mode = #tpu.pipeline_mode<synchronous>, transform_indices = @transform_4, window_bounds = array<i64: 1, 128>}, {pipeline_mode = #tpu.pipeline_mode<synchronous>, transform_indices = @transform_5, window_bounds = array<i64: 1, 128>}, {transform_indices = @transform_6, window_bounds = array<i64: 1, 1, 128>}, {transform_indices = @transform_7, window_bounds = array<i64: 1, 1, 128>}, {transform_indices = @transform_8, window_bounds = array<i64: 1, 4, 128, 32>}, {transform_indices = @transform_9, window_bounds = array<i64: 1, 4, 1, 32>}, {transform_indices = @transform_10, window_bounds = array<i64: 1, 4, 128, 32>}, {transform_indices = @transform_11, window_bounds = array<i64: 1, 4, 1, 32>}, {transform_indices = @transform_12, window_bounds = array<i64: 1, 4, 128, 32>}, {transform_indices = @transform_13, window_bounds = array<i64: 1, 4, 1, 32>}, {transform_indices = @transform_14, window_bounds = array<i64: 1, 4, 32, 128>}, {transform_indices = @transform_15, window_bounds = array<i64: 1, 1, 128>}, {transform_indices = @transform_16, window_bounds = array<i64: 1, 1, 128>}, {transform_indices = @transform_17, window_bounds = array<i64: 1, 1, 128>}, {transform_indices = @transform_18, window_bounds = array<i64: 1, 128, 512>}, {transform_indices = @transform_19, window_bounds = array<i64: 1, 1, 512>}, {transform_indices = @transform_20, window_bounds = array<i64: 1, 512, 128>}, {transform_indices = @transform_21, window_bounds = array<i64: 1, 1, 128>}, {pipeline_mode = #tpu.pipeline_mode<synchronous>, transform_indices = @transform_22, window_bounds = array<i64: 1, 128>}, {pipeline_mode = #tpu.pipeline_mode<synchronous>, transform_indices = @transform_23, window_bounds = array<i64: 1, 128>}, {pipeline_mode = #tpu.pipeline_mode<synchronous>, transform_indices = @transform_24, window_bounds = array<i64: 128, 128>}, {pipeline_mode = #tpu.pipeline_mode<synchronous>, transform_indices = @transform_25, window_bounds = array<i64: 128, 128>}, {pipeline_mode = #tpu.pipeline_mode<synchronous>, transform_indices = @transform_26, window_bounds = array<i64: 1, 128>}, {transform_indices = @transform_27, window_bounds = array<i64: 1, 1, 128>}, {transform_indices = @transform_28, window_bounds = array<i64: 1, 1, 128>}]} {
    %c0_i32 = arith.constant 0 : i32
    %0 = arith.cmpi eq, %arg1, %c0_i32 : i32
    %1 = arith.extui %0 : i1 to i32
    %c0_i32_0 = arith.constant 0 : i32
    %2 = arith.cmpi ne, %1, %c0_i32_0 : i32
    scf.if %2 {
      %c0_187 = arith.constant 0 : index
      %c0_188 = arith.constant 0 : index
      %256 = vector.load %arg4[%c0_187, %c0_188] : memref<1x128xf32, #tpu.memory_space<vmem>>, vector<1x128xf32>
      %c0_189 = arith.constant 0 : index
      %c0_190 = arith.constant 0 : index
      %257 = vector.load %arg5[%c0_189, %c0_190] : memref<5x128xf32, #tpu.memory_space<vmem>>, vector<5x128xf32>
      %c0_191 = arith.constant 0 : index
      %c0_192 = arith.constant 0 : index
      %258 = vector.load %arg6[%c0_191, %c0_192] : memref<1x128xf32, #tpu.memory_space<vmem>>, vector<1x128xf32>
      %c0_193 = arith.constant 0 : index
      %c0_194 = arith.constant 0 : index
      %259 = vector.load %arg7[%c0_193, %c0_194] : memref<1x128xf32, #tpu.memory_space<vmem>>, vector<1x128xf32>
      %c0_195 = arith.constant 0 : index
      %c0_196 = arith.constant 0 : index
      %c0_197 = arith.constant 0 : index
      %260 = vector.load %arg2[%c0_195, %c0_196, %c0_197] : memref<1x4x768xbf16, #tpu.memory_space<vmem>>, vector<1x4x768xbf16>
      %261 = vector.shape_cast %260 : vector<1x4x768xbf16> to vector<4x768xbf16>
      %c0_198 = arith.constant 0 : index
      %c0_199 = arith.constant 0 : index
      %262 = vector.load %arg3[%c0_198, %c0_199] : memref<768x128xbf16, #tpu.memory_space<vmem>>, vector<768x128xbf16>
      %cst_200 = arith.constant dense<0.000000e+00> : vector<4x128xf32>
      %263 = tpu.matmul %261, %262, %cst_200 {dimension_numbers = #tpu.dot_dimension_numbers<[1], [0], [0], [1], [0, 0, 1, 1], [], []>} : vector<4x768xbf16>, vector<768x128xbf16>, vector<4x128xf32> -> vector<4x128xf32>
      %264 = tpu.concatenate %256, %263 in 0 : vector<1x128xf32>, vector<4x128xf32> -> vector<5x128xf32>
      %265 = arith.addf %264, %257 : vector<5x128xf32>
      %cst_201 = arith.constant dense<0.000000e+00> : vector<5xf32>
      %266 = vector.multi_reduction <add>, %265, %cst_201 [1] : vector<5x128xf32> to vector<5xf32>
      %267 = vector.shape_cast %266 : vector<5xf32> to vector<5x1xf32>
      %cst_202 = arith.constant 1.280000e+02 : f32
      %268 = vector.broadcast %cst_202 : f32 to vector<5x1xf32>
      %269 = arith.divf %267, %268 : vector<5x1xf32>
      %270 = vector.broadcast %269 : vector<5x1xf32> to vector<5x128xf32>
      %271 = arith.subf %265, %270 : vector<5x128xf32>
      %272 = arith.mulf %271, %271 : vector<5x128xf32>
      %cst_203 = arith.constant dense<0.000000e+00> : vector<5xf32>
      %273 = vector.multi_reduction <add>, %272, %cst_203 [1] : vector<5x128xf32> to vector<5xf32>
      %274 = vector.shape_cast %273 : vector<5xf32> to vector<5x1xf32>
      %cst_204 = arith.constant 1.280000e+02 : f32
      %275 = vector.broadcast %cst_204 : f32 to vector<5x1xf32>
      %276 = arith.divf %274, %275 : vector<5x1xf32>
      %cst_205 = arith.constant 9.99999974E-6 : f32
      %277 = vector.broadcast %cst_205 : f32 to vector<5x1xf32>
      %278 = arith.addf %276, %277 : vector<5x1xf32>
      %279 = math.rsqrt %278 : vector<5x1xf32>
      %280 = vector.broadcast %279 : vector<5x1xf32> to vector<5x128xf32>
      %281 = arith.mulf %271, %280 : vector<5x128xf32>
      %282 = vector.broadcast %258 : vector<1x128xf32> to vector<5x128xf32>
      %283 = arith.mulf %281, %282 : vector<5x128xf32>
      %284 = vector.broadcast %259 : vector<1x128xf32> to vector<5x128xf32>
      %285 = arith.addf %283, %284 : vector<5x128xf32>
      %c0_206 = arith.constant 0 : index
      %c0_207 = arith.constant 0 : index
      %286 = vector.load %arg31[%c0_206, %c0_207] : memref<5x128xf32, #tpu.memory_space<vmem>>, vector<5x128xf32>
      tpu.vector_store %arg31[%c0_206, %c0_207], %285 {strides = array<i32>} : memref<5x128xf32, #tpu.memory_space<vmem>>, vector<5x128xf32>,
    } else {
    }
    %c0 = arith.constant 0 : index
    %c0_1 = arith.constant 0 : index
    %3 = vector.load %arg31[%c0, %c0_1] : memref<5x128xf32, #tpu.memory_space<vmem>>, vector<5x128xf32>
    %c0_2 = arith.constant 0 : index
    %c0_3 = arith.constant 0 : index
    %c0_4 = arith.constant 0 : index
    %4 = vector.load %arg8[%c0_2, %c0_3, %c0_4] : memref<1x1x128xf32, #tpu.memory_space<vmem>>, vector<1x1x128xf32>
    %5 = vector.shape_cast %4 : vector<1x1x128xf32> to vector<1x128xf32>
    %c0_5 = arith.constant 0 : index
    %c0_6 = arith.constant 0 : index
    %c0_7 = arith.constant 0 : index
    %6 = vector.load %arg9[%c0_5, %c0_6, %c0_7] : memref<1x1x128xf32, #tpu.memory_space<vmem>>, vector<1x1x128xf32>
    %7 = vector.shape_cast %6 : vector<1x1x128xf32> to vector<1x128xf32>
    %cst = arith.constant dense<0.000000e+00> : vector<5xf32>
    %8 = vector.multi_reduction <add>, %3, %cst [1] : vector<5x128xf32> to vector<5xf32>
    %9 = vector.shape_cast %8 : vector<5xf32> to vector<5x1xf32>
    %cst_8 = arith.constant 1.280000e+02 : f32
    %10 = vector.broadcast %cst_8 : f32 to vector<5x1xf32>
    %11 = arith.divf %9, %10 : vector<5x1xf32>
    %12 = vector.broadcast %11 : vector<5x1xf32> to vector<5x128xf32>
    %13 = arith.subf %3, %12 : vector<5x128xf32>
    %14 = arith.mulf %13, %13 : vector<5x128xf32>
    %cst_9 = arith.constant dense<0.000000e+00> : vector<5xf32>
    %15 = vector.multi_reduction <add>, %14, %cst_9 [1] : vector<5x128xf32> to vector<5xf32>
    %16 = vector.shape_cast %15 : vector<5xf32> to vector<5x1xf32>
    %cst_10 = arith.constant 1.280000e+02 : f32
    %17 = vector.broadcast %cst_10 : f32 to vector<5x1xf32>
    %18 = arith.divf %16, %17 : vector<5x1xf32>
    %cst_11 = arith.constant 9.99999974E-6 : f32
    %19 = vector.broadcast %cst_11 : f32 to vector<5x1xf32>
    %20 = arith.addf %18, %19 : vector<5x1xf32>
    %21 = math.rsqrt %20 : vector<5x1xf32>
    %22 = vector.broadcast %21 : vector<5x1xf32> to vector<5x128xf32>
    %23 = arith.mulf %13, %22 : vector<5x128xf32>
    %24 = vector.broadcast %5 : vector<1x128xf32> to vector<5x128xf32>
    %25 = arith.mulf %23, %24 : vector<5x128xf32>
    %26 = vector.broadcast %7 : vector<1x128xf32> to vector<5x128xf32>
    %27 = arith.addf %25, %26 : vector<5x128xf32>
    %28 = arith.truncf %27 : vector<5x128xf32> to vector<5x128xbf16>
    %cst_12 = arith.constant 0.000000e+00 : f32
    %29 = vector.broadcast %cst_12 : f32 to vector<5x128xf32>
    %c0_13 = arith.constant 0 : index
    %c0_14 = arith.constant 0 : index
    %c0_15 = arith.constant 0 : index
    %c0_16 = arith.constant 0 : index
    %30 = vector.load %arg10[%c0_13, %c0_14, %c0_15, %c0_16] : memref<1x4x128x32xbf16, #tpu.memory_space<vmem>>, vector<1x1x128x32xbf16>
    %31 = vector.shape_cast %30 : vector<1x1x128x32xbf16> to vector<128x32xbf16>
    %cst_17 = arith.constant dense<0.000000e+00> : vector<5x32xf32>
    %32 = tpu.matmul %28, %31, %cst_17 {dimension_numbers = #tpu.dot_dimension_numbers<[1], [0], [0], [1], [0, 0, 1, 1], [], []>} : vector<5x128xbf16>, vector<128x32xbf16>, vector<5x32xf32> -> vector<5x32xf32>
    %c0_18 = arith.constant 0 : index
    %c0_19 = arith.constant 0 : index
    %c0_20 = arith.constant 0 : index
    %c0_21 = arith.constant 0 : index
    %33 = vector.load %arg11[%c0_18, %c0_19, %c0_20, %c0_21] : memref<1x4x1x32xf32, #tpu.memory_space<vmem>>, vector<1x1x1x32xf32>
    %34 = vector.shape_cast %33 : vector<1x1x1x32xf32> to vector<1x32xf32>
    %35 = vector.broadcast %34 : vector<1x32xf32> to vector<5x32xf32>
    %36 = arith.addf %32, %35 : vector<5x32xf32>
    %c0_22 = arith.constant 0 : index
    %c0_23 = arith.constant 0 : index
    %c0_24 = arith.constant 0 : index
    %c0_25 = arith.constant 0 : index
    %37 = vector.load %arg12[%c0_22, %c0_23, %c0_24, %c0_25] : memref<1x4x128x32xbf16, #tpu.memory_space<vmem>>, vector<1x1x128x32xbf16>
    %38 = vector.shape_cast %37 : vector<1x1x128x32xbf16> to vector<128x32xbf16>
    %cst_26 = arith.constant dense<0.000000e+00> : vector<5x32xf32>
    %39 = tpu.matmul %28, %38, %cst_26 {dimension_numbers = #tpu.dot_dimension_numbers<[1], [0], [0], [1], [0, 0, 1, 1], [], []>} : vector<5x128xbf16>, vector<128x32xbf16>, vector<5x32xf32> -> vector<5x32xf32>
    %c0_27 = arith.constant 0 : index
    %c0_28 = arith.constant 0 : index
    %c0_29 = arith.constant 0 : index
    %c0_30 = arith.constant 0 : index
    %40 = vector.load %arg13[%c0_27, %c0_28, %c0_29, %c0_30] : memref<1x4x1x32xf32, #tpu.memory_space<vmem>>, vector<1x1x1x32xf32>
    %41 = vector.shape_cast %40 : vector<1x1x1x32xf32> to vector<1x32xf32>
    %42 = vector.broadcast %41 : vector<1x32xf32> to vector<5x32xf32>
    %43 = arith.addf %39, %42 : vector<5x32xf32>
    %c0_31 = arith.constant 0 : index
    %c0_32 = arith.constant 0 : index
    %c0_33 = arith.constant 0 : index
    %c0_34 = arith.constant 0 : index
    %44 = vector.load %arg14[%c0_31, %c0_32, %c0_33, %c0_34] : memref<1x4x128x32xbf16, #tpu.memory_space<vmem>>, vector<1x1x128x32xbf16>
    %45 = vector.shape_cast %44 : vector<1x1x128x32xbf16> to vector<128x32xbf16>
    %cst_35 = arith.constant dense<0.000000e+00> : vector<5x32xf32>
    %46 = tpu.matmul %28, %45, %cst_35 {dimension_numbers = #tpu.dot_dimension_numbers<[1], [0], [0], [1], [0, 0, 1, 1], [], []>} : vector<5x128xbf16>, vector<128x32xbf16>, vector<5x32xf32> -> vector<5x32xf32>
    %c0_36 = arith.constant 0 : index
    %c0_37 = arith.constant 0 : index
    %c0_38 = arith.constant 0 : index
    %c0_39 = arith.constant 0 : index
    %47 = vector.load %arg15[%c0_36, %c0_37, %c0_38, %c0_39] : memref<1x4x1x32xf32, #tpu.memory_space<vmem>>, vector<1x1x1x32xf32>
    %48 = vector.shape_cast %47 : vector<1x1x1x32xf32> to vector<1x32xf32>
    %49 = vector.broadcast %48 : vector<1x32xf32> to vector<5x32xf32>
    %50 = arith.addf %46, %49 : vector<5x32xf32>
    %51 = arith.truncf %36 : vector<5x32xf32> to vector<5x32xbf16>
    %52 = arith.truncf %43 : vector<5x32xf32> to vector<5x32xbf16>
    %53 = arith.truncf %50 : vector<5x32xf32> to vector<5x32xbf16>
    %cst_40 = arith.constant dense<0.000000e+00> : vector<5x5xf32>
    %54 = tpu.matmul %51, %52, %cst_40 {dimension_numbers = #tpu.dot_dimension_numbers<[1], [1], [0], [0], [0, 0, 1, 0], [], []>} : vector<5x32xbf16>, vector<5x32xbf16>, vector<5x5xf32> -> vector<5x5xf32>
    %cst_41 = arith.constant dense<0xFF800000> : vector<5xf32>
    %55 = vector.multi_reduction <maximumf>, %54, %cst_41 [1] : vector<5x5xf32> to vector<5xf32>
    %56 = vector.shape_cast %55 : vector<5xf32> to vector<5x1xf32>
    %57 = vector.broadcast %56 : vector<5x1xf32> to vector<5x5xf32>
    %58 = arith.subf %54, %57 : vector<5x5xf32>
    %59 = math.exp %58 : vector<5x5xf32>
    %cst_42 = arith.constant dense<0.000000e+00> : vector<5xf32>
    %60 = vector.multi_reduction <add>, %59, %cst_42 [1] : vector<5x5xf32> to vector<5xf32>
    %61 = vector.shape_cast %60 : vector<5xf32> to vector<5x1xf32>
    %62 = tpu.reciprocal %61 {approx = true} : vector<5x1xf32> -> vector<5x1xf32>
    %63 = vector.broadcast %62 : vector<5x1xf32> to vector<5x5xf32>
    %64 = arith.mulf %59, %63 : vector<5x5xf32>
    %65 = arith.truncf %64 : vector<5x5xf32> to vector<5x5xbf16>
    %cst_43 = arith.constant dense<0.000000e+00> : vector<5x32xf32>
    %66 = tpu.matmul %65, %53, %cst_43 {dimension_numbers = #tpu.dot_dimension_numbers<[1], [0], [0], [1], [0, 0, 1, 1], [], []>} : vector<5x5xbf16>, vector<5x32xbf16>, vector<5x32xf32> -> vector<5x32xf32>
    %67 = arith.truncf %66 : vector<5x32xf32> to vector<5x32xbf16>
    %c0_44 = arith.constant 0 : index
    %c0_45 = arith.constant 0 : index
    %c0_46 = arith.constant 0 : index
    %c0_47 = arith.constant 0 : index
    %68 = vector.load %arg16[%c0_44, %c0_45, %c0_46, %c0_47] : memref<1x4x32x128xbf16, #tpu.memory_space<vmem>>, vector<1x1x32x128xbf16>
    %69 = vector.shape_cast %68 : vector<1x1x32x128xbf16> to vector<32x128xbf16>
    %cst_48 = arith.constant dense<0.000000e+00> : vector<5x128xf32>
    %70 = tpu.matmul %67, %69, %cst_48 {dimension_numbers = #tpu.dot_dimension_numbers<[1], [0], [0], [1], [0, 0, 1, 1], [], []>} : vector<5x32xbf16>, vector<32x128xbf16>, vector<5x128xf32> -> vector<5x128xf32>
    %71 = arith.addf %29, %70 : vector<5x128xf32>
    %c0_49 = arith.constant 0 : index
    %c1 = arith.constant 1 : index
    %c0_50 = arith.constant 0 : index
    %c0_51 = arith.constant 0 : index
    %72 = vector.load %arg10[%c0_49, %c1, %c0_50, %c0_51] : memref<1x4x128x32xbf16, #tpu.memory_space<vmem>>, vector<1x1x128x32xbf16>
    %73 = vector.shape_cast %72 : vector<1x1x128x32xbf16> to vector<128x32xbf16>
    %cst_52 = arith.constant dense<0.000000e+00> : vector<5x32xf32>
    %74 = tpu.matmul %28, %73, %cst_52 {dimension_numbers = #tpu.dot_dimension_numbers<[1], [0], [0], [1], [0, 0, 1, 1], [], []>} : vector<5x128xbf16>, vector<128x32xbf16>, vector<5x32xf32> -> vector<5x32xf32>
    %c0_53 = arith.constant 0 : index
    %c1_54 = arith.constant 1 : index
    %c0_55 = arith.constant 0 : index
    %c0_56 = arith.constant 0 : index
    %75 = vector.load %arg11[%c0_53, %c1_54, %c0_55, %c0_56] : memref<1x4x1x32xf32, #tpu.memory_space<vmem>>, vector<1x1x1x32xf32>
    %76 = vector.shape_cast %75 : vector<1x1x1x32xf32> to vector<1x32xf32>
    %77 = vector.broadcast %76 : vector<1x32xf32> to vector<5x32xf32>
    %78 = arith.addf %74, %77 : vector<5x32xf32>
    %c0_57 = arith.constant 0 : index
    %c1_58 = arith.constant 1 : index
    %c0_59 = arith.constant 0 : index
    %c0_60 = arith.constant 0 : index
    %79 = vector.load %arg12[%c0_57, %c1_58, %c0_59, %c0_60] : memref<1x4x128x32xbf16, #tpu.memory_space<vmem>>, vector<1x1x128x32xbf16>
    %80 = vector.shape_cast %79 : vector<1x1x128x32xbf16> to vector<128x32xbf16>
    %cst_61 = arith.constant dense<0.000000e+00> : vector<5x32xf32>
    %81 = tpu.matmul %28, %80, %cst_61 {dimension_numbers = #tpu.dot_dimension_numbers<[1], [0], [0], [1], [0, 0, 1, 1], [], []>} : vector<5x128xbf16>, vector<128x32xbf16>, vector<5x32xf32> -> vector<5x32xf32>
    %c0_62 = arith.constant 0 : index
    %c1_63 = arith.constant 1 : index
    %c0_64 = arith.constant 0 : index
    %c0_65 = arith.constant 0 : index
    %82 = vector.load %arg13[%c0_62, %c1_63, %c0_64, %c0_65] : memref<1x4x1x32xf32, #tpu.memory_space<vmem>>, vector<1x1x1x32xf32>
    %83 = vector.shape_cast %82 : vector<1x1x1x32xf32> to vector<1x32xf32>
    %84 = vector.broadcast %83 : vector<1x32xf32> to vector<5x32xf32>
    %85 = arith.addf %81, %84 : vector<5x32xf32>
    %c0_66 = arith.constant 0 : index
    %c1_67 = arith.constant 1 : index
    %c0_68 = arith.constant 0 : index
    %c0_69 = arith.constant 0 : index
    %86 = vector.load %arg14[%c0_66, %c1_67, %c0_68, %c0_69] : memref<1x4x128x32xbf16, #tpu.memory_space<vmem>>, vector<1x1x128x32xbf16>
    %87 = vector.shape_cast %86 : vector<1x1x128x32xbf16> to vector<128x32xbf16>
    %cst_70 = arith.constant dense<0.000000e+00> : vector<5x32xf32>
    %88 = tpu.matmul %28, %87, %cst_70 {dimension_numbers = #tpu.dot_dimension_numbers<[1], [0], [0], [1], [0, 0, 1, 1], [], []>} : vector<5x128xbf16>, vector<128x32xbf16>, vector<5x32xf32> -> vector<5x32xf32>
    %c0_71 = arith.constant 0 : index
    %c1_72 = arith.constant 1 : index
    %c0_73 = arith.constant 0 : index
    %c0_74 = arith.constant 0 : index
    %89 = vector.load %arg15[%c0_71, %c1_72, %c0_73, %c0_74] : memref<1x4x1x32xf32, #tpu.memory_space<vmem>>, vector<1x1x1x32xf32>
    %90 = vector.shape_cast %89 : vector<1x1x1x32xf32> to vector<1x32xf32>
    %91 = vector.broadcast %90 : vector<1x32xf32> to vector<5x32xf32>
    %92 = arith.addf %88, %91 : vector<5x32xf32>
    %93 = arith.truncf %78 : vector<5x32xf32> to vector<5x32xbf16>
    %94 = arith.truncf %85 : vector<5x32xf32> to vector<5x32xbf16>
    %95 = arith.truncf %92 : vector<5x32xf32> to vector<5x32xbf16>
    %cst_75 = arith.constant dense<0.000000e+00> : vector<5x5xf32>
    %96 = tpu.matmul %93, %94, %cst_75 {dimension_numbers = #tpu.dot_dimension_numbers<[1], [1], [0], [0], [0, 0, 1, 0], [], []>} : vector<5x32xbf16>, vector<5x32xbf16>, vector<5x5xf32> -> vector<5x5xf32>
    %cst_76 = arith.constant dense<0xFF800000> : vector<5xf32>
    %97 = vector.multi_reduction <maximumf>, %96, %cst_76 [1] : vector<5x5xf32> to vector<5xf32>
    %98 = vector.shape_cast %97 : vector<5xf32> to vector<5x1xf32>
    %99 = vector.broadcast %98 : vector<5x1xf32> to vector<5x5xf32>
    %100 = arith.subf %96, %99 : vector<5x5xf32>
    %101 = math.exp %100 : vector<5x5xf32>
    %cst_77 = arith.constant dense<0.000000e+00> : vector<5xf32>
    %102 = vector.multi_reduction <add>, %101, %cst_77 [1] : vector<5x5xf32> to vector<5xf32>
    %103 = vector.shape_cast %102 : vector<5xf32> to vector<5x1xf32>
    %104 = tpu.reciprocal %103 {approx = true} : vector<5x1xf32> -> vector<5x1xf32>
    %105 = vector.broadcast %104 : vector<5x1xf32> to vector<5x5xf32>
    %106 = arith.mulf %101, %105 : vector<5x5xf32>
    %107 = arith.truncf %106 : vector<5x5xf32> to vector<5x5xbf16>
    %cst_78 = arith.constant dense<0.000000e+00> : vector<5x32xf32>
    %108 = tpu.matmul %107, %95, %cst_78 {dimension_numbers = #tpu.dot_dimension_numbers<[1], [0], [0], [1], [0, 0, 1, 1], [], []>} : vector<5x5xbf16>, vector<5x32xbf16>, vector<5x32xf32> -> vector<5x32xf32>
    %109 = arith.truncf %108 : vector<5x32xf32> to vector<5x32xbf16>
    %c0_79 = arith.constant 0 : index
    %c1_80 = arith.constant 1 : index
    %c0_81 = arith.constant 0 : index
    %c0_82 = arith.constant 0 : index
    %110 = vector.load %arg16[%c0_79, %c1_80, %c0_81, %c0_82] : memref<1x4x32x128xbf16, #tpu.memory_space<vmem>>, vector<1x1x32x128xbf16>
    %111 = vector.shape_cast %110 : vector<1x1x32x128xbf16> to vector<32x128xbf16>
    %cst_83 = arith.constant dense<0.000000e+00> : vector<5x128xf32>
    %112 = tpu.matmul %109, %111, %cst_83 {dimension_numbers = #tpu.dot_dimension_numbers<[1], [0], [0], [1], [0, 0, 1, 1], [], []>} : vector<5x32xbf16>, vector<32x128xbf16>, vector<5x128xf32> -> vector<5x128xf32>
    %113 = arith.addf %71, %112 : vector<5x128xf32>
    %c0_84 = arith.constant 0 : index
    %c2 = arith.constant 2 : index
    %c0_85 = arith.constant 0 : index
    %c0_86 = arith.constant 0 : index
    %114 = vector.load %arg10[%c0_84, %c2, %c0_85, %c0_86] : memref<1x4x128x32xbf16, #tpu.memory_space<vmem>>, vector<1x1x128x32xbf16>
    %115 = vector.shape_cast %114 : vector<1x1x128x32xbf16> to vector<128x32xbf16>
    %cst_87 = arith.constant dense<0.000000e+00> : vector<5x32xf32>
    %116 = tpu.matmul %28, %115, %cst_87 {dimension_numbers = #tpu.dot_dimension_numbers<[1], [0], [0], [1], [0, 0, 1, 1], [], []>} : vector<5x128xbf16>, vector<128x32xbf16>, vector<5x32xf32> -> vector<5x32xf32>
    %c0_88 = arith.constant 0 : index
    %c2_89 = arith.constant 2 : index
    %c0_90 = arith.constant 0 : index
    %c0_91 = arith.constant 0 : index
    %117 = vector.load %arg11[%c0_88, %c2_89, %c0_90, %c0_91] : memref<1x4x1x32xf32, #tpu.memory_space<vmem>>, vector<1x1x1x32xf32>
    %118 = vector.shape_cast %117 : vector<1x1x1x32xf32> to vector<1x32xf32>
    %119 = vector.broadcast %118 : vector<1x32xf32> to vector<5x32xf32>
    %120 = arith.addf %116, %119 : vector<5x32xf32>
    %c0_92 = arith.constant 0 : index
    %c2_93 = arith.constant 2 : index
    %c0_94 = arith.constant 0 : index
    %c0_95 = arith.constant 0 : index
    %121 = vector.load %arg12[%c0_92, %c2_93, %c0_94, %c0_95] : memref<1x4x128x32xbf16, #tpu.memory_space<vmem>>, vector<1x1x128x32xbf16>
    %122 = vector.shape_cast %121 : vector<1x1x128x32xbf16> to vector<128x32xbf16>
    %cst_96 = arith.constant dense<0.000000e+00> : vector<5x32xf32>
    %123 = tpu.matmul %28, %122, %cst_96 {dimension_numbers = #tpu.dot_dimension_numbers<[1], [0], [0], [1], [0, 0, 1, 1], [], []>} : vector<5x128xbf16>, vector<128x32xbf16>, vector<5x32xf32> -> vector<5x32xf32>
    %c0_97 = arith.constant 0 : index
    %c2_98 = arith.constant 2 : index
    %c0_99 = arith.constant 0 : index
    %c0_100 = arith.constant 0 : index
    %124 = vector.load %arg13[%c0_97, %c2_98, %c0_99, %c0_100] : memref<1x4x1x32xf32, #tpu.memory_space<vmem>>, vector<1x1x1x32xf32>
    %125 = vector.shape_cast %124 : vector<1x1x1x32xf32> to vector<1x32xf32>
    %126 = vector.broadcast %125 : vector<1x32xf32> to vector<5x32xf32>
    %127 = arith.addf %123, %126 : vector<5x32xf32>
    %c0_101 = arith.constant 0 : index
    %c2_102 = arith.constant 2 : index
    %c0_103 = arith.constant 0 : index
    %c0_104 = arith.constant 0 : index
    %128 = vector.load %arg14[%c0_101, %c2_102, %c0_103, %c0_104] : memref<1x4x128x32xbf16, #tpu.memory_space<vmem>>, vector<1x1x128x32xbf16>
    %129 = vector.shape_cast %128 : vector<1x1x128x32xbf16> to vector<128x32xbf16>
    %cst_105 = arith.constant dense<0.000000e+00> : vector<5x32xf32>
    %130 = tpu.matmul %28, %129, %cst_105 {dimension_numbers = #tpu.dot_dimension_numbers<[1], [0], [0], [1], [0, 0, 1, 1], [], []>} : vector<5x128xbf16>, vector<128x32xbf16>, vector<5x32xf32> -> vector<5x32xf32>
    %c0_106 = arith.constant 0 : index
    %c2_107 = arith.constant 2 : index
    %c0_108 = arith.constant 0 : index
    %c0_109 = arith.constant 0 : index
    %131 = vector.load %arg15[%c0_106, %c2_107, %c0_108, %c0_109] : memref<1x4x1x32xf32, #tpu.memory_space<vmem>>, vector<1x1x1x32xf32>
    %132 = vector.shape_cast %131 : vector<1x1x1x32xf32> to vector<1x32xf32>
    %133 = vector.broadcast %132 : vector<1x32xf32> to vector<5x32xf32>
    %134 = arith.addf %130, %133 : vector<5x32xf32>
    %135 = arith.truncf %120 : vector<5x32xf32> to vector<5x32xbf16>
    %136 = arith.truncf %127 : vector<5x32xf32> to vector<5x32xbf16>
    %137 = arith.truncf %134 : vector<5x32xf32> to vector<5x32xbf16>
    %cst_110 = arith.constant dense<0.000000e+00> : vector<5x5xf32>
    %138 = tpu.matmul %135, %136, %cst_110 {dimension_numbers = #tpu.dot_dimension_numbers<[1], [1], [0], [0], [0, 0, 1, 0], [], []>} : vector<5x32xbf16>, vector<5x32xbf16>, vector<5x5xf32> -> vector<5x5xf32>
    %cst_111 = arith.constant dense<0xFF800000> : vector<5xf32>
    %139 = vector.multi_reduction <maximumf>, %138, %cst_111 [1] : vector<5x5xf32> to vector<5xf32>
    %140 = vector.shape_cast %139 : vector<5xf32> to vector<5x1xf32>
    %141 = vector.broadcast %140 : vector<5x1xf32> to vector<5x5xf32>
    %142 = arith.subf %138, %141 : vector<5x5xf32>
    %143 = math.exp %142 : vector<5x5xf32>
    %cst_112 = arith.constant dense<0.000000e+00> : vector<5xf32>
    %144 = vector.multi_reduction <add>, %143, %cst_112 [1] : vector<5x5xf32> to vector<5xf32>
    %145 = vector.shape_cast %144 : vector<5xf32> to vector<5x1xf32>
    %146 = tpu.reciprocal %145 {approx = true} : vector<5x1xf32> -> vector<5x1xf32>
    %147 = vector.broadcast %146 : vector<5x1xf32> to vector<5x5xf32>
    %148 = arith.mulf %143, %147 : vector<5x5xf32>
    %149 = arith.truncf %148 : vector<5x5xf32> to vector<5x5xbf16>
    %cst_113 = arith.constant dense<0.000000e+00> : vector<5x32xf32>
    %150 = tpu.matmul %149, %137, %cst_113 {dimension_numbers = #tpu.dot_dimension_numbers<[1], [0], [0], [1], [0, 0, 1, 1], [], []>} : vector<5x5xbf16>, vector<5x32xbf16>, vector<5x32xf32> -> vector<5x32xf32>
    %151 = arith.truncf %150 : vector<5x32xf32> to vector<5x32xbf16>
    %c0_114 = arith.constant 0 : index
    %c2_115 = arith.constant 2 : index
    %c0_116 = arith.constant 0 : index
    %c0_117 = arith.constant 0 : index
    %152 = vector.load %arg16[%c0_114, %c2_115, %c0_116, %c0_117] : memref<1x4x32x128xbf16, #tpu.memory_space<vmem>>, vector<1x1x32x128xbf16>
    %153 = vector.shape_cast %152 : vector<1x1x32x128xbf16> to vector<32x128xbf16>
    %cst_118 = arith.constant dense<0.000000e+00> : vector<5x128xf32>
    %154 = tpu.matmul %151, %153, %cst_118 {dimension_numbers = #tpu.dot_dimension_numbers<[1], [0], [0], [1], [0, 0, 1, 1], [], []>} : vector<5x32xbf16>, vector<32x128xbf16>, vector<5x128xf32> -> vector<5x128xf32>
    %155 = arith.addf %113, %154 : vector<5x128xf32>
    %c0_119 = arith.constant 0 : index
    %c3 = arith.constant 3 : index
    %c0_120 = arith.constant 0 : index
    %c0_121 = arith.constant 0 : index
    %156 = vector.load %arg10[%c0_119, %c3, %c0_120, %c0_121] : memref<1x4x128x32xbf16, #tpu.memory_space<vmem>>, vector<1x1x128x32xbf16>
    %157 = vector.shape_cast %156 : vector<1x1x128x32xbf16> to vector<128x32xbf16>
    %cst_122 = arith.constant dense<0.000000e+00> : vector<5x32xf32>
    %158 = tpu.matmul %28, %157, %cst_122 {dimension_numbers = #tpu.dot_dimension_numbers<[1], [0], [0], [1], [0, 0, 1, 1], [], []>} : vector<5x128xbf16>, vector<128x32xbf16>, vector<5x32xf32> -> vector<5x32xf32>
    %c0_123 = arith.constant 0 : index
    %c3_124 = arith.constant 3 : index
    %c0_125 = arith.constant 0 : index
    %c0_126 = arith.constant 0 : index
    %159 = vector.load %arg11[%c0_123, %c3_124, %c0_125, %c0_126] : memref<1x4x1x32xf32, #tpu.memory_space<vmem>>, vector<1x1x1x32xf32>
    %160 = vector.shape_cast %159 : vector<1x1x1x32xf32> to vector<1x32xf32>
    %161 = vector.broadcast %160 : vector<1x32xf32> to vector<5x32xf32>
    %162 = arith.addf %158, %161 : vector<5x32xf32>
    %c0_127 = arith.constant 0 : index
    %c3_128 = arith.constant 3 : index
    %c0_129 = arith.constant 0 : index
    %c0_130 = arith.constant 0 : index
    %163 = vector.load %arg12[%c0_127, %c3_128, %c0_129, %c0_130] : memref<1x4x128x32xbf16, #tpu.memory_space<vmem>>, vector<1x1x128x32xbf16>
    %164 = vector.shape_cast %163 : vector<1x1x128x32xbf16> to vector<128x32xbf16>
    %cst_131 = arith.constant dense<0.000000e+00> : vector<5x32xf32>
    %165 = tpu.matmul %28, %164, %cst_131 {dimension_numbers = #tpu.dot_dimension_numbers<[1], [0], [0], [1], [0, 0, 1, 1], [], []>} : vector<5x128xbf16>, vector<128x32xbf16>, vector<5x32xf32> -> vector<5x32xf32>
    %c0_132 = arith.constant 0 : index
    %c3_133 = arith.constant 3 : index
    %c0_134 = arith.constant 0 : index
    %c0_135 = arith.constant 0 : index
    %166 = vector.load %arg13[%c0_132, %c3_133, %c0_134, %c0_135] : memref<1x4x1x32xf32, #tpu.memory_space<vmem>>, vector<1x1x1x32xf32>
    %167 = vector.shape_cast %166 : vector<1x1x1x32xf32> to vector<1x32xf32>
    %168 = vector.broadcast %167 : vector<1x32xf32> to vector<5x32xf32>
    %169 = arith.addf %165, %168 : vector<5x32xf32>
    %c0_136 = arith.constant 0 : index
    %c3_137 = arith.constant 3 : index
    %c0_138 = arith.constant 0 : index
    %c0_139 = arith.constant 0 : index
    %170 = vector.load %arg14[%c0_136, %c3_137, %c0_138, %c0_139] : memref<1x4x128x32xbf16, #tpu.memory_space<vmem>>, vector<1x1x128x32xbf16>
    %171 = vector.shape_cast %170 : vector<1x1x128x32xbf16> to vector<128x32xbf16>
    %cst_140 = arith.constant dense<0.000000e+00> : vector<5x32xf32>
    %172 = tpu.matmul %28, %171, %cst_140 {dimension_numbers = #tpu.dot_dimension_numbers<[1], [0], [0], [1], [0, 0, 1, 1], [], []>} : vector<5x128xbf16>, vector<128x32xbf16>, vector<5x32xf32> -> vector<5x32xf32>
    %c0_141 = arith.constant 0 : index
    %c3_142 = arith.constant 3 : index
    %c0_143 = arith.constant 0 : index
    %c0_144 = arith.constant 0 : index
    %173 = vector.load %arg15[%c0_141, %c3_142, %c0_143, %c0_144] : memref<1x4x1x32xf32, #tpu.memory_space<vmem>>, vector<1x1x1x32xf32>
    %174 = vector.shape_cast %173 : vector<1x1x1x32xf32> to vector<1x32xf32>
    %175 = vector.broadcast %174 : vector<1x32xf32> to vector<5x32xf32>
    %176 = arith.addf %172, %175 : vector<5x32xf32>
    %177 = arith.truncf %162 : vector<5x32xf32> to vector<5x32xbf16>
    %178 = arith.truncf %169 : vector<5x32xf32> to vector<5x32xbf16>
    %179 = arith.truncf %176 : vector<5x32xf32> to vector<5x32xbf16>
    %cst_145 = arith.constant dense<0.000000e+00> : vector<5x5xf32>
    %180 = tpu.matmul %177, %178, %cst_145 {dimension_numbers = #tpu.dot_dimension_numbers<[1], [1], [0], [0], [0, 0, 1, 0], [], []>} : vector<5x32xbf16>, vector<5x32xbf16>, vector<5x5xf32> -> vector<5x5xf32>
    %cst_146 = arith.constant dense<0xFF800000> : vector<5xf32>
    %181 = vector.multi_reduction <maximumf>, %180, %cst_146 [1] : vector<5x5xf32> to vector<5xf32>
    %182 = vector.shape_cast %181 : vector<5xf32> to vector<5x1xf32>
    %183 = vector.broadcast %182 : vector<5x1xf32> to vector<5x5xf32>
    %184 = arith.subf %180, %183 : vector<5x5xf32>
    %185 = math.exp %184 : vector<5x5xf32>
    %cst_147 = arith.constant dense<0.000000e+00> : vector<5xf32>
    %186 = vector.multi_reduction <add>, %185, %cst_147 [1] : vector<5x5xf32> to vector<5xf32>
    %187 = vector.shape_cast %186 : vector<5xf32> to vector<5x1xf32>
    %188 = tpu.reciprocal %187 {approx = true} : vector<5x1xf32> -> vector<5x1xf32>
    %189 = vector.broadcast %188 : vector<5x1xf32> to vector<5x5xf32>
    %190 = arith.mulf %185, %189 : vector<5x5xf32>
    %191 = arith.truncf %190 : vector<5x5xf32> to vector<5x5xbf16>
    %cst_148 = arith.constant dense<0.000000e+00> : vector<5x32xf32>
    %192 = tpu.matmul %191, %179, %cst_148 {dimension_numbers = #tpu.dot_dimension_numbers<[1], [0], [0], [1], [0, 0, 1, 1], [], []>} : vector<5x5xbf16>, vector<5x32xbf16>, vector<5x32xf32> -> vector<5x32xf32>
    %193 = arith.truncf %192 : vector<5x32xf32> to vector<5x32xbf16>
    %c0_149 = arith.constant 0 : index
    %c3_150 = arith.constant 3 : index
    %c0_151 = arith.constant 0 : index
    %c0_152 = arith.constant 0 : index
    %194 = vector.load %arg16[%c0_149, %c3_150, %c0_151, %c0_152] : memref<1x4x32x128xbf16, #tpu.memory_space<vmem>>, vector<1x1x32x128xbf16>
    %195 = vector.shape_cast %194 : vector<1x1x32x128xbf16> to vector<32x128xbf16>
    %cst_153 = arith.constant dense<0.000000e+00> : vector<5x128xf32>
    %196 = tpu.matmul %193, %195, %cst_153 {dimension_numbers = #tpu.dot_dimension_numbers<[1], [0], [0], [1], [0, 0, 1, 1], [], []>} : vector<5x32xbf16>, vector<32x128xbf16>, vector<5x128xf32> -> vector<5x128xf32>
    %197 = arith.addf %155, %196 : vector<5x128xf32>
    %198 = arith.addf %3, %197 : vector<5x128xf32>
    %c0_154 = arith.constant 0 : index
    %c0_155 = arith.constant 0 : index
    %c0_156 = arith.constant 0 : index
    %199 = vector.load %arg17[%c0_154, %c0_155, %c0_156] : memref<1x1x128xf32, #tpu.memory_space<vmem>>, vector<1x1x128xf32>
    %200 = vector.shape_cast %199 : vector<1x1x128xf32> to vector<1x128xf32>
    %201 = vector.broadcast %200 : vector<1x128xf32> to vector<5x128xf32>
    %202 = arith.addf %198, %201 : vector<5x128xf32>
    %c0_157 = arith.constant 0 : index
    %c0_158 = arith.constant 0 : index
    %c0_159 = arith.constant 0 : index
    %203 = vector.load %arg18[%c0_157, %c0_158, %c0_159] : memref<1x1x128xf32, #tpu.memory_space<vmem>>, vector<1x1x128xf32>
    %204 = vector.shape_cast %203 : vector<1x1x128xf32> to vector<1x128xf32>
    %c0_160 = arith.constant 0 : index
    %c0_161 = arith.constant 0 : index
    %c0_162 = arith.constant 0 : index
    %205 = vector.load %arg19[%c0_160, %c0_161, %c0_162] : memref<1x1x128xf32, #tpu.memory_space<vmem>>, vector<1x1x128xf32>
    %206 = vector.shape_cast %205 : vector<1x1x128xf32> to vector<1x128xf32>
    %cst_163 = arith.constant dense<0.000000e+00> : vector<5xf32>
    %207 = vector.multi_reduction <add>, %202, %cst_163 [1] : vector<5x128xf32> to vector<5xf32>
    %208 = vector.shape_cast %207 : vector<5xf32> to vector<5x1xf32>
    %cst_164 = arith.constant 1.280000e+02 : f32
    %209 = vector.broadcast %cst_164 : f32 to vector<5x1xf32>
    %210 = arith.divf %208, %209 : vector<5x1xf32>
    %211 = vector.broadcast %210 : vector<5x1xf32> to vector<5x128xf32>
    %212 = arith.subf %202, %211 : vector<5x128xf32>
    %213 = arith.mulf %212, %212 : vector<5x128xf32>
    %cst_165 = arith.constant dense<0.000000e+00> : vector<5xf32>
    %214 = vector.multi_reduction <add>, %213, %cst_165 [1] : vector<5x128xf32> to vector<5xf32>
    %215 = vector.shape_cast %214 : vector<5xf32> to vector<5x1xf32>
    %cst_166 = arith.constant 1.280000e+02 : f32
    %216 = vector.broadcast %cst_166 : f32 to vector<5x1xf32>
    %217 = arith.divf %215, %216 : vector<5x1xf32>
    %cst_167 = arith.constant 9.99999974E-6 : f32
    %218 = vector.broadcast %cst_167 : f32 to vector<5x1xf32>
    %219 = arith.addf %217, %218 : vector<5x1xf32>
    %220 = math.rsqrt %219 : vector<5x1xf32>
    %221 = vector.broadcast %220 : vector<5x1xf32> to vector<5x128xf32>
    %222 = arith.mulf %212, %221 : vector<5x128xf32>
    %223 = vector.broadcast %204 : vector<1x128xf32> to vector<5x128xf32>
    %224 = arith.mulf %222, %223 : vector<5x128xf32>
    %225 = vector.broadcast %206 : vector<1x128xf32> to vector<5x128xf32>
    %226 = arith.addf %224, %225 : vector<5x128xf32>
    %227 = arith.truncf %226 : vector<5x128xf32> to vector<5x128xbf16>
    %c0_168 = arith.constant 0 : index
    %c0_169 = arith.constant 0 : index
    %c0_170 = arith.constant 0 : index
    %228 = vector.load %arg20[%c0_168, %c0_169, %c0_170] : memref<1x128x512xbf16, #tpu.memory_space<vmem>>, vector<1x128x512xbf16>
    %229 = vector.shape_cast %228 : vector<1x128x512xbf16> to vector<128x512xbf16>
    %cst_171 = arith.constant dense<0.000000e+00> : vector<5x512xf32>
    %230 = tpu.matmul %227, %229, %cst_171 {dimension_numbers = #tpu.dot_dimension_numbers<[1], [0], [0], [1], [0, 0, 1, 1], [], []>} : vector<5x128xbf16>, vector<128x512xbf16>, vector<5x512xf32> -> vector<5x512xf32>
    %c0_172 = arith.constant 0 : index
    %c0_173 = arith.constant 0 : index
    %c0_174 = arith.constant 0 : index
    %231 = vector.load %arg21[%c0_172, %c0_173, %c0_174] : memref<1x1x512xf32, #tpu.memory_space<vmem>>, vector<1x1x512xf32>
    %232 = vector.shape_cast %231 : vector<1x1x512xf32> to vector<1x512xf32>
    %233 = vector.broadcast %232 : vector<1x512xf32> to vector<5x512xf32>
    %234 = arith.addf %230, %233 : vector<5x512xf32>
    %cst_175 = arith.constant 1.702000e+00 : f32
    %235 = vector.broadcast %cst_175 : f32 to vector<5x512xf32>
    %236 = arith.mulf %235, %234 : vector<5x512xf32>
    %237 = arith.negf %236 : vector<5x512xf32>
    %238 = math.exp %237 : vector<5x512xf32>
    %cst_176 = arith.constant 1.000000e+00 : f32
    %239 = vector.broadcast %cst_176 : f32 to vector<5x512xf32>
    %240 = arith.addf %239, %238 : vector<5x512xf32>
    %241 = arith.divf %239, %240 : vector<5x512xf32>
    %242 = arith.mulf %234, %241 : vector<5x512xf32>
    %243 = arith.truncf %242 : vector<5x512xf32> to vector<5x512xbf16>
    %c0_177 = arith.constant 0 : index
    %c0_178 = arith.constant 0 : index
    %c0_179 = arith.constant 0 : index
    %244 = vector.load %arg22[%c0_177, %c0_178, %c0_179] : memref<1x512x128xbf16, #tpu.memory_space<vmem>>, vector<1x512x128xbf16>
    %245 = vector.shape_cast %244 : vector<1x512x128xbf16> to vector<512x128xbf16>
    %cst_180 = arith.constant dense<0.000000e+00> : vector<5x128xf32>
    %246 = tpu.matmul %243, %245, %cst_180 {dimension_numbers = #tpu.dot_dimension_numbers<[1], [0], [0], [1], [0, 0, 1, 1], [], []>} : vector<5x512xbf16>, vector<512x128xbf16>, vector<5x128xf32> -> vector<5x128xf32>
    %c0_181 = arith.constant 0 : index
    %c0_182 = arith.constant 0 : index
    %c0_183 = arith.constant 0 : index
    %247 = vector.load %arg23[%c0_181, %c0_182, %c0_183] : memref<1x1x128xf32, #tpu.memory_space<vmem>>, vector<1x1x128xf32>
    %248 = vector.shape_cast %247 : vector<1x1x128xf32> to vector<1x128xf32>
    %249 = vector.broadcast %248 : vector<1x128xf32> to vector<5x128xf32>
    %250 = arith.addf %246, %249 : vector<5x128xf32>
    %251 = arith.addf %202, %250 : vector<5x128xf32>
    %c0_184 = arith.constant 0 : index
    %c0_185 = arith.constant 0 : index
    %252 = vector.load %arg31[%c0_184, %c0_185] : memref<5x128xf32, #tpu.memory_space<vmem>>, vector<5x128xf32>
    tpu.vector_store %arg31[%c0_184, %c0_185], %251 {strides = array<i32>} : memref<5x128xf32, #tpu.memory_space<vmem>>, vector<5x128xf32>,
    %c1_i32 = arith.constant 1 : i32
    %253 = arith.cmpi eq, %arg1, %c1_i32 : i32
    %254 = arith.extui %253 : i1 to i32
    %c0_i32_186 = arith.constant 0 : i32
    %255 = arith.cmpi ne, %254, %c0_i32_186 : i32
    scf.if %255 {
      %c0_187 = arith.constant 0 : index
      %c0_188 = arith.constant 0 : index
      %256 = vector.load %arg31[%c0_187, %c0_188] : memref<5x128xf32, #tpu.memory_space<vmem>>, vector<1x128xf32>
      %c0_189 = arith.constant 0 : index
      %c0_190 = arith.constant 0 : index
      %257 = vector.load %arg24[%c0_189, %c0_190] : memref<1x128xf32, #tpu.memory_space<vmem>>, vector<1x128xf32>
      %c0_191 = arith.constant 0 : index
      %c0_192 = arith.constant 0 : index
      %258 = vector.load %arg25[%c0_191, %c0_192] : memref<1x128xf32, #tpu.memory_space<vmem>>, vector<1x128xf32>
      %cst_193 = arith.constant dense<0.000000e+00> : vector<1xf32>
      %259 = vector.multi_reduction <add>, %256, %cst_193 [1] : vector<1x128xf32> to vector<1xf32>
      %260 = vector.shape_cast %259 : vector<1xf32> to vector<1x1xf32>
      %cst_194 = arith.constant 1.280000e+02 : f32
      %261 = vector.broadcast %cst_194 : f32 to vector<1x1xf32>
      %262 = arith.divf %260, %261 : vector<1x1xf32>
      %263 = vector.broadcast %262 : vector<1x1xf32> to vector<1x128xf32>
      %264 = arith.subf %256, %263 : vector<1x128xf32>
      %265 = arith.mulf %264, %264 : vector<1x128xf32>
      %cst_195 = arith.constant dense<0.000000e+00> : vector<1xf32>
      %266 = vector.multi_reduction <add>, %265, %cst_195 [1] : vector<1x128xf32> to vector<1xf32>
      %267 = vector.shape_cast %266 : vector<1xf32> to vector<1x1xf32>
      %cst_196 = arith.constant 1.280000e+02 : f32
      %268 = vector.broadcast %cst_196 : f32 to vector<1x1xf32>
      %269 = arith.divf %267, %268 : vector<1x1xf32>
      %cst_197 = arith.constant 9.99999974E-6 : f32
      %270 = vector.broadcast %cst_197 : f32 to vector<1x1xf32>
      %271 = arith.addf %269, %270 : vector<1x1xf32>
      %272 = math.rsqrt %271 : vector<1x1xf32>
      %273 = vector.broadcast %272 : vector<1x1xf32> to vector<1x128xf32>
      %274 = arith.mulf %264, %273 : vector<1x128xf32>
      %275 = arith.mulf %274, %257 : vector<1x128xf32>
      %276 = arith.addf %275, %258 : vector<1x128xf32>
      %277 = arith.truncf %276 : vector<1x128xf32> to vector<1x128xbf16>
      %c0_198 = arith.constant 0 : index
      %c0_199 = arith.constant 0 : index
      %278 = vector.load %arg26[%c0_198, %c0_199] : memref<128x128xbf16, #tpu.memory_space<vmem>>, vector<128x128xbf16>
      %cst_200 = arith.constant dense<0.000000e+00> : vector<1x128xf32>
      %279 = tpu.matmul %277, %278, %cst_200 {dimension_numbers = #tpu.dot_dimension_numbers<[1], [0], [0], [1], [0, 0, 1, 1], [], []>} : vector<1x128xbf16>, vector<128x128xbf16>, vector<1x128xf32> -> vector<1x128xf32>
      %280 = arith.mulf %279, %279 : vector<1x128xf32>
      %cst_201 = arith.constant dense<0.000000e+00> : vector<1xf32>
      %281 = vector.multi_reduction <add>, %280, %cst_201 [1] : vector<1x128xf32> to vector<1xf32>
      %282 = vector.shape_cast %281 : vector<1xf32> to vector<1x1xf32>
      %cst_202 = arith.constant 9.99999996E-13 : f32
      %283 = vector.broadcast %cst_202 : f32 to vector<1x1xf32>
      %284 = arith.addf %282, %283 : vector<1x1xf32>
      %285 = math.rsqrt %284 : vector<1x1xf32>
      %286 = vector.broadcast %285 : vector<1x1xf32> to vector<1x128xf32>
      %287 = arith.mulf %279, %286 : vector<1x128xf32>
      %c0_203 = arith.constant 0 : index
      %c0_204 = arith.constant 0 : index
      %c0_205 = arith.constant 0 : index
      %288 = vector.load %arg29[%c0_203, %c0_204, %c0_205] : memref<1x1x128xf32, #tpu.memory_space<vmem>>, vector<1x1x128xf32>
      %289 = vector.shape_cast %288 : vector<1x1x128xf32> to vector<1x128xf32>
      %290 = vector.shape_cast %287 : vector<1x128xf32> to vector<1x1x128xf32>
      tpu.vector_store %arg29[%c0_203, %c0_204, %c0_205], %290 {strides = array<i32>} : memref<1x1x128xf32, #tpu.memory_space<vmem>>, vector<1x1x128xf32>,
      %c0_206 = arith.constant 0 : index
      %c0_207 = arith.constant 0 : index
      %291 = vector.load %arg27[%c0_206, %c0_207] : memref<128x128xf32, #tpu.memory_space<vmem>>, vector<128x128xf32>
      %cst_208 = arith.constant dense<0.000000e+00> : vector<1x128xf32>
      %292 = tpu.matmul %287, %291, %cst_208 {dimension_numbers = #tpu.dot_dimension_numbers<[1], [0], [0], [1], [0, 0, 1, 1], [], []>} : vector<1x128xf32>, vector<128x128xf32>, vector<1x128xf32> -> vector<1x128xf32>
      %c0_209 = arith.constant 0 : index
      %c0_210 = arith.constant 0 : index
      %293 = vector.load %arg28[%c0_209, %c0_210] : memref<1x128xf32, #tpu.memory_space<vmem>>, vector<1x128xf32>
      %294 = arith.addf %292, %293 : vector<1x128xf32>
      %c0_211 = arith.constant 0 : index
      %c0_212 = arith.constant 0 : index
      %c0_213 = arith.constant 0 : index
      %295 = vector.load %arg30[%c0_211, %c0_212, %c0_213] : memref<1x1x128xf32, #tpu.memory_space<vmem>>, vector<1x1x128xf32>
      %296 = vector.shape_cast %295 : vector<1x1x128xf32> to vector<1x128xf32>
      %297 = vector.shape_cast %294 : vector<1x128xf32> to vector<1x1x128xf32>
      tpu.vector_store %arg30[%c0_211, %c0_212, %c0_213], %297 {strides = array<i32>} : memref<1x1x128xf32, #tpu.memory_space<vmem>>, vector<1x1x128xf32>,
    } else {
    }
    return
  }
  func.func @transform_0(%arg0: i32, %arg1: i32) -> (i32, i32, i32) {
    %c0_i32 = arith.constant 0 : i32
    %c0_i32_0 = arith.constant 0 : i32
    %c0_i32_1 = arith.constant 0 : i32
    return %arg0, %c0_i32, %c0_i32_0 : i32, i32, i32
  }
  func.func @transform_1(%arg0: i32, %arg1: i32) -> (i32, i32) {
    %c0_i32 = arith.constant 0 : i32
    %c0_i32_0 = arith.constant 0 : i32
    %c0_i32_1 = arith.constant 0 : i32
    return %c0_i32, %c0_i32_0 : i32, i32
  }
  func.func @transform_2(%arg0: i32, %arg1: i32) -> (i32, i32) {
    %c0_i32 = arith.constant 0 : i32
    %c0_i32_0 = arith.constant 0 : i32
    %c0_i32_1 = arith.constant 0 : i32
    return %c0_i32, %c0_i32_0 : i32, i32
  }
  func.func @transform_3(%arg0: i32, %arg1: i32) -> (i32, i32) {
    %c0_i32 = arith.constant 0 : i32
    %c0_i32_0 = arith.constant 0 : i32
    %c0_i32_1 = arith.constant 0 : i32
    return %c0_i32, %c0_i32_0 : i32, i32
  }
  func.func @transform_4(%arg0: i32, %arg1: i32) -> (i32, i32) {
    %c0_i32 = arith.constant 0 : i32
    %c0_i32_0 = arith.constant 0 : i32
    %c0_i32_1 = arith.constant 0 : i32
    return %c0_i32, %c0_i32_0 : i32, i32
  }
  func.func @transform_5(%arg0: i32, %arg1: i32) -> (i32, i32) {
    %c0_i32 = arith.constant 0 : i32
    %c0_i32_0 = arith.constant 0 : i32
    %c0_i32_1 = arith.constant 0 : i32
    return %c0_i32, %c0_i32_0 : i32, i32
  }
  func.func @transform_6(%arg0: i32, %arg1: i32) -> (i32, i32, i32) {
    %c0_i32 = arith.constant 0 : i32
    %c0_i32_0 = arith.constant 0 : i32
    %c0_i32_1 = arith.constant 0 : i32
    return %arg1, %c0_i32, %c0_i32_0 : i32, i32, i32
  }
  func.func @transform_7(%arg0: i32, %arg1: i32) -> (i32, i32, i32) {
    %c0_i32 = arith.constant 0 : i32
    %c0_i32_0 = arith.constant 0 : i32
    %c0_i32_1 = arith.constant 0 : i32
    return %arg1, %c0_i32, %c0_i32_0 : i32, i32, i32
  }
  func.func @transform_8(%arg0: i32, %arg1: i32) -> (i32, i32, i32, i32) {
    %c0_i32 = arith.constant 0 : i32
    %c0_i32_0 = arith.constant 0 : i32
    %c0_i32_1 = arith.constant 0 : i32
    %c0_i32_2 = arith.constant 0 : i32
    return %arg1, %c0_i32, %c0_i32_0, %c0_i32_1 : i32, i32, i32, i32
  }
  func.func @transform_9(%arg0: i32, %arg1: i32) -> (i32, i32, i32, i32) {
    %c0_i32 = arith.constant 0 : i32
    %c0_i32_0 = arith.constant 0 : i32
    %c0_i32_1 = arith.constant 0 : i32
    %c0_i32_2 = arith.constant 0 : i32
    return %arg1, %c0_i32, %c0_i32_0, %c0_i32_1 : i32, i32, i32, i32
  }
  func.func @transform_10(%arg0: i32, %arg1: i32) -> (i32, i32, i32, i32) {
    %c0_i32 = arith.constant 0 : i32
    %c0_i32_0 = arith.constant 0 : i32
    %c0_i32_1 = arith.constant 0 : i32
    %c0_i32_2 = arith.constant 0 : i32
    return %arg1, %c0_i32, %c0_i32_0, %c0_i32_1 : i32, i32, i32, i32
  }
  func.func @transform_11(%arg0: i32, %arg1: i32) -> (i32, i32, i32, i32) {
    %c0_i32 = arith.constant 0 : i32
    %c0_i32_0 = arith.constant 0 : i32
    %c0_i32_1 = arith.constant 0 : i32
    %c0_i32_2 = arith.constant 0 : i32
    return %arg1, %c0_i32, %c0_i32_0, %c0_i32_1 : i32, i32, i32, i32
  }
  func.func @transform_12(%arg0: i32, %arg1: i32) -> (i32, i32, i32, i32) {
    %c0_i32 = arith.constant 0 : i32
    %c0_i32_0 = arith.constant 0 : i32
    %c0_i32_1 = arith.constant 0 : i32
    %c0_i32_2 = arith.constant 0 : i32
    return %arg1, %c0_i32, %c0_i32_0, %c0_i32_1 : i32, i32, i32, i32
  }
  func.func @transform_13(%arg0: i32, %arg1: i32) -> (i32, i32, i32, i32) {
    %c0_i32 = arith.constant 0 : i32
    %c0_i32_0 = arith.constant 0 : i32
    %c0_i32_1 = arith.constant 0 : i32
    %c0_i32_2 = arith.constant 0 : i32
    return %arg1, %c0_i32, %c0_i32_0, %c0_i32_1 : i32, i32, i32, i32
  }
  func.func @transform_14(%arg0: i32, %arg1: i32) -> (i32, i32, i32, i32) {
    %c0_i32 = arith.constant 0 : i32
    %c0_i32_0 = arith.constant 0 : i32
    %c0_i32_1 = arith.constant 0 : i32
    %c0_i32_2 = arith.constant 0 : i32
    return %arg1, %c0_i32, %c0_i32_0, %c0_i32_1 : i32, i32, i32, i32
  }
  func.func @transform_15(%arg0: i32, %arg1: i32) -> (i32, i32, i32) {
    %c0_i32 = arith.constant 0 : i32
    %c0_i32_0 = arith.constant 0 : i32
    %c0_i32_1 = arith.constant 0 : i32
    return %arg1, %c0_i32, %c0_i32_0 : i32, i32, i32
  }
  func.func @transform_16(%arg0: i32, %arg1: i32) -> (i32, i32, i32) {
    %c0_i32 = arith.constant 0 : i32
    %c0_i32_0 = arith.constant 0 : i32
    %c0_i32_1 = arith.constant 0 : i32
    return %arg1, %c0_i32, %c0_i32_0 : i32, i32, i32
  }
  func.func @transform_17(%arg0: i32, %arg1: i32) -> (i32, i32, i32) {
    %c0_i32 = arith.constant 0 : i32
    %c0_i32_0 = arith.constant 0 : i32
    %c0_i32_1 = arith.constant 0 : i32
    return %arg1, %c0_i32, %c0_i32_0 : i32, i32, i32
  }
  func.func @transform_18(%arg0: i32, %arg1: i32) -> (i32, i32, i32) {
    %c0_i32 = arith.constant 0 : i32
    %c0_i32_0 = arith.constant 0 : i32
    %c0_i32_1 = arith.constant 0 : i32
    return %arg1, %c0_i32, %c0_i32_0 : i32, i32, i32
  }
  func.func @transform_19(%arg0: i32, %arg1: i32) -> (i32, i32, i32) {
    %c0_i32 = arith.constant 0 : i32
    %c0_i32_0 = arith.constant 0 : i32
    %c0_i32_1 = arith.constant 0 : i32
    return %arg1, %c0_i32, %c0_i32_0 : i32, i32, i32
  }
  func.func @transform_20(%arg0: i32, %arg1: i32) -> (i32, i32, i32) {
    %c0_i32 = arith.constant 0 : i32
    %c0_i32_0 = arith.constant 0 : i32
    %c0_i32_1 = arith.constant 0 : i32
    return %arg1, %c0_i32, %c0_i32_0 : i32, i32, i32
  }
  func.func @transform_21(%arg0: i32, %arg1: i32) -> (i32, i32, i32) {
    %c0_i32 = arith.constant 0 : i32
    %c0_i32_0 = arith.constant 0 : i32
    %c0_i32_1 = arith.constant 0 : i32
    return %arg1, %c0_i32, %c0_i32_0 : i32, i32, i32
  }
  func.func @transform_22(%arg0: i32, %arg1: i32) -> (i32, i32) {
    %c0_i32 = arith.constant 0 : i32
    %c0_i32_0 = arith.constant 0 : i32
    %c0_i32_1 = arith.constant 0 : i32
    return %c0_i32, %c0_i32_0 : i32, i32
  }
  func.func @transform_23(%arg0: i32, %arg1: i32) -> (i32, i32) {
    %c0_i32 = arith.constant 0 : i32
    %c0_i32_0 = arith.constant 0 : i32
    %c0_i32_1 = arith.constant 0 : i32
    return %c0_i32, %c0_i32_0 : i32, i32
  }
  func.func @transform_24(%arg0: i32, %arg1: i32) -> (i32, i32) {
    %c0_i32 = arith.constant 0 : i32
    %c0_i32_0 = arith.constant 0 : i32
    %c0_i32_1 = arith.constant 0 : i32
    return %c0_i32, %c0_i32_0 : i32, i32
  }
  func.func @transform_25(%arg0: i32, %arg1: i32) -> (i32, i32) {
    %c0_i32 = arith.constant 0 : i32
    %c0_i32_0 = arith.constant 0 : i32
    %c0_i32_1 = arith.constant 0 : i32
    return %c0_i32, %c0_i32_0 : i32, i32
  }
  func.func @transform_26(%arg0: i32, %arg1: i32) -> (i32, i32) {
    %c0_i32 = arith.constant 0 : i32
    %c0_i32_0 = arith.constant 0 : i32
    %c0_i32_1 = arith.constant 0 : i32
    return %c0_i32, %c0_i32_0 : i32, i32
  }
  func.func @transform_27(%arg0: i32, %arg1: i32) -> (i32, i32, i32) {
    %c0_i32 = arith.constant 0 : i32
    %c0_i32_0 = arith.constant 0 : i32
    %c0_i32_1 = arith.constant 0 : i32
    return %arg0, %c0_i32, %c0_i32_0 : i32, i32, i32
  }
  func.func @transform_28(%arg0: i32, %arg1: i32) -> (i32, i32, i32) {
    %c0_i32 = arith.constant 0 : i32
    %c0_i32_0 = arith.constant 0 : i32
    %c0_i32_1 = arith.constant 0 : i32
    return %arg0, %c0_i32, %c0_i32_0 : i32, i32, i32
  }
}

</mosaic_0001>

<llo_original>
// kernel: linear_clip_forward.1
$region0: #{linear_clip_forward.1}
  #allocation0 [shape = 'u32[]', space=smem, size = 0x4, offset = 0x4, fixed_abs, tag = 'smem constant byte address 0x4 - core index']
  #allocation1 [shape = 'u32[72,128]{1,0:T(1,128)}', space=vmem, size = 0x9000, scoped, tag = 'internal scratch']
  #allocation2 [shape = 'f32[5,128]{1,0:T(8,128)}', space=vmem, size = 0x1000, scoped, tag = 'scratch operand']
  %s0 = inlined_call_operand.vmem [shape: bf16[2,4,768], index: 0, kind: input, shape index: {}]
  %s1 = inlined_call_operand.vmem [shape: bf16[768,128], index: 1, kind: input, shape index: {}]
  %s2 = inlined_call_operand.vmem [shape: f32[1,128], index: 2, kind: input, shape index: {}]
  %s3 = inlined_call_operand.vmem [shape: f32[5,128], index: 3, kind: input, shape index: {}]
  %s4 = inlined_call_operand.vmem [shape: f32[1,128], index: 4, kind: input, shape index: {}]
  %s5 = inlined_call_operand.vmem [shape: f32[1,128], index: 5, kind: input, shape index: {}]
  %s6 = inlined_call_operand.vmem [shape: f32[2,1,128], index: 6, kind: input, shape index: {}]
  %s7 = inlined_call_operand.vmem [shape: f32[2,1,128], index: 7, kind: input, shape index: {}]
  %s8 = inlined_call_operand.vmem [shape: bf16[2,4,128,32], index: 8, kind: input, shape index: {}]
  %s9 = inlined_call_operand.vmem [shape: f32[2,4,1,32], index: 9, kind: input, shape index: {}]
  %s10 = inlined_call_operand.vmem [shape: bf16[2,4,128,32], index: 10, kind: input, shape index: {}]
  %s11 = inlined_call_operand.vmem [shape: f32[2,4,1,32], index: 11, kind: input, shape index: {}]
  %s12 = inlined_call_operand.vmem [shape: bf16[2,4,128,32], index: 12, kind: input, shape index: {}]
  %s13 = inlined_call_operand.vmem [shape: f32[2,4,1,32], index: 13, kind: input, shape index: {}]
  %s14 = inlined_call_operand.vmem [shape: bf16[2,4,32,128], index: 14, kind: input, shape index: {}]
  %s15 = inlined_call_operand.vmem [shape: f32[2,1,128], index: 15, kind: input, shape index: {}]
  %s16 = inlined_call_operand.vmem [shape: f32[2,1,128], index: 16, kind: input, shape index: {}]
  %s17 = inlined_call_operand.vmem [shape: f32[2,1,128], index: 17, kind: input, shape index: {}]
  %s18 = inlined_call_operand.vmem [shape: bf16[2,128,512], index: 18, kind: input, shape index: {}]
  %s19 = inlined_call_operand.vmem [shape: f32[2,1,512], index: 19, kind: input, shape index: {}]
  %s20 = inlined_call_operand.vmem [shape: bf16[2,512,128], index: 20, kind: input, shape index: {}]
  %s21 = inlined_call_operand.vmem [shape: f32[2,1,128], index: 21, kind: input, shape index: {}]
  %s22 = inlined_call_operand.vmem [shape: f32[1,128], index: 22, kind: input, shape index: {}]
  %s23 = inlined_call_operand.vmem [shape: f32[1,128], index: 23, kind: input, shape index: {}]
  %s24 = inlined_call_operand.vmem [shape: bf16[128,128], index: 24, kind: input, shape index: {}]
  %s25 = inlined_call_operand.vmem [shape: f32[128,128], index: 25, kind: input, shape index: {}]
  %s26 = inlined_call_operand.vmem [shape: f32[1,128], index: 26, kind: input, shape index: {}]
  %s27 = inlined_call_operand.hbm [shape: f32[2,1,128], index: 27, kind: output, shape index: {0}]
  %s28 = inlined_call_operand.hbm [shape: f32[2,1,128], index: 28, kind: output, shape index: {1}]
  %29 = xla_tuple %s27, %s28
  %s30 = sld [smem:[#allocation0]]
  $region157: #{linear_clip_forward.1} parent=0
    _
  %s32 = ssub.s32 1, %s30
  %s33 = scalar_select 0, %s32, %s30
  $region1: #{linear_clip_forward.1} parent=0
    #allocation3 [shape = 'u8[1024]{0}', space=vmem, size = 0x400, scoped, tag = 'output window, operand 0']
    #allocation4 [shape = 's32[2]{0}', space=sflag, size = 0x8, scoped, tag = 'scoped memory for linear_clip_forward.1']
    #allocation5 [shape = 'u8[1024]{0}', space=vmem, size = 0x400, scoped, tag = 'output window, operand 1']
    #allocation6 [shape = 's32[2]{0}', space=sflag, size = 0x8, scoped, tag = 'scoped memory for linear_clip_forward.1']
    %34 = vsyncpa [#allocation4], 0
    %s35 = scalar_lea.sflag [#allocation4], 1
    %36 = vsyncpa %s35, 0
    %37 = vsyncpa [#allocation6], 0
    %s38 = scalar_lea.sflag [#allocation6], 1
    %39 = vsyncpa %s38, 0
    loop: start=0, step=1, limit=6
    $region2: #{linear_clip_forward.1} parent=1 // loop_pre_header
      _
    $region3: #{linear_clip_forward.1} parent=1 // loop_header
      %s41 = sphi 0, %s45
      %p42 = scmp.ge.s32.totalorder %s41, 6
      %s48 = sphi 0, %s60
      %s49 = sphi 0, %s56
      %s50 = sphi 0, %s48
      %s51 = sphi 0, %s49
      %s52 = sphi 0, %s50
      %s53 = sphi 0, %s51
      %s63 = sphi 0, %s65
      %s66 = sphi 0, %s63
      %s67 = sphi 0, %s66
      %s83 = sphi 0, %s67
      %s87 = sphi 0, %s87
      %s89 = sphi 0, %s87
      %s90 = sphi 0, %s89
      %s104 = sphi 0, %s90
      %s108 = sphi 0, %s108
      %s110 = sphi 0, %s108
      %s111 = sphi 0, %s110
      %s125 = sphi 0, %s111
      %s129 = sphi 0, %s129
      %s131 = sphi 0, %s129
      %s132 = sphi 0, %s131
      %s146 = sphi 0, %s132
      %s150 = sphi 0, %s150
      %s152 = sphi 0, %s150
      %s153 = sphi 0, %s152
      %s167 = sphi 0, %s153
      %s171 = sphi 0, %s171
      %s173 = sphi 0, %s171
      %s174 = sphi 0, %s173
      %s188 = sphi 0, %s174
      %s194 = sphi 0, %s196
      %s197 = sphi 0, %s194
      %s198 = sphi 0, %s197
      %s214 = sphi 0, %s198
      %s220 = sphi 0, %s222
      %s223 = sphi 0, %s220
      %s224 = sphi 0, %s223
      %s240 = sphi 0, %s224
      %s246 = sphi 0, %s248
      %s249 = sphi 0, %s246
      %s250 = sphi 0, %s249
      %s266 = sphi 0, %s250
      %s272 = sphi 0, %s274
      %s275 = sphi 0, %s272
      %s276 = sphi 0, %s275
      %s292 = sphi 0, %s276
      %s298 = sphi 0, %s300
      %s301 = sphi 0, %s298
      %s302 = sphi 0, %s301
      %s318 = sphi 0, %s302
      %s324 = sphi 0, %s326
      %s327 = sphi 0, %s324
      %s328 = sphi 0, %s327
      %s344 = sphi 0, %s328
      %s350 = sphi 0, %s352
      %s353 = sphi 0, %s350
      %s354 = sphi 0, %s353
      %s370 = sphi 0, %s354
      %s376 = sphi 0, %s378
      %s379 = sphi 0, %s376
      %s380 = sphi 0, %s379
      %s396 = sphi 0, %s380
      %s402 = sphi 0, %s404
      %s405 = sphi 0, %s402
      %s406 = sphi 0, %s405
      %s422 = sphi 0, %s406
      %s428 = sphi 0, %s430
      %s431 = sphi 0, %s428
      %s432 = sphi 0, %s431
      %s448 = sphi 0, %s432
      %s454 = sphi 0, %s456
      %s457 = sphi 0, %s454
      %s458 = sphi 0, %s457
      %s474 = sphi 0, %s458
      %s480 = sphi 0, %s482
      %s483 = sphi 0, %s480
      %s484 = sphi 0, %s483
      %s500 = sphi 0, %s484
      %s506 = sphi 0, %s508
      %s509 = sphi 0, %s506
      %s510 = sphi 0, %s509
      %s526 = sphi 0, %s510
      %s532 = sphi 0, %s534
      %s535 = sphi 0, %s532
      %s536 = sphi 0, %s535
      %s552 = sphi 0, %s536
      %s558 = sphi 0, %s560
      %s561 = sphi 0, %s558
      %s562 = sphi 0, %s561
      %s578 = sphi 0, %s562
      %s584 = sphi 0, %s586
      %s587 = sphi 0, %s584
      %s588 = sphi 0, %s587
      %s604 = sphi 0, %s588
      %s608 = sphi 0, %s608
      %s610 = sphi 0, %s608
      %s611 = sphi 0, %s610
      %s625 = sphi 0, %s611
      %s629 = sphi 0, %s629
      %s631 = sphi 0, %s629
      %s632 = sphi 0, %s631
      %s646 = sphi 0, %s632
      %s650 = sphi 0, %s650
      %s652 = sphi 0, %s650
      %s653 = sphi 0, %s652
      %s667 = sphi 0, %s653
      %s671 = sphi 0, %s671
      %s673 = sphi 0, %s671
      %s674 = sphi 0, %s673
      %s688 = sphi 0, %s674
      %s692 = sphi 0, %s692
      %s694 = sphi 0, %s692
      %s695 = sphi 0, %s694
      %s709 = sphi 0, %s695
      %s715 = sphi 0, %s717
      %s718 = sphi 0, %s715
      %s719 = sphi 0, %s718
      %s735 = sphi 0, %s719
      %s741 = sphi 0, %s743
      %s744 = sphi 0, %s741
      %s745 = sphi 0, %s744
      %s761 = sphi 0, %s745
    $region4: #{linear_clip_forward.1} parent=1 // loop_header_branch
      %44 = sbr.rel (%p42) target = $region8
    $region5: #{linear_clip_forward.1} parent=1 // loop_body
      %s46 = ssub.s32 %s41, 1
      %s47 = ssub.s32 %s41, 2
      %s54 = sadd.s32 1, %s49
      %p55 = scmp.ge.s32.totalorder %s54, 2
      %s56 = scalar_select %p55, 0, %s54
      %s57 = sadd.s32 1, %s48
      %s58 = scalar_select %p55, %s57, %s48
      %p59 = scmp.ge.s32.totalorder %s58, 2
      %s60 = scalar_select %p59, 0, %s58
      %s61 = ssub.s32 %s48, %s60
      %p62 = scmp.eq.s32.totalorder %s61, 0
      %s64 = sadd.s32 %s63, 1
      %s65 = scalar_select %p62, %s63, %s64
      %p68 = pneg %p62
      %p69 = scmp.eq.s32.totalorder %s41, 3
      %p70 = por %p68, %p69
      %p71 = scmp.ne.s32.totalorder %s63, %s66
      %p72 = scmp.eq.s32.totalorder %s41, 0
      %p73 = por %p71, %p72
      %p74 = scmp.ne.s32.totalorder %s63, %s66
      %p75 = scmp.eq.s32.totalorder %s46, 3
      %p76 = por %p74, %p75
      %p77 = scmp.ne.s32.totalorder %s66, %s67
      %p78 = scmp.eq.s32.totalorder %s46, 0
      %p79 = por %p77, %p78
      %p80 = scmp.ne.s32.totalorder %s66, %s67
      %p81 = scmp.eq.s32.totalorder %s47, 3
      %p82 = por %p80, %p81
      %p84 = scmp.ne.s32.totalorder %s67, %s83
      %p85 = scmp.eq.s32.totalorder %s47, 0
      %p86 = por %p84, %p85
      %s88 = sadd.s32 %s87, 1
      %p91 = scmp.eq.s32.totalorder %s41, 3
      %p92 = scmp.ne.s32.totalorder %s87, %s89
      %p93 = scmp.eq.s32.totalorder %s41, 0
      %p94 = por %p92, %p93
      %p95 = scmp.ne.s32.totalorder %s87, %s89
      %p96 = scmp.eq.s32.totalorder %s46, 3
      %p97 = por %p95, %p96
      %p98 = scmp.ne.s32.totalorder %s89, %s90
      %p99 = scmp.eq.s32.totalorder %s46, 0
      %p100 = por %p98, %p99
      %p101 = scmp.ne.s32.totalorder %s89, %s90
      %p102 = scmp.eq.s32.totalorder %s47, 3
      %p103 = por %p101, %p102
      %p105 = scmp.ne.s32.totalorder %s90, %s104
      %p106 = scmp.eq.s32.totalorder %s47, 0
      %p107 = por %p105, %p106
      %s109 = sadd.s32 %s108, 1
      %p112 = scmp.eq.s32.totalorder %s41, 3
      %p113 = scmp.ne.s32.totalorder %s108, %s110
      %p114 = scmp.eq.s32.totalorder %s41, 0
      %p115 = por %p113, %p114
      %p116 = scmp.ne.s32.totalorder %s108, %s110
      %p117 = scmp.eq.s32.totalorder %s46, 3
      %p118 = por %p116, %p117
      %p119 = scmp.ne.s32.totalorder %s110, %s111
      %p120 = scmp.eq.s32.totalorder %s46, 0
      %p121 = por %p119, %p120
      %p122 = scmp.ne.s32.totalorder %s110, %s111
      %p123 = scmp.eq.s32.totalorder %s47, 3
      %p124 = por %p122, %p123
      %p126 = scmp.ne.s32.totalorder %s111, %s125
      %p127 = scmp.eq.s32.totalorder %s47, 0
      %p128 = por %p126, %p127
      %s130 = sadd.s32 %s129, 1
      %p133 = scmp.eq.s32.totalorder %s41, 3
      %p134 = scmp.ne.s32.totalorder %s129, %s131
      %p135 = scmp.eq.s32.totalorder %s41, 0
      %p136 = por %p134, %p135
      %p137 = scmp.ne.s32.totalorder %s129, %s131
      %p138 = scmp.eq.s32.totalorder %s46, 3
      %p139 = por %p137, %p138
      %p140 = scmp.ne.s32.totalorder %s131, %s132
      %p141 = scmp.eq.s32.totalorder %s46, 0
      %p142 = por %p140, %p141
      %p143 = scmp.ne.s32.totalorder %s131, %s132
      %p144 = scmp.eq.s32.totalorder %s47, 3
      %p145 = por %p143, %p144
      %p147 = scmp.ne.s32.totalorder %s132, %s146
      %p148 = scmp.eq.s32.totalorder %s47, 0
      %p149 = por %p147, %p148
      %s151 = sadd.s32 %s150, 1
      %p154 = scmp.eq.s32.totalorder %s41, 3
      %p155 = scmp.ne.s32.totalorder %s150, %s152
      %p156 = scmp.eq.s32.totalorder %s41, 0
      %p157 = por %p155, %p156
      %p158 = scmp.ne.s32.totalorder %s150, %s152
      %p159 = scmp.eq.s32.totalorder %s46, 3
      %p160 = por %p158, %p159
      %p161 = scmp.ne.s32.totalorder %s152, %s153
      %p162 = scmp.eq.s32.totalorder %s46, 0
      %p163 = por %p161, %p162
      %p164 = scmp.ne.s32.totalorder %s152, %s153
      %p165 = scmp.eq.s32.totalorder %s47, 3
      %p166 = por %p164, %p165
      %p168 = scmp.ne.s32.totalorder %s153, %s167
      %p169 = scmp.eq.s32.totalorder %s47, 0
      %p170 = por %p168, %p169
      %s172 = sadd.s32 %s171, 1
      %p175 = scmp.eq.s32.totalorder %s41, 3
      %p176 = scmp.ne.s32.totalorder %s171, %s173
      %p177 = scmp.eq.s32.totalorder %s41, 0
      %p178 = por %p176, %p177
      %p179 = scmp.ne.s32.totalorder %s171, %s173
      %p180 = scmp.eq.s32.totalorder %s46, 3
      %p181 = por %p179, %p180
      %p182 = scmp.ne.s32.totalorder %s173, %s174
      %p183 = scmp.eq.s32.totalorder %s46, 0
      %p184 = por %p182, %p183
      %p185 = scmp.ne.s32.totalorder %s173, %s174
      %p186 = scmp.eq.s32.totalorder %s47, 3
      %p187 = por %p185, %p186
      %p189 = scmp.ne.s32.totalorder %s174, %s188
      %p190 = scmp.eq.s32.totalorder %s47, 0
      %p191 = por %p189, %p190
      %s192 = ssub.s32 %s49, %s56
      %p193 = scmp.eq.s32.totalorder %s192, 0
      %s195 = sadd.s32 %s194, 1
      %s196 = scalar_select %p193, %s194, %s195
      %p199 = pneg %p193
      %p200 = scmp.eq.s32.totalorder %s41, 3
      %p201 = por %p199, %p200
      %p202 = scmp.ne.s32.totalorder %s194, %s197
      %p203 = scmp.eq.s32.totalorder %s41, 0
      %p204 = por %p202, %p203
      %p205 = scmp.ne.s32.totalorder %s194, %s197
      %p206 = scmp.eq.s32.totalorder %s46, 3
      %p207 = por %p205, %p206
      %p208 = scmp.ne.s32.totalorder %s197, %s198
      %p209 = scmp.eq.s32.totalorder %s46, 0
      %p210 = por %p208, %p209
      %p211 = scmp.ne.s32.totalorder %s197, %s198
      %p212 = scmp.eq.s32.totalorder %s47, 3
      %p213 = por %p211, %p212
      %p215 = scmp.ne.s32.totalorder %s198, %s214
      %p216 = scmp.eq.s32.totalorder %s47, 0
      %p217 = por %p215, %p216
      %s218 = ssub.s32 %s49, %s56
      %p219 = scmp.eq.s32.totalorder %s218, 0
      %s221 = sadd.s32 %s220, 1
      %s222 = scalar_select %p219, %s220, %s221
      %p225 = pneg %p219
      %p226 = scmp.eq.s32.totalorder %s41, 3
      %p227 = por %p225, %p226
      %p228 = scmp.ne.s32.totalorder %s220, %s223
      %p229 = scmp.eq.s32.totalorder %s41, 0
      %p230 = por %p228, %p229
      %p231 = scmp.ne.s32.totalorder %s220, %s223
      %p232 = scmp.eq.s32.totalorder %s46, 3
      %p233 = por %p231, %p232
      %p234 = scmp.ne.s32.totalorder %s223, %s224
      %p235 = scmp.eq.s32.totalorder %s46, 0
      %p236 = por %p234, %p235
      %p237 = scmp.ne.s32.totalorder %s223, %s224
      %p238 = scmp.eq.s32.totalorder %s47, 3
      %p239 = por %p237, %p238
      %p241 = scmp.ne.s32.totalorder %s224, %s240
      %p242 = scmp.eq.s32.totalorder %s47, 0
      %p243 = por %p241, %p242
      %s244 = ssub.s32 %s49, %s56
      %p245 = scmp.eq.s32.totalorder %s244, 0
      %s247 = sadd.s32 %s246, 1
      %s248 = scalar_select %p245, %s246, %s247
      %p251 = pneg %p245
      %p252 = scmp.eq.s32.totalorder %s41, 3
      %p253 = por %p251, %p252
      %p254 = scmp.ne.s32.totalorder %s246, %s249
      %p255 = scmp.eq.s32.totalorder %s41, 0
      %p256 = por %p254, %p255
      %p257 = scmp.ne.s32.totalorder %s246, %s249
      %p258 = scmp.eq.s32.totalorder %s46, 3
      %p259 = por %p257, %p258
      %p260 = scmp.ne.s32.totalorder %s249, %s250
      %p261 = scmp.eq.s32.totalorder %s46, 0
      %p262 = por %p260, %p261
      %p263 = scmp.ne.s32.totalorder %s249, %s250
      %p264 = scmp.eq.s32.totalorder %s47, 3
      %p265 = por %p263, %p264
      %p267 = scmp.ne.s32.totalorder %s250, %s266
      %p268 = scmp.eq.s32.totalorder %s47, 0
      %p269 = por %p267, %p268
      %s270 = ssub.s32 %s49, %s56
      %p271 = scmp.eq.s32.totalorder %s270, 0
      %s273 = sadd.s32 %s272, 1
      %s274 = scalar_select %p271, %s272, %s273
      %p277 = pneg %p271
      %p278 = scmp.eq.s32.totalorder %s41, 3
      %p279 = por %p277, %p278
      %p280 = scmp.ne.s32.totalorder %s272, %s275
      %p281 = scmp.eq.s32.totalorder %s41, 0
      %p282 = por %p280, %p281
      %p283 = scmp.ne.s32.totalorder %s272, %s275
      %p284 = scmp.eq.s32.totalorder %s46, 3
      %p285 = por %p283, %p284
      %p286 = scmp.ne.s32.totalorder %s275, %s276
      %p287 = scmp.eq.s32.totalorder %s46, 0
      %p288 = por %p286, %p287
      %p289 = scmp.ne.s32.totalorder %s275, %s276
      %p290 = scmp.eq.s32.totalorder %s47, 3
      %p291 = por %p289, %p290
      %p293 = scmp.ne.s32.totalorder %s276, %s292
      %p294 = scmp.eq.s32.totalorder %s47, 0
      %p295 = por %p293, %p294
      %s296 = ssub.s32 %s49, %s56
      %p297 = scmp.eq.s32.totalorder %s296, 0
      %s299 = sadd.s32 %s298, 1
      %s300 = scalar_select %p297, %s298, %s299
      %p303 = pneg %p297
      %p304 = scmp.eq.s32.totalorder %s41, 3
      %p305 = por %p303, %p304
      %p306 = scmp.ne.s32.totalorder %s298, %s301
      %p307 = scmp.eq.s32.totalorder %s41, 0
      %p308 = por %p306, %p307
      %p309 = scmp.ne.s32.totalorder %s298, %s301
      %p310 = scmp.eq.s32.totalorder %s46, 3
      %p311 = por %p309, %p310
      %p312 = scmp.ne.s32.totalorder %s301, %s302
      %p313 = scmp.eq.s32.totalorder %s46, 0
      %p314 = por %p312, %p313
      %p315 = scmp.ne.s32.totalorder %s301, %s302
      %p316 = scmp.eq.s32.totalorder %s47, 3
      %p317 = por %p315, %p316
      %p319 = scmp.ne.s32.totalorder %s302, %s318
      %p320 = scmp.eq.s32.totalorder %s47, 0
      %p321 = por %p319, %p320
      %s322 = ssub.s32 %s49, %s56
      %p323 = scmp.eq.s32.totalorder %s322, 0
      %s325 = sadd.s32 %s324, 1
      %s326 = scalar_select %p323, %s324, %s325
      %p329 = pneg %p323
      %p330 = scmp.eq.s32.totalorder %s41, 3
      %p331 = por %p329, %p330
      %p332 = scmp.ne.s32.totalorder %s324, %s327
      %p333 = scmp.eq.s32.totalorder %s41, 0
      %p334 = por %p332, %p333
      %p335 = scmp.ne.s32.totalorder %s324, %s327
      %p336 = scmp.eq.s32.totalorder %s46, 3
      %p337 = por %p335, %p336
      %p338 = scmp.ne.s32.totalorder %s327, %s328
      %p339 = scmp.eq.s32.totalorder %s46, 0
      %p340 = por %p338, %p339
      %p341 = scmp.ne.s32.totalorder %s327, %s328
      %p342 = scmp.eq.s32.totalorder %s47, 3
      %p343 = por %p341, %p342
      %p345 = scmp.ne.s32.totalorder %s328, %s344
      %p346 = scmp.eq.s32.totalorder %s47, 0
      %p347 = por %p345, %p346
      %s348 = ssub.s32 %s49, %s56
      %p349 = scmp.eq.s32.totalorder %s348, 0
      %s351 = sadd.s32 %s350, 1
      %s352 = scalar_select %p349, %s350, %s351
      %p355 = pneg %p349
      %p356 = scmp.eq.s32.totalorder %s41, 3
      %p357 = por %p355, %p356
      %p358 = scmp.ne.s32.totalorder %s350, %s353
      %p359 = scmp.eq.s32.totalorder %s41, 0
      %p360 = por %p358, %p359
      %p361 = scmp.ne.s32.totalorder %s350, %s353
      %p362 = scmp.eq.s32.totalorder %s46, 3
      %p363 = por %p361, %p362
      %p364 = scmp.ne.s32.totalorder %s353, %s354
      %p365 = scmp.eq.s32.totalorder %s46, 0
      %p366 = por %p364, %p365
      %p367 = scmp.ne.s32.totalorder %s353, %s354
      %p368 = scmp.eq.s32.totalorder %s47, 3
      %p369 = por %p367, %p368
      %p371 = scmp.ne.s32.totalorder %s354, %s370
      %p372 = scmp.eq.s32.totalorder %s47, 0
      %p373 = por %p371, %p372
      %s374 = ssub.s32 %s49, %s56
      %p375 = scmp.eq.s32.totalorder %s374, 0
      %s377 = sadd.s32 %s376, 1
      %s378 = scalar_select %p375, %s376, %s377
      %p381 = pneg %p375
      %p382 = scmp.eq.s32.totalorder %s41, 3
      %p383 = por %p381, %p382
      %p384 = scmp.ne.s32.totalorder %s376, %s379
      %p385 = scmp.eq.s32.totalorder %s41, 0
      %p386 = por %p384, %p385
      %p387 = scmp.ne.s32.totalorder %s376, %s379
      %p388 = scmp.eq.s32.totalorder %s46, 3
      %p389 = por %p387, %p388
      %p390 = scmp.ne.s32.totalorder %s379, %s380
      %p391 = scmp.eq.s32.totalorder %s46, 0
      %p392 = por %p390, %p391
      %p393 = scmp.ne.s32.totalorder %s379, %s380
      %p394 = scmp.eq.s32.totalorder %s47, 3
      %p395 = por %p393, %p394
      %p397 = scmp.ne.s32.totalorder %s380, %s396
      %p398 = scmp.eq.s32.totalorder %s47, 0
      %p399 = por %p397, %p398
      %s400 = ssub.s32 %s49, %s56
      %p401 = scmp.eq.s32.totalorder %s400, 0
      %s403 = sadd.s32 %s402, 1
      %s404 = scalar_select %p401, %s402, %s403
      %p407 = pneg %p401
      %p408 = scmp.eq.s32.totalorder %s41, 3
      %p409 = por %p407, %p408
      %p410 = scmp.ne.s32.totalorder %s402, %s405
      %p411 = scmp.eq.s32.totalorder %s41, 0
      %p412 = por %p410, %p411
      %p413 = scmp.ne.s32.totalorder %s402, %s405
      %p414 = scmp.eq.s32.totalorder %s46, 3
      %p415 = por %p413, %p414
      %p416 = scmp.ne.s32.totalorder %s405, %s406
      %p417 = scmp.eq.s32.totalorder %s46, 0
      %p418 = por %p416, %p417
      %p419 = scmp.ne.s32.totalorder %s405, %s406
      %p420 = scmp.eq.s32.totalorder %s47, 3
      %p421 = por %p419, %p420
      %p423 = scmp.ne.s32.totalorder %s406, %s422
      %p424 = scmp.eq.s32.totalorder %s47, 0
      %p425 = por %p423, %p424
      %s426 = ssub.s32 %s49, %s56
      %p427 = scmp.eq.s32.totalorder %s426, 0
      %s429 = sadd.s32 %s428, 1
      %s430 = scalar_select %p427, %s428, %s429
      %p433 = pneg %p427
      %p434 = scmp.eq.s32.totalorder %s41, 3
      %p435 = por %p433, %p434
      %p436 = scmp.ne.s32.totalorder %s428, %s431
      %p437 = scmp.eq.s32.totalorder %s41, 0
      %p438 = por %p436, %p437
      %p439 = scmp.ne.s32.totalorder %s428, %s431
      %p440 = scmp.eq.s32.totalorder %s46, 3
      %p441 = por %p439, %p440
      %p442 = scmp.ne.s32.totalorder %s431, %s432
      %p443 = scmp.eq.s32.totalorder %s46, 0
      %p444 = por %p442, %p443
      %p445 = scmp.ne.s32.totalorder %s431, %s432
      %p446 = scmp.eq.s32.totalorder %s47, 3
      %p447 = por %p445, %p446
      %p449 = scmp.ne.s32.totalorder %s432, %s448
      %p450 = scmp.eq.s32.totalorder %s47, 0
      %p451 = por %p449, %p450
      %s452 = ssub.s32 %s49, %s56
      %p453 = scmp.eq.s32.totalorder %s452, 0
      %s455 = sadd.s32 %s454, 1
      %s456 = scalar_select %p453, %s454, %s455
      %p459 = pneg %p453
      %p460 = scmp.eq.s32.totalorder %s41, 3
      %p461 = por %p459, %p460
      %p462 = scmp.ne.s32.totalorder %s454, %s457
      %p463 = scmp.eq.s32.totalorder %s41, 0
      %p464 = por %p462, %p463
      %p465 = scmp.ne.s32.totalorder %s454, %s457
      %p466 = scmp.eq.s32.totalorder %s46, 3
      %p467 = por %p465, %p466
      %p468 = scmp.ne.s32.totalorder %s457, %s458
      %p469 = scmp.eq.s32.totalorder %s46, 0
      %p470 = por %p468, %p469
      %p471 = scmp.ne.s32.totalorder %s457, %s458
      %p472 = scmp.eq.s32.totalorder %s47, 3
      %p473 = por %p471, %p472
      %p475 = scmp.ne.s32.totalorder %s458, %s474
      %p476 = scmp.eq.s32.totalorder %s47, 0
      %p477 = por %p475, %p476
      %s478 = ssub.s32 %s49, %s56
      %p479 = scmp.eq.s32.totalorder %s478, 0
      %s481 = sadd.s32 %s480, 1
      %s482 = scalar_select %p479, %s480, %s481
      %p485 = pneg %p479
      %p486 = scmp.eq.s32.totalorder %s41, 3
      %p487 = por %p485, %p486
      %p488 = scmp.ne.s32.totalorder %s480, %s483
      %p489 = scmp.eq.s32.totalorder %s41, 0
      %p490 = por %p488, %p489
      %p491 = scmp.ne.s32.totalorder %s480, %s483
      %p492 = scmp.eq.s32.totalorder %s46, 3
      %p493 = por %p491, %p492
      %p494 = scmp.ne.s32.totalorder %s483, %s484
      %p495 = scmp.eq.s32.totalorder %s46, 0
      %p496 = por %p494, %p495
      %p497 = scmp.ne.s32.totalorder %s483, %s484
      %p498 = scmp.eq.s32.totalorder %s47, 3
      %p499 = por %p497, %p498
      %p501 = scmp.ne.s32.totalorder %s484, %s500
      %p502 = scmp.eq.s32.totalorder %s47, 0
      %p503 = por %p501, %p502
      %s504 = ssub.s32 %s49, %s56
      %p505 = scmp.eq.s32.totalorder %s504, 0
      %s507 = sadd.s32 %s506, 1
      %s508 = scalar_select %p505, %s506, %s507
      %p511 = pneg %p505
      %p512 = scmp.eq.s32.totalorder %s41, 3
      %p513 = por %p511, %p512
      %p514 = scmp.ne.s32.totalorder %s506, %s509
      %p515 = scmp.eq.s32.totalorder %s41, 0
      %p516 = por %p514, %p515
      %p517 = scmp.ne.s32.totalorder %s506, %s509
      %p518 = scmp.eq.s32.totalorder %s46, 3
      %p519 = por %p517, %p518
      %p520 = scmp.ne.s32.totalorder %s509, %s510
      %p521 = scmp.eq.s32.totalorder %s46, 0
      %p522 = por %p520, %p521
      %p523 = scmp.ne.s32.totalorder %s509, %s510
      %p524 = scmp.eq.s32.totalorder %s47, 3
      %p525 = por %p523, %p524
      %p527 = scmp.ne.s32.totalorder %s510, %s526
      %p528 = scmp.eq.s32.totalorder %s47, 0
      %p529 = por %p527, %p528
      %s530 = ssub.s32 %s49, %s56
      %p531 = scmp.eq.s32.totalorder %s530, 0
      %s533 = sadd.s32 %s532, 1
      %s534 = scalar_select %p531, %s532, %s533
      %p537 = pneg %p531
      %p538 = scmp.eq.s32.totalorder %s41, 3
      %p539 = por %p537, %p538
      %p540 = scmp.ne.s32.totalorder %s532, %s535
      %p541 = scmp.eq.s32.totalorder %s41, 0
      %p542 = por %p540, %p541
      %p543 = scmp.ne.s32.totalorder %s532, %s535
      %p544 = scmp.eq.s32.totalorder %s46, 3
      %p545 = por %p543, %p544
      %p546 = scmp.ne.s32.totalorder %s535, %s536
      %p547 = scmp.eq.s32.totalorder %s46, 0
      %p548 = por %p546, %p547
      %p549 = scmp.ne.s32.totalorder %s535, %s536
      %p550 = scmp.eq.s32.totalorder %s47, 3
      %p551 = por %p549, %p550
      %p553 = scmp.ne.s32.totalorder %s536, %s552
      %p554 = scmp.eq.s32.totalorder %s47, 0
      %p555 = por %p553, %p554
      %s556 = ssub.s32 %s49, %s56
      %p557 = scmp.eq.s32.totalorder %s556, 0
      %s559 = sadd.s32 %s558, 1
      %s560 = scalar_select %p557, %s558, %s559
      %p563 = pneg %p557
      %p564 = scmp.eq.s32.totalorder %s41, 3
      %p565 = por %p563, %p564
      %p566 = scmp.ne.s32.totalorder %s558, %s561
      %p567 = scmp.eq.s32.totalorder %s41, 0
      %p568 = por %p566, %p567
      %p569 = scmp.ne.s32.totalorder %s558, %s561
      %p570 = scmp.eq.s32.totalorder %s46, 3
      %p571 = por %p569, %p570
      %p572 = scmp.ne.s32.totalorder %s561, %s562
      %p573 = scmp.eq.s32.totalorder %s46, 0
      %p574 = por %p572, %p573
      %p575 = scmp.ne.s32.totalorder %s561, %s562
      %p576 = scmp.eq.s32.totalorder %s47, 3
      %p577 = por %p575, %p576
      %p579 = scmp.ne.s32.totalorder %s562, %s578
      %p580 = scmp.eq.s32.totalorder %s47, 0
      %p581 = por %p579, %p580
      %s582 = ssub.s32 %s49, %s56
      %p583 = scmp.eq.s32.totalorder %s582, 0
      %s585 = sadd.s32 %s584, 1
      %s586 = scalar_select %p583, %s584, %s585
      %p589 = pneg %p583
      %p590 = scmp.eq.s32.totalorder %s41, 3
      %p591 = por %p589, %p590
      %p592 = scmp.ne.s32.totalorder %s584, %s587
      %p593 = scmp.eq.s32.totalorder %s41, 0
      %p594 = por %p592, %p593
      %p595 = scmp.ne.s32.totalorder %s584, %s587
      %p596 = scmp.eq.s32.totalorder %s46, 3
      %p597 = por %p595, %p596
      %p598 = scmp.ne.s32.totalorder %s587, %s588
      %p599 = scmp.eq.s32.totalorder %s46, 0
      %p600 = por %p598, %p599
      %p601 = scmp.ne.s32.totalorder %s587, %s588
      %p602 = scmp.eq.s32.totalorder %s47, 3
      %p603 = por %p601, %p602
      %p605 = scmp.ne.s32.totalorder %s588, %s604
      %p606 = scmp.eq.s32.totalorder %s47, 0
      %p607 = por %p605, %p606
      %s609 = sadd.s32 %s608, 1
      %p612 = scmp.eq.s32.totalorder %s41, 3
      %p613 = scmp.ne.s32.totalorder %s608, %s610
      %p614 = scmp.eq.s32.totalorder %s41, 0
      %p615 = por %p613, %p614
      %p616 = scmp.ne.s32.totalorder %s608, %s610
      %p617 = scmp.eq.s32.totalorder %s46, 3
      %p618 = por %p616, %p617
      %p619 = scmp.ne.s32.totalorder %s610, %s611
      %p620 = scmp.eq.s32.totalorder %s46, 0
      %p621 = por %p619, %p620
      %p622 = scmp.ne.s32.totalorder %s610, %s611
      %p623 = scmp.eq.s32.totalorder %s47, 3
      %p624 = por %p622, %p623
      %p626 = scmp.ne.s32.totalorder %s611, %s625
      %p627 = scmp.eq.s32.totalorder %s47, 0
      %p628 = por %p626, %p627
      %s630 = sadd.s32 %s629, 1
      %p633 = scmp.eq.s32.totalorder %s41, 3
      %p634 = scmp.ne.s32.totalorder %s629, %s631
      %p635 = scmp.eq.s32.totalorder %s41, 0
      %p636 = por %p634, %p635
      %p637 = scmp.ne.s32.totalorder %s629, %s631
      %p638 = scmp.eq.s32.totalorder %s46, 3
      %p639 = por %p637, %p638
      %p640 = scmp.ne.s32.totalorder %s631, %s632
      %p641 = scmp.eq.s32.totalorder %s46, 0
      %p642 = por %p640, %p641
      %p643 = scmp.ne.s32.totalorder %s631, %s632
      %p644 = scmp.eq.s32.totalorder %s47, 3
      %p645 = por %p643, %p644
      %p647 = scmp.ne.s32.totalorder %s632, %s646
      %p648 = scmp.eq.s32.totalorder %s47, 0
      %p649 = por %p647, %p648
      %s651 = sadd.s32 %s650, 1
      %p654 = scmp.eq.s32.totalorder %s41, 3
      %p655 = scmp.ne.s32.totalorder %s650, %s652
      %p656 = scmp.eq.s32.totalorder %s41, 0
      %p657 = por %p655, %p656
      %p658 = scmp.ne.s32.totalorder %s650, %s652
      %p659 = scmp.eq.s32.totalorder %s46, 3
      %p660 = por %p658, %p659
      %p661 = scmp.ne.s32.totalorder %s652, %s653
      %p662 = scmp.eq.s32.totalorder %s46, 0
      %p663 = por %p661, %p662
      %p664 = scmp.ne.s32.totalorder %s652, %s653
      %p665 = scmp.eq.s32.totalorder %s47, 3
      %p666 = por %p664, %p665
      %p668 = scmp.ne.s32.totalorder %s653, %s667
      %p669 = scmp.eq.s32.totalorder %s47, 0
      %p670 = por %p668, %p669
      %s672 = sadd.s32 %s671, 1
      %p675 = scmp.eq.s32.totalorder %s41, 3
      %p676 = scmp.ne.s32.totalorder %s671, %s673
      %p677 = scmp.eq.s32.totalorder %s41, 0
      %p678 = por %p676, %p677
      %p679 = scmp.ne.s32.totalorder %s671, %s673
      %p680 = scmp.eq.s32.totalorder %s46, 3
      %p681 = por %p679, %p680
      %p682 = scmp.ne.s32.totalorder %s673, %s674
      %p683 = scmp.eq.s32.totalorder %s46, 0
      %p684 = por %p682, %p683
      %p685 = scmp.ne.s32.totalorder %s673, %s674
      %p686 = scmp.eq.s32.totalorder %s47, 3
      %p687 = por %p685, %p686
      %p689 = scmp.ne.s32.totalorder %s674, %s688
      %p690 = scmp.eq.s32.totalorder %s47, 0
      %p691 = por %p689, %p690
      %s693 = sadd.s32 %s692, 1
      %p696 = scmp.eq.s32.totalorder %s41, 3
      %p697 = scmp.ne.s32.totalorder %s692, %s694
      %p698 = scmp.eq.s32.totalorder %s41, 0
      %p699 = por %p697, %p698
      %p700 = scmp.ne.s32.totalorder %s692, %s694
      %p701 = scmp.eq.s32.totalorder %s46, 3
      %p702 = por %p700, %p701
      %p703 = scmp.ne.s32.totalorder %s694, %s695
      %p704 = scmp.eq.s32.totalorder %s46, 0
      %p705 = por %p703, %p704
      %p706 = scmp.ne.s32.totalorder %s694, %s695
      %p707 = scmp.eq.s32.totalorder %s47, 3
      %p708 = por %p706, %p707
      %p710 = scmp.ne.s32.totalorder %s695, %s709
      %p711 = scmp.eq.s32.totalorder %s47, 0
      %p712 = por %p710, %p711
      %s713 = ssub.s32 %s48, %s60
      %p714 = scmp.eq.s32.totalorder %s713, 0
      %s716 = sadd.s32 %s715, 1
      %s717 = scalar_select %p714, %s715, %s716
      %p720 = pneg %p714
      %p721 = scmp.eq.s32.totalorder %s41, 3
      %p722 = por %p720, %p721
      %p723 = scmp.ne.s32.totalorder %s715, %s718
      %p724 = scmp.eq.s32.totalorder %s41, 0
      %p725 = por %p723, %p724
      %p726 = scmp.ne.s32.totalorder %s715, %s718
      %p727 = scmp.eq.s32.totalorder %s46, 3
      %p728 = por %p726, %p727
      %p729 = scmp.ne.s32.totalorder %s718, %s719
      %p730 = scmp.eq.s32.totalorder %s46, 0
      %p731 = por %p729, %p730
      %p732 = scmp.ne.s32.totalorder %s718, %s719
      %p733 = scmp.eq.s32.totalorder %s47, 3
      %p734 = por %p732, %p733
      %p736 = scmp.ne.s32.totalorder %s719, %s735
      %p737 = scmp.eq.s32.totalorder %s47, 0
      %p738 = por %p736, %p737
      %s739 = ssub.s32 %s48, %s60
      %p740 = scmp.eq.s32.totalorder %s739, 0
      %s742 = sadd.s32 %s741, 1
      %s743 = scalar_select %p740, %s741, %s742
      %p746 = pneg %p740
      %p747 = scmp.eq.s32.totalorder %s41, 3
      %p748 = por %p746, %p747
      %p749 = scmp.ne.s32.totalorder %s741, %s744
      %p750 = scmp.eq.s32.totalorder %s41, 0
      %p751 = por %p749, %p750
      %p752 = scmp.ne.s32.totalorder %s741, %s744
      %p753 = scmp.eq.s32.totalorder %s46, 3
      %p754 = por %p752, %p753
      %p755 = scmp.ne.s32.totalorder %s744, %s745
      %p756 = scmp.eq.s32.totalorder %s46, 0
      %p757 = por %p755, %p756
      %p758 = scmp.ne.s32.totalorder %s744, %s745
      %p759 = scmp.eq.s32.totalorder %s47, 3
      %p760 = por %p758, %p759
      %p762 = scmp.ne.s32.totalorder %s745, %s761
      %p763 = scmp.eq.s32.totalorder %s47, 0
      %p764 = por %p762, %p763
      %p765 = scmp.le.s32.totalorder 1, %s41
      %p766 = scmp.lt.s32.totalorder %s41, 5
      %p767 = pnand %p765, %p766
      %p768 = pneg %p767
      // Predicated region
      $region9: #{linear_clip_forward.1} parent=5 // pred_check
        _
      $region10: #{linear_clip_forward.1} parent=5 // pred_check_branch
        %770 = sbr.rel (%p767) target = $region12
      $region11: #{linear_clip_forward.1} parent=5 // pred_region
        %s771 = ssub.s32 %s41, 1
        // Predicated region
        $region13: #{linear_clip_forward.1} parent=11 // pred_check
          %p772 = pneg %p100
        $region14: #{linear_clip_forward.1} parent=11 // pred_check_branch
          %774 = sbr.rel (%p772) target = $region16
        $region15: #{linear_clip_forward.1} parent=11 // pred_region
          _
        $region16: #{linear_clip_forward.1} parent=11 // pred_fallthru
          _
        // Predicated region
        $region17: #{linear_clip_forward.1} parent=11 // pred_check
          %p775 = pneg %p121
        $region18: #{linear_clip_forward.1} parent=11 // pred_check_branch
          %777 = sbr.rel (%p775) target = $region20
        $region19: #{linear_clip_forward.1} parent=11 // pred_region
          _
        $region20: #{linear_clip_forward.1} parent=11 // pred_fallthru
          _
        // Predicated region
        $region21: #{linear_clip_forward.1} parent=11 // pred_check
          %p778 = pneg %p142
        $region22: #{linear_clip_forward.1} parent=11 // pred_check_branch
          %780 = sbr.rel (%p778) target = $region24
        $region23: #{linear_clip_forward.1} parent=11 // pred_region
          _
        $region24: #{linear_clip_forward.1} parent=11 // pred_fallthru
          _
        // Predicated region
        $region25: #{linear_clip_forward.1} parent=11 // pred_check
          %p781 = pneg %p163
        $region26: #{linear_clip_forward.1} parent=11 // pred_check_branch
          %783 = sbr.rel (%p781) target = $region28
        $region27: #{linear_clip_forward.1} parent=11 // pred_region
          _
        $region28: #{linear_clip_forward.1} parent=11 // pred_fallthru
          _
        // Predicated region
        $region29: #{linear_clip_forward.1} parent=11 // pred_check
          %p784 = pneg %p184
        $region30: #{linear_clip_forward.1} parent=11 // pred_check_branch
          %786 = sbr.rel (%p784) target = $region32
        $region31: #{linear_clip_forward.1} parent=11 // pred_region
          _
        $region32: #{linear_clip_forward.1} parent=11 // pred_fallthru
          _
        // Predicated region
        $region33: #{linear_clip_forward.1} parent=11 // pred_check
          %p787 = pneg %p621
        $region34: #{linear_clip_forward.1} parent=11 // pred_check_branch
          %789 = sbr.rel (%p787) target = $region36
        $region35: #{linear_clip_forward.1} parent=11 // pred_region
          _
        $region36: #{linear_clip_forward.1} parent=11 // pred_fallthru
          _
        // Predicated region
        $region37: #{linear_clip_forward.1} parent=11 // pred_check
          %p790 = pneg %p642
        $region38: #{linear_clip_forward.1} parent=11 // pred_check_branch
          %792 = sbr.rel (%p790) target = $region40
        $region39: #{linear_clip_forward.1} parent=11 // pred_region
          _
        $region40: #{linear_clip_forward.1} parent=11 // pred_fallthru
          _
        // Predicated region
        $region41: #{linear_clip_forward.1} parent=11 // pred_check
          %p793 = pneg %p663
        $region42: #{linear_clip_forward.1} parent=11 // pred_check_branch
          %795 = sbr.rel (%p793) target = $region44
        $region43: #{linear_clip_forward.1} parent=11 // pred_region
          _
        $region44: #{linear_clip_forward.1} parent=11 // pred_fallthru
          _
        // Predicated region
        $region45: #{linear_clip_forward.1} parent=11 // pred_check
          %p796 = pneg %p684
        $region46: #{linear_clip_forward.1} parent=11 // pred_check_branch
          %798 = sbr.rel (%p796) target = $region48
        $region47: #{linear_clip_forward.1} parent=11 // pred_region
          _
        $region48: #{linear_clip_forward.1} parent=11 // pred_fallthru
          _
        // Predicated region
        $region49: #{linear_clip_forward.1} parent=11 // pred_check
          %p799 = pneg %p705
        $region50: #{linear_clip_forward.1} parent=11 // pred_check_branch
          %801 = sbr.rel (%p799) target = $region52
        $region51: #{linear_clip_forward.1} parent=11 // pred_region
          _
        $region52: #{linear_clip_forward.1} parent=11 // pred_fallthru
          _
      $region12: #{linear_clip_forward.1} parent=5 // pred_fallthru
        _
      %p802 = scmp.lt.s32.totalorder %s41, 4
      // Predicated region
      $region53: #{linear_clip_forward.1} parent=5 // pred_check
        %p803 = pneg %p802
      $region54: #{linear_clip_forward.1} parent=5 // pred_check_branch
        %805 = sbr.rel (%p803) target = $region56
      $region55: #{linear_clip_forward.1} parent=5 // pred_region
        // Predicated region
        $region57: #{linear_clip_forward.1} parent=55 // pred_check
          %p806 = pneg %p73
        $region58: #{linear_clip_forward.1} parent=55 // pred_check_branch
          %808 = sbr.rel (%p806) target = $region60
        $region59: #{linear_clip_forward.1} parent=55 // pred_region
          %p809 = scmp.lt.s32.totalorder %s48, 1
          %s810 = scalar_select %p809, %s48, 1
          %s811 = smul.addr %s810, 6
          %s812 = smul.addr %s811, 2
          %s813 = scalar_lea.vmem %s0, %s812
        $region60: #{linear_clip_forward.1} parent=55 // pred_fallthru
          _
        // Predicated region
        $region61: #{linear_clip_forward.1} parent=55 // pred_check
          %p814 = pneg %p204
        $region62: #{linear_clip_forward.1} parent=55 // pred_check_branch
          %816 = sbr.rel (%p814) target = $region64
        $region63: #{linear_clip_forward.1} parent=55 // pred_region
          %p817 = scmp.lt.s32.totalorder %s49, 1
          %s818 = scalar_select %p817, %s49, 1
          %s819 = scalar_lea.vmem %s6, %s818
        $region64: #{linear_clip_forward.1} parent=55 // pred_fallthru
          _
        // Predicated region
        $region65: #{linear_clip_forward.1} parent=55 // pred_check
          %p820 = pneg %p230
        $region66: #{linear_clip_forward.1} parent=55 // pred_check_branch
          %822 = sbr.rel (%p820) target = $region68
        $region67: #{linear_clip_forward.1} parent=55 // pred_region
          %p823 = scmp.lt.s32.totalorder %s49, 1
          %s824 = scalar_select %p823, %s49, 1
          %s825 = scalar_lea.vmem %s7, %s824
        $region68: #{linear_clip_forward.1} parent=55 // pred_fallthru
          _
        // Predicated region
        $region69: #{linear_clip_forward.1} parent=55 // pred_check
          %p826 = pneg %p256
        $region70: #{linear_clip_forward.1} parent=55 // pred_check_branch
          %828 = sbr.rel (%p826) target = $region72
        $region71: #{linear_clip_forward.1} parent=55 // pred_region
          %p829 = scmp.lt.s32.totalorder %s49, 1
          %s830 = scalar_select %p829, %s49, 1
          %s831 = smul.addr %s830, 64
          %s832 = smul.addr %s831, 4
          %s833 = scalar_lea.vmem %s8, %s832
        $region72: #{linear_clip_forward.1} parent=55 // pred_fallthru
          _
        // Predicated region
        $region73: #{linear_clip_forward.1} parent=55 // pred_check
          %p834 = pneg %p282
        $region74: #{linear_clip_forward.1} parent=55 // pred_check_branch
          %836 = sbr.rel (%p834) target = $region76
        $region75: #{linear_clip_forward.1} parent=55 // pred_region
          %p837 = scmp.lt.s32.totalorder %s49, 1
          %s838 = scalar_select %p837, %s49, 1
          %s839 = smul.addr %s838, 4
          %s840 = scalar_lea.vmem %s9, %s839
        $region76: #{linear_clip_forward.1} parent=55 // pred_fallthru
          _
        // Predicated region
        $region77: #{linear_clip_forward.1} parent=55 // pred_check
          %p841 = pneg %p308
        $region78: #{linear_clip_forward.1} parent=55 // pred_check_branch
          %843 = sbr.rel (%p841) target = $region80
        $region79: #{linear_clip_forward.1} parent=55 // pred_region
          %p844 = scmp.lt.s32.totalorder %s49, 1
          %s845 = scalar_select %p844, %s49, 1
          %s846 = smul.addr %s845, 64
          %s847 = smul.addr %s846, 4
          %s848 = scalar_lea.vmem %s10, %s847
        $region80: #{linear_clip_forward.1} parent=55 // pred_fallthru
          _
        // Predicated region
        $region81: #{linear_clip_forward.1} parent=55 // pred_check
          %p849 = pneg %p334
        $region82: #{linear_clip_forward.1} parent=55 // pred_check_branch
          %851 = sbr.rel (%p849) target = $region84
        $region83: #{linear_clip_forward.1} parent=55 // pred_region
          %p852 = scmp.lt.s32.totalorder %s49, 1
          %s853 = scalar_select %p852, %s49, 1
          %s854 = smul.addr %s853, 4
          %s855 = scalar_lea.vmem %s11, %s854
        $region84: #{linear_clip_forward.1} parent=55 // pred_fallthru
          _
        // Predicated region
        $region85: #{linear_clip_forward.1} parent=55 // pred_check
          %p856 = pneg %p360
        $region86: #{linear_clip_forward.1} parent=55 // pred_check_branch
          %858 = sbr.rel (%p856) target = $region88
        $region87: #{linear_clip_forward.1} parent=55 // pred_region
          %p859 = scmp.lt.s32.totalorder %s49, 1
          %s860 = scalar_select %p859, %s49, 1
          %s861 = smul.addr %s860, 64
          %s862 = smul.addr %s861, 4
          %s863 = scalar_lea.vmem %s12, %s862
        $region88: #{linear_clip_forward.1} parent=55 // pred_fallthru
          _
        // Predicated region
        $region89: #{linear_clip_forward.1} parent=55 // pred_check
          %p864 = pneg %p386
        $region90: #{linear_clip_forward.1} parent=55 // pred_check_branch
          %866 = sbr.rel (%p864) target = $region92
        $region91: #{linear_clip_forward.1} parent=55 // pred_region
          %p867 = scmp.lt.s32.totalorder %s49, 1
          %s868 = scalar_select %p867, %s49, 1
          %s869 = smul.addr %s868, 4
          %s870 = scalar_lea.vmem %s13, %s869
        $region92: #{linear_clip_forward.1} parent=55 // pred_fallthru
          _
        // Predicated region
        $region93: #{linear_clip_forward.1} parent=55 // pred_check
          %p871 = pneg %p412
        $region94: #{linear_clip_forward.1} parent=55 // pred_check_branch
          %873 = sbr.rel (%p871) target = $region96
        $region95: #{linear_clip_forward.1} parent=55 // pred_region
          %p874 = scmp.lt.s32.totalorder %s49, 1
          %s875 = scalar_select %p874, %s49, 1
          %s876 = smul.addr %s875, 16
          %s877 = smul.addr %s876, 4
          %s878 = scalar_lea.vmem %s14, %s877
        $region96: #{linear_clip_forward.1} parent=55 // pred_fallthru
          _
        // Predicated region
        $region97: #{linear_clip_forward.1} parent=55 // pred_check
          %p879 = pneg %p438
        $region98: #{linear_clip_forward.1} parent=55 // pred_check_branch
          %881 = sbr.rel (%p879) target = $region100
        $region99: #{linear_clip_forward.1} parent=55 // pred_region
          %p882 = scmp.lt.s32.totalorder %s49, 1
          %s883 = scalar_select %p882, %s49, 1
          %s884 = scalar_lea.vmem %s15, %s883
        $region100: #{linear_clip_forward.1} parent=55 // pred_fallthru
          _
        // Predicated region
        $region101: #{linear_clip_forward.1} parent=55 // pred_check
          %p885 = pneg %p464
        $region102: #{linear_clip_forward.1} parent=55 // pred_check_branch
          %887 = sbr.rel (%p885) target = $region104
        $region103: #{linear_clip_forward.1} parent=55 // pred_region
          %p888 = scmp.lt.s32.totalorder %s49, 1
          %s889 = scalar_select %p888, %s49, 1
          %s890 = scalar_lea.vmem %s16, %s889
        $region104: #{linear_clip_forward.1} parent=55 // pred_fallthru
          _
        // Predicated region
        $region105: #{linear_clip_forward.1} parent=55 // pred_check
          %p891 = pneg %p490
        $region106: #{linear_clip_forward.1} parent=55 // pred_check_branch
          %893 = sbr.rel (%p891) target = $region108
        $region107: #{linear_clip_forward.1} parent=55 // pred_region
          %p894 = scmp.lt.s32.totalorder %s49, 1
          %s895 = scalar_select %p894, %s49, 1
          %s896 = scalar_lea.vmem %s17, %s895
        $region108: #{linear_clip_forward.1} parent=55 // pred_fallthru
          _
        // Predicated region
        $region109: #{linear_clip_forward.1} parent=55 // pred_check
          %p897 = pneg %p516
        $region110: #{linear_clip_forward.1} parent=55 // pred_check_branch
          %899 = sbr.rel (%p897) target = $region112
        $region111: #{linear_clip_forward.1} parent=55 // pred_region
          %p900 = scmp.lt.s32.totalorder %s49, 1
          %s901 = scalar_select %p900, %s49, 1
          %s902 = smul.addr %s901, 64
          %s903 = smul.addr %s902, 4
          %s904 = scalar_lea.vmem %s18, %s903
        $region112: #{linear_clip_forward.1} parent=55 // pred_fallthru
          _
        // Predicated region
        $region113: #{linear_clip_forward.1} parent=55 // pred_check
          %p905 = pneg %p542
        $region114: #{linear_clip_forward.1} parent=55 // pred_check_branch
          %907 = sbr.rel (%p905) target = $region116
        $region115: #{linear_clip_forward.1} parent=55 // pred_region
          %p908 = scmp.lt.s32.totalorder %s49, 1
          %s909 = scalar_select %p908, %s49, 1
          %s910 = smul.addr %s909, 4
          %s911 = scalar_lea.vmem %s19, %s910
        $region116: #{linear_clip_forward.1} parent=55 // pred_fallthru
          _
        // Predicated region
        $region117: #{linear_clip_forward.1} parent=55 // pred_check
          %p912 = pneg %p568
        $region118: #{linear_clip_forward.1} parent=55 // pred_check_branch
          %914 = sbr.rel (%p912) target = $region120
        $region119: #{linear_clip_forward.1} parent=55 // pred_region
          %p915 = scmp.lt.s32.totalorder %s49, 1
          %s916 = scalar_select %p915, %s49, 1
          %s917 = smul.addr %s916, 64
          %s918 = smul.addr %s917, 4
          %s919 = scalar_lea.vmem %s20, %s918
        $region120: #{linear_clip_forward.1} parent=55 // pred_fallthru
          _
        // Predicated region
        $region121: #{linear_clip_forward.1} parent=55 // pred_check
          %p920 = pneg %p594
        $region122: #{linear_clip_forward.1} parent=55 // pred_check_branch
          %922 = sbr.rel (%p920) target = $region124
        $region123: #{linear_clip_forward.1} parent=55 // pred_region
          %p923 = scmp.lt.s32.totalorder %s49, 1
          %s924 = scalar_select %p923, %s49, 1
          %s925 = scalar_lea.vmem %s21, %s924
        $region124: #{linear_clip_forward.1} parent=55 // pred_fallthru
          _
      $region56: #{linear_clip_forward.1} parent=5 // pred_fallthru
        _
      %p926 = scmp.le.s32.totalorder 1, %s41
      %p927 = scmp.lt.s32.totalorder %s41, 5
      %p928 = pnand %p926, %p927
      %p929 = pneg %p928
      // Predicated region
      $region125: #{linear_clip_forward.1} parent=5 // pred_check
        _
      $region126: #{linear_clip_forward.1} parent=5 // pred_check_branch
        %931 = sbr.rel (%p928) target = $region128
      $region127: #{linear_clip_forward.1} parent=5 // pred_region
        %s932 = ssub.s32 %s41, 1
        %p933 = scmp.lt.s32.totalorder %s50, 1
        %s934 = scalar_select %p933, %s50, 1
        %s935 = smul.addr %s934, 6
        %s936 = smul.addr %s935, 2
        %s937 = scalar_lea.vmem %s0, %s936
        %p938 = pneg %p79
        %p939 = pneg %p76
        %p940 = pneg %p100
        %p941 = pneg %p97
        %p942 = pneg %p121
        %p943 = pneg %p118
        %p944 = pneg %p142
        %p945 = pneg %p139
        %p946 = pneg %p163
        %p947 = pneg %p160
        %p948 = pneg %p184
        %p949 = pneg %p181
        %p950 = scmp.lt.s32.totalorder %s51, 1
        %s951 = scalar_select %p950, %s51, 1
        %s952 = scalar_lea.vmem %s6, %s951
        %p953 = pneg %p210
        %p954 = pneg %p207
        %p955 = scmp.lt.s32.totalorder %s51, 1
        %s956 = scalar_select %p955, %s51, 1
        %s957 = scalar_lea.vmem %s7, %s956
        %p958 = pneg %p236
        %p959 = pneg %p233
        %p960 = scmp.lt.s32.totalorder %s51, 1
        %s961 = scalar_select %p960, %s51, 1
        %s962 = smul.addr %s961, 64
        %s963 = smul.addr %s962, 4
        %s964 = scalar_lea.vmem %s8, %s963
        %p965 = pneg %p262
        %p966 = pneg %p259
        %p967 = scmp.lt.s32.totalorder %s51, 1
        %s968 = scalar_select %p967, %s51, 1
        %s969 = smul.addr %s968, 4
        %s970 = scalar_lea.vmem %s9, %s969
        %p971 = pneg %p288
        %p972 = pneg %p285
        %p973 = scmp.lt.s32.totalorder %s51, 1
        %s974 = scalar_select %p973, %s51, 1
        %s975 = smul.addr %s974, 64
        %s976 = smul.addr %s975, 4
        %s977 = scalar_lea.vmem %s10, %s976
        %p978 = pneg %p314
        %p979 = pneg %p311
        %p980 = scmp.lt.s32.totalorder %s51, 1
        %s981 = scalar_select %p980, %s51, 1
        %s982 = smul.addr %s981, 4
        %s983 = scalar_lea.vmem %s11, %s982
        %p984 = pneg %p340
        %p985 = pneg %p337
        %p986 = scmp.lt.s32.totalorder %s51, 1
        %s987 = scalar_select %p986, %s51, 1
        %s988 = smul.addr %s987, 64
        %s989 = smul.addr %s988, 4
        %s990 = scalar_lea.vmem %s12, %s989
        %p991 = pneg %p366
        %p992 = pneg %p363
        %p993 = scmp.lt.s32.totalorder %s51, 1
        %s994 = scalar_select %p993, %s51, 1
        %s995 = smul.addr %s994, 4
        %s996 = scalar_lea.vmem %s13, %s995
        %p997 = pneg %p392
        %p998 = pneg %p389
        %p999 = scmp.lt.s32.totalorder %s51, 1
        %s1000 = scalar_select %p999, %s51, 1
        %s1001 = smul.addr %s1000, 16
        %s1002 = smul.addr %s1001, 4
        %s1003 = scalar_lea.vmem %s14, %s1002
        %p1004 = pneg %p418
        %p1005 = pneg %p415
        %p1006 = scmp.lt.s32.totalorder %s51, 1
        %s1007 = scalar_select %p1006, %s51, 1
        %s1008 = scalar_lea.vmem %s15, %s1007
        %p1009 = pneg %p444
        %p1010 = pneg %p441
        %p1011 = scmp.lt.s32.totalorder %s51, 1
        %s1012 = scalar_select %p1011, %s51, 1
        %s1013 = scalar_lea.vmem %s16, %s1012
        %p1014 = pneg %p470
        %p1015 = pneg %p467
        %p1016 = scmp.lt.s32.totalorder %s51, 1
        %s1017 = scalar_select %p1016, %s51, 1
        %s1018 = scalar_lea.vmem %s17, %s1017
        %p1019 = pneg %p496
        %p1020 = pneg %p493
        %p1021 = scmp.lt.s32.totalorder %s51, 1
        %s1022 = scalar_select %p1021, %s51, 1
        %s1023 = smul.addr %s1022, 64
        %s1024 = smul.addr %s1023, 4
        %s1025 = scalar_lea.vmem %s18, %s1024
        %p1026 = pneg %p522
        %p1027 = pneg %p519
        %p1028 = scmp.lt.s32.totalorder %s51, 1
        %s1029 = scalar_select %p1028, %s51, 1
        %s1030 = smul.addr %s1029, 4
        %s1031 = scalar_lea.vmem %s19, %s1030
        %p1032 = pneg %p548
        %p1033 = pneg %p545
        %p1034 = scmp.lt.s32.totalorder %s51, 1
        %s1035 = scalar_select %p1034, %s51, 1
        %s1036 = smul.addr %s1035, 64
        %s1037 = smul.addr %s1036, 4
        %s1038 = scalar_lea.vmem %s20, %s1037
        %p1039 = pneg %p574
        %p1040 = pneg %p571
        %p1041 = scmp.lt.s32.totalorder %s51, 1
        %s1042 = scalar_select %p1041, %s51, 1
        %s1043 = scalar_lea.vmem %s21, %s1042
        %p1044 = pneg %p600
        %p1045 = pneg %p597
        %p1046 = pneg %p621
        %p1047 = pneg %p618
        %p1048 = pneg %p642
        %p1049 = pneg %p639
        %p1050 = pneg %p663
        %p1051 = pneg %p660
        %p1052 = pneg %p684
        %p1053 = pneg %p681
        %p1054 = pneg %p705
        %p1055 = pneg %p702
        %p1056 = pneg %p731
        %p1057 = pneg %p728
        %s1058 = sand.u32 %s718, 1
        %s1059 = scalar_lea.sflag [#allocation4], %s1058
        %s1060 = sand.u32 %s718, 1
        %s1061 = scalar_lea.vmem [#allocation3], %s1060
        %p1062 = pneg %p757
        %p1063 = pneg %p754
        %s1064 = sand.u32 %s744, 1
        %s1065 = scalar_lea.sflag [#allocation6], %s1064
        %s1066 = sand.u32 %s744, 1
        %s1067 = scalar_lea.vmem [#allocation5], %s1066
        %p1068 = scmp.lt.s32.totalorder %s50, 1
        %s1069 = scalar_select %p1068, %s50, 1
        %s1070 = smul.addr %s1069, 6
        %s1071 = smul.addr %s1070, 2
        %s1072 = scalar_lea.vmem %s0, %s1071
        %p1073 = scmp.lt.s32.totalorder %s51, 1
        %s1074 = scalar_select %p1073, %s51, 1
        %s1075 = scalar_lea.vmem %s6, %s1074
        %p1076 = scmp.lt.s32.totalorder %s51, 1
        %s1077 = scalar_select %p1076, %s51, 1
        %s1078 = scalar_lea.vmem %s7, %s1077
        %p1079 = scmp.lt.s32.totalorder %s51, 1
        %s1080 = scalar_select %p1079, %s51, 1
        %s1081 = smul.addr %s1080, 64
        %s1082 = smul.addr %s1081, 4
        %s1083 = scalar_lea.vmem %s8, %s1082
        %p1084 = scmp.lt.s32.totalorder %s51, 1
        %s1085 = scalar_select %p1084, %s51, 1
        %s1086 = smul.addr %s1085, 4
        %s1087 = scalar_lea.vmem %s9, %s1086
        %p1088 = scmp.lt.s32.totalorder %s51, 1
        %s1089 = scalar_select %p1088, %s51, 1
        %s1090 = smul.addr %s1089, 64
        %s1091 = smul.addr %s1090, 4
        %s1092 = scalar_lea.vmem %s10, %s1091
        %p1093 = scmp.lt.s32.totalorder %s51, 1
        %s1094 = scalar_select %p1093, %s51, 1
        %s1095 = smul.addr %s1094, 4
        %s1096 = scalar_lea.vmem %s11, %s1095
        %p1097 = scmp.lt.s32.totalorder %s51, 1
        %s1098 = scalar_select %p1097, %s51, 1
        %s1099 = smul.addr %s1098, 64
        %s1100 = smul.addr %s1099, 4
        %s1101 = scalar_lea.vmem %s12, %s1100
        %p1102 = scmp.lt.s32.totalorder %s51, 1
        %s1103 = scalar_select %p1102, %s51, 1
        %s1104 = smul.addr %s1103, 4
        %s1105 = scalar_lea.vmem %s13, %s1104
        %p1106 = scmp.lt.s32.totalorder %s51, 1
        %s1107 = scalar_select %p1106, %s51, 1
        %s1108 = smul.addr %s1107, 16
        %s1109 = smul.addr %s1108, 4
        %s1110 = scalar_lea.vmem %s14, %s1109
        %p1111 = scmp.lt.s32.totalorder %s51, 1
        %s1112 = scalar_select %p1111, %s51, 1
        %s1113 = scalar_lea.vmem %s15, %s1112
        %p1114 = scmp.lt.s32.totalorder %s51, 1
        %s1115 = scalar_select %p1114, %s51, 1
        %s1116 = scalar_lea.vmem %s16, %s1115
        %p1117 = scmp.lt.s32.totalorder %s51, 1
        %s1118 = scalar_select %p1117, %s51, 1
        %s1119 = scalar_lea.vmem %s17, %s1118
        %p1120 = scmp.lt.s32.totalorder %s51, 1
        %s1121 = scalar_select %p1120, %s51, 1
        %s1122 = smul.addr %s1121, 64
        %s1123 = smul.addr %s1122, 4
        %s1124 = scalar_lea.vmem %s18, %s1123
        %p1125 = scmp.lt.s32.totalorder %s51, 1
        %s1126 = scalar_select %p1125, %s51, 1
        %s1127 = smul.addr %s1126, 4
        %s1128 = scalar_lea.vmem %s19, %s1127
        %p1129 = scmp.lt.s32.totalorder %s51, 1
        %s1130 = scalar_select %p1129, %s51, 1
        %s1131 = smul.addr %s1130, 64
        %s1132 = smul.addr %s1131, 4
        %s1133 = scalar_lea.vmem %s20, %s1132
        %p1134 = scmp.lt.s32.totalorder %s51, 1
        %s1135 = scalar_select %p1134, %s51, 1
        %s1136 = scalar_lea.vmem %s21, %s1135
        %p1138 = scmp.eq.s32.totalorder %s51, 0
        // Predicated region
        $region129: #{linear_clip_forward.1} parent=127 // pred_check
          %p1139 = pneg %p1138
        $region130: #{linear_clip_forward.1} parent=127 // pred_check_branch
          %1141 = sbr.rel (%p1139) target = $region132
        $region131: #{linear_clip_forward.1} parent=127 // pred_region
          %v1142 = vld [vmem:[%s2] sm:$0x1]
          %v1143 = vld [vmem:[%s3] sm:$0x1f]
          %v1144 = vld [vmem:[%s4] sm:$0x1]
          %v1145 = vld [vmem:[%s5] sm:$0x1]
          %v1146 = vld [vmem:[%s1072] sm:$0xff]
          %v1147 = vld [vmem:[%s1072 + $0x8] sm:$0xf]
          %v1148 = vld [vmem:[%s1] sm:$0xf]
          %v1149 = vld [vmem:[%s1 + $0x4] sm:$0xf]
          %v1150 = vld [vmem:[%s1 + $0x8] sm:$0xf]
          %v1151 = vld [vmem:[%s1 + $0xc] sm:$0xf]
          %v1152 = vld [vmem:[%s1 + $0x10] sm:$0xf]
          %v1153 = vld [vmem:[%s1 + $0x14] sm:$0xf]
          %v1154 = vld [vmem:[%s1 + $0x18] sm:$0xf]
          %v1155 = vld [vmem:[%s1 + $0x1c] sm:$0xf]
          %v1156 = vld [vmem:[%s1 + $0x20] sm:$0xf]
          %v1157 = vld [vmem:[%s1 + $0x24] sm:$0xf]
          %v1158 = vld [vmem:[%s1 + $0x28] sm:$0xf]
          %v1159 = vld [vmem:[%s1 + $0x2c] sm:$0xf]
          %v1160 = vld [vmem:[%s1 + $0x30] sm:$0xf]
          %v1161 = vld [vmem:[%s1 + $0x34] sm:$0xf]
          %v1162 = vld [vmem:[%s1 + $0x38] sm:$0xf]
          %v1163 = vld [vmem:[%s1 + $0x3c] sm:$0xf]
          %v1164 = vld [vmem:[%s1 + $0x40] sm:$0xf]
          %v1165 = vld [vmem:[%s1 + $0x44] sm:$0xf]
          %v1166 = vld [vmem:[%s1 + $0x48] sm:$0xf]
          %v1167 = vld [vmem:[%s1 + $0x4c] sm:$0xf]
          %v1168 = vld [vmem:[%s1 + $0x50] sm:$0xf]
          %v1169 = vld [vmem:[%s1 + $0x54] sm:$0xf]
          %v1170 = vld [vmem:[%s1 + $0x58] sm:$0xf]
          %v1171 = vld [vmem:[%s1 + $0x5c] sm:$0xf]
          %v1172 = vld [vmem:[%s1 + $0x60] sm:$0xf]
          %v1173 = vld [vmem:[%s1 + $0x64] sm:$0xf]
          %v1174 = vld [vmem:[%s1 + $0x68] sm:$0xf]
          %v1175 = vld [vmem:[%s1 + $0x6c] sm:$0xf]
          %v1176 = vld [vmem:[%s1 + $0x70] sm:$0xf]
          %v1177 = vld [vmem:[%s1 + $0x74] sm:$0xf]
          %v1178 = vld [vmem:[%s1 + $0x78] sm:$0xf]
          %v1179 = vld [vmem:[%s1 + $0x7c] sm:$0xf]
          %v1180 = vld [vmem:[%s1 + $0x80] sm:$0xf]
          %v1181 = vld [vmem:[%s1 + $0x84] sm:$0xf]
          %v1182 = vld [vmem:[%s1 + $0x88] sm:$0xf]
          %v1183 = vld [vmem:[%s1 + $0x8c] sm:$0xf]
          %v1184 = vld [vmem:[%s1 + $0x90] sm:$0xf]
          %v1185 = vld [vmem:[%s1 + $0x94] sm:$0xf]
          %v1186 = vld [vmem:[%s1 + $0x98] sm:$0xf]
          %v1187 = vld [vmem:[%s1 + $0x9c] sm:$0xf]
          %v1188 = vld [vmem:[%s1 + $0xa0] sm:$0xf]
          %v1189 = vld [vmem:[%s1 + $0xa4] sm:$0xf]
          %v1190 = vld [vmem:[%s1 + $0xa8] sm:$0xf]
          %v1191 = vld [vmem:[%s1 + $0xac] sm:$0xf]
          %v1192 = vld [vmem:[%s1 + $0xb0] sm:$0xf]
          %v1193 = vld [vmem:[%s1 + $0xb4] sm:$0xf]
          %v1194 = vld [vmem:[%s1 + $0xb8] sm:$0xf]
          %v1195 = vld [vmem:[%s1 + $0xbc] sm:$0xf]
          %v1196 = vld [vmem:[%s1 + $0xc0] sm:$0xf]
          %v1197 = vld [vmem:[%s1 + $0xc4] sm:$0xf]
          %v1198 = vld [vmem:[%s1 + $0xc8] sm:$0xf]
          %v1199 = vld [vmem:[%s1 + $0xcc] sm:$0xf]
          %v1200 = vld [vmem:[%s1 + $0xd0] sm:$0xf]
          %v1201 = vld [vmem:[%s1 + $0xd4] sm:$0xf]
          %v1202 = vld [vmem:[%s1 + $0xd8] sm:$0xf]
          %v1203 = vld [vmem:[%s1 + $0xdc] sm:$0xf]
          %v1204 = vld [vmem:[%s1 + $0xe0] sm:$0xf]
          %v1205 = vld [vmem:[%s1 + $0xe4] sm:$0xf]
          %v1206 = vld [vmem:[%s1 + $0xe8] sm:$0xf]
          %v1207 = vld [vmem:[%s1 + $0xec] sm:$0xf]
          %v1208 = vld [vmem:[%s1 + $0xf0] sm:$0xf]
          %v1209 = vld [vmem:[%s1 + $0xf4] sm:$0xf]
          %v1210 = vld [vmem:[%s1 + $0xf8] sm:$0xf]
          %v1211 = vld [vmem:[%s1 + $0xfc] sm:$0xf]
          %v1212 = vld [vmem:[%s1 + $0x100] sm:$0xf]
          %v1213 = vld [vmem:[%s1 + $0x104] sm:$0xf]
          %v1214 = vld [vmem:[%s1 + $0x108] sm:$0xf]
          %v1215 = vld [vmem:[%s1 + $0x10c] sm:$0xf]
          %v1216 = vld [vmem:[%s1 + $0x110] sm:$0xf]
          %v1217 = vld [vmem:[%s1 + $0x114] sm:$0xf]
          %v1218 = vld [vmem:[%s1 + $0x118] sm:$0xf]
          %v1219 = vld [vmem:[%s1 + $0x11c] sm:$0xf]
          %v1220 = vld [vmem:[%s1 + $0x120] sm:$0xf]
          %v1221 = vld [vmem:[%s1 + $0x124] sm:$0xf]
          %v1222 = vld [vmem:[%s1 + $0x128] sm:$0xf]
          %v1223 = vld [vmem:[%s1 + $0x12c] sm:$0xf]
          %v1224 = vld [vmem:[%s1 + $0x130] sm:$0xf]
          %v1225 = vld [vmem:[%s1 + $0x134] sm:$0xf]
          %v1226 = vld [vmem:[%s1 + $0x138] sm:$0xf]
          %v1227 = vld [vmem:[%s1 + $0x13c] sm:$0xf]
          %v1228 = vld [vmem:[%s1 + $0x140] sm:$0xf]
          %v1229 = vld [vmem:[%s1 + $0x144] sm:$0xf]
          %v1230 = vld [vmem:[%s1 + $0x148] sm:$0xf]
          %v1231 = vld [vmem:[%s1 + $0x14c] sm:$0xf]
          %v1232 = vld [vmem:[%s1 + $0x150] sm:$0xf]
          %v1233 = vld [vmem:[%s1 + $0x154] sm:$0xf]
          %v1234 = vld [vmem:[%s1 + $0x158] sm:$0xf]
          %v1235 = vld [vmem:[%s1 + $0x15c] sm:$0xf]
          %v1236 = vld [vmem:[%s1 + $0x160] sm:$0xf]
          %v1237 = vld [vmem:[%s1 + $0x164] sm:$0xf]
          %v1238 = vld [vmem:[%s1 + $0x168] sm:$0xf]
          %v1239 = vld [vmem:[%s1 + $0x16c] sm:$0xf]
          %v1240 = vld [vmem:[%s1 + $0x170] sm:$0xf]
          %v1241 = vld [vmem:[%s1 + $0x174] sm:$0xf]
          %v1242 = vld [vmem:[%s1 + $0x178] sm:$0xf]
          %v1243 = vld [vmem:[%s1 + $0x17c] sm:$0xf]
          %1245 = vst [vmem:[#allocation1] ss:$4 sm:$0xff] %v1146
          %s1247 = scalar_lea.vmem [#allocation1], 32
          %1248 = vst [vmem:[%s1247] ss:$4 sm:$0xff] %v1147
          %v1249 = vld.sshfl [vmem:[#allocation1] sm:$0xff pattern:$0x73625140]
          %v1250 = vld.sshfl [vmem:[#allocation1 + $0x8] sm:$0xff pattern:$0x73625140]
          %v1251 = vld.sshfl [vmem:[#allocation1 + $0x10] sm:$0xff pattern:$0x73625140]
          %v1252 = vld.sshfl [vmem:[#allocation1 + $0x18] sm:$0xff pattern:$0x73625140]
          %v1253 = vld.sshfl [vmem:[#allocation1 + $0x20] sm:$0xff pattern:$0x73625140]
          %v1254 = vld.sshfl [vmem:[#allocation1 + $0x28] sm:$0xff pattern:$0x73625140]
          %v1357 = vunpack.c.l.b16 %v1148
          %v1358 = vunpack.c.l.b16 %v1149
          %v1359 = vunpack.c.l.b16 %v1150
          %v1360 = vunpack.c.l.b16 %v1151
          %v1361 = vunpack.c.l.b16 %v1152
          %v1362 = vunpack.c.l.b16 %v1153
          %v1363 = vunpack.c.l.b16 %v1154
          %v1364 = vunpack.c.l.b16 %v1155
          %v1365 = vunpack.c.l.b16 %v1156
          %v1366 = vunpack.c.l.b16 %v1157
          %v1367 = vunpack.c.l.b16 %v1158
          %v1368 = vunpack.c.l.b16 %v1159
          %v1369 = vunpack.c.l.b16 %v1160
          %v1370 = vunpack.c.l.b16 %v1161
          %v1371 = vunpack.c.l.b16 %v1162
          %v1372 = vunpack.c.l.b16 %v1163
          %v1373 = vunpack.c.l.b16 %v1164
          %v1374 = vunpack.c.l.b16 %v1165
          %v1375 = vunpack.c.l.b16 %v1166
          %v1376 = vunpack.c.l.b16 %v1167
          %v1377 = vunpack.c.l.b16 %v1168
          %v1378 = vunpack.c.l.b16 %v1169
          %v1379 = vunpack.c.l.b16 %v1170
          %v1380 = vunpack.c.l.b16 %v1171
          %v1381 = vunpack.c.l.b16 %v1172
          %v1382 = vunpack.c.l.b16 %v1173
          %v1383 = vunpack.c.l.b16 %v1174
          %v1384 = vunpack.c.l.b16 %v1175
          %v1385 = vunpack.c.l.b16 %v1176
          %v1386 = vunpack.c.l.b16 %v1177
          %v1387 = vunpack.c.l.b16 %v1178
          %v1388 = vunpack.c.l.b16 %v1179
          %v1389 = vunpack.c.l.b16 %v1180
          %v1390 = vunpack.c.l.b16 %v1181
          %v1391 = vunpack.c.l.b16 %v1182
          %v1392 = vunpack.c.l.b16 %v1183
          %v1393 = vunpack.c.l.b16 %v1184
          %v1394 = vunpack.c.l.b16 %v1185
          %v1395 = vunpack.c.l.b16 %v1186
          %v1396 = vunpack.c.l.b16 %v1187
          %v1397 = vunpack.c.l.b16 %v1188
          %v1398 = vunpack.c.l.b16 %v1189
          %v1399 = vunpack.c.l.b16 %v1190
          %v1400 = vunpack.c.l.b16 %v1191
          %v1401 = vunpack.c.l.b16 %v1192
          %v1402 = vunpack.c.l.b16 %v1193
          %v1403 = vunpack.c.l.b16 %v1194
          %v1404 = vunpack.c.l.b16 %v1195
          %v1405 = vunpack.c.l.b16 %v1196
          %v1406 = vunpack.c.l.b16 %v1197
          %v1407 = vunpack.c.l.b16 %v1198
          %v1408 = vunpack.c.l.b16 %v1199
          %v1409 = vunpack.c.l.b16 %v1200
          %v1410 = vunpack.c.l.b16 %v1201
          %v1411 = vunpack.c.l.b16 %v1202
          %v1412 = vunpack.c.l.b16 %v1203
          %v1413 = vunpack.c.l.b16 %v1204
          %v1414 = vunpack.c.l.b16 %v1205
          %v1415 = vunpack.c.l.b16 %v1206
          %v1416 = vunpack.c.l.b16 %v1207
          %v1417 = vunpack.c.l.b16 %v1208
          %v1418 = vunpack.c.l.b16 %v1209
          %v1419 = vunpack.c.l.b16 %v1210
          %v1420 = vunpack.c.l.b16 %v1211
          %v1421 = vunpack.c.l.b16 %v1212
          %v1422 = vunpack.c.l.b16 %v1213
          %v1423 = vunpack.c.l.b16 %v1214
          %v1424 = vunpack.c.l.b16 %v1215
          %v1425 = vunpack.c.l.b16 %v1216
          %v1426 = vunpack.c.l.b16 %v1217
          %v1427 = vunpack.c.l.b16 %v1218
          %v1428 = vunpack.c.l.b16 %v1219
          %v1429 = vunpack.c.l.b16 %v1220
          %v1430 = vunpack.c.l.b16 %v1221
          %v1431 = vunpack.c.l.b16 %v1222
          %v1432 = vunpack.c.l.b16 %v1223
          %v1433 = vunpack.c.l.b16 %v1224
          %v1434 = vunpack.c.l.b16 %v1225
          %v1435 = vunpack.c.l.b16 %v1226
          %v1436 = vunpack.c.l.b16 %v1227
          %v1437 = vunpack.c.l.b16 %v1228
          %v1438 = vunpack.c.l.b16 %v1229
          %v1439 = vunpack.c.l.b16 %v1230
          %v1440 = vunpack.c.l.b16 %v1231
          %v1441 = vunpack.c.l.b16 %v1232
          %v1442 = vunpack.c.l.b16 %v1233
          %v1443 = vunpack.c.l.b16 %v1234
          %v1444 = vunpack.c.l.b16 %v1235
          %v1445 = vunpack.c.l.b16 %v1236
          %v1446 = vunpack.c.l.b16 %v1237
          %v1447 = vunpack.c.l.b16 %v1238
          %v1448 = vunpack.c.l.b16 %v1239
          %v1449 = vunpack.c.l.b16 %v1240
          %v1450 = vunpack.c.l.b16 %v1241
          %v1451 = vunpack.c.l.b16 %v1242
          %v1452 = vunpack.c.l.b16 %v1243
          %v1453 = vpack.c.b16 %v1358, %v1357
          %v1454 = vpack.c.b16 %v1360, %v1359
          %v1455 = vpack.c.b16 %v1362, %v1361
          %v1456 = vpack.c.b16 %v1364, %v1363
          %v1457 = vpack.c.b16 %v1366, %v1365
          %v1458 = vpack.c.b16 %v1368, %v1367
          %v1459 = vpack.c.b16 %v1370, %v1369
          %v1460 = vpack.c.b16 %v1372, %v1371
          %v1461 = vpack.c.b16 %v1374, %v1373
          %v1462 = vpack.c.b16 %v1376, %v1375
          %v1463 = vpack.c.b16 %v1378, %v1377
          %v1464 = vpack.c.b16 %v1380, %v1379
          %v1465 = vpack.c.b16 %v1382, %v1381
          %v1466 = vpack.c.b16 %v1384, %v1383
          %v1467 = vpack.c.b16 %v1386, %v1385
          %v1468 = vpack.c.b16 %v1388, %v1387
          %v1469 = vpack.c.b16 %v1390, %v1389
          %v1470 = vpack.c.b16 %v1392, %v1391
          %v1471 = vpack.c.b16 %v1394, %v1393
          %v1472 = vpack.c.b16 %v1396, %v1395
          %v1473 = vpack.c.b16 %v1398, %v1397
          %v1474 = vpack.c.b16 %v1400, %v1399
          %v1475 = vpack.c.b16 %v1402, %v1401
          %v1476 = vpack.c.b16 %v1404, %v1403
          %v1477 = vpack.c.b16 %v1406, %v1405
          %v1478 = vpack.c.b16 %v1408, %v1407
          %v1479 = vpack.c.b16 %v1410, %v1409
          %v1480 = vpack.c.b16 %v1412, %v1411
          %v1481 = vpack.c.b16 %v1414, %v1413
          %v1482 = vpack.c.b16 %v1416, %v1415
          %v1483 = vpack.c.b16 %v1418, %v1417
          %v1484 = vpack.c.b16 %v1420, %v1419
          %v1485 = vpack.c.b16 %v1422, %v1421
          %v1486 = vpack.c.b16 %v1424, %v1423
          %v1487 = vpack.c.b16 %v1426, %v1425
          %v1488 = vpack.c.b16 %v1428, %v1427
          %v1489 = vpack.c.b16 %v1430, %v1429
          %v1490 = vpack.c.b16 %v1432, %v1431
          %v1491 = vpack.c.b16 %v1434, %v1433
          %v1492 = vpack.c.b16 %v1436, %v1435
          %v1493 = vpack.c.b16 %v1438, %v1437
          %v1494 = vpack.c.b16 %v1440, %v1439
          %v1495 = vpack.c.b16 %v1442, %v1441
          %v1496 = vpack.c.b16 %v1444, %v1443
          %v1497 = vpack.c.b16 %v1446, %v1445
          %v1498 = vpack.c.b16 %v1448, %v1447
          %v1499 = vpack.c.b16 %v1450, %v1449
          %v1500 = vpack.c.b16 %v1452, %v1451
          %1549 = vmatpush.bf16.msra.mxu0 %v1460
          %1550 = vmatpush.bf16.msra.mxu0 %v1459
          %1551 = vmatpush.bf16.msra.mxu0 %v1458
          %1552 = vmatpush.bf16.msra.mxu0 %v1457
          %1553 = vmatpush.bf16.msra.mxu0 %v1456
          %1554 = vmatpush.bf16.msra.mxu0 %v1455
          %1555 = vmatpush.bf16.msra.mxu0 %v1454
          %1556 = vmatpush.bf16.msra.mxu0 %v1453
          %1557 = vmatmul.bf16.gmra.mxu0 %v1249
          %v1558 = vpop.f32.mrf.mxu0
          %v1559 = vadd.f32 0.0, %v1558
          %v1560 = vpop.f32.mrf.mxu0
          %1561 = vdwg.mxu0
          %1562 = vmatpush.bf16.msra.mxu0 %v1468
          %1563 = vmatpush.bf16.msra.mxu0 %v1467
          %1564 = vmatpush.bf16.msra.mxu0 %v1466
          %1565 = vmatpush.bf16.msra.mxu0 %v1465
          %1566 = vmatpush.bf16.msra.mxu0 %v1464
          %1567 = vmatpush.bf16.msra.mxu0 %v1463
          %1568 = vmatpush.bf16.msra.mxu0 %v1462
          %1569 = vmatpush.bf16.msra.mxu0 %v1461
          %1570 = vmatmul.bf16.gmra.mxu0 %v1250
          %v1571 = vpop.f32.mrf.mxu0
          %v1572 = vadd.f32 %v1559, %v1571
          %v1573 = vpop.f32.mrf.mxu0
          %1574 = vdwg.mxu0
          %1575 = vmatpush.bf16.msra.mxu0 %v1476
          %1576 = vmatpush.bf16.msra.mxu0 %v1475
          %1577 = vmatpush.bf16.msra.mxu0 %v1474
          %1578 = vmatpush.bf16.msra.mxu0 %v1473
          %1579 = vmatpush.bf16.msra.mxu0 %v1472
          %1580 = vmatpush.bf16.msra.mxu0 %v1471
          %1581 = vmatpush.bf16.msra.mxu0 %v1470
          %1582 = vmatpush.bf16.msra.mxu0 %v1469
          %1583 = vmatmul.bf16.gmra.mxu0 %v1251
          %v1584 = vpop.f32.mrf.mxu0
          %v1585 = vadd.f32 %v1572, %v1584
          %v1586 = vpop.f32.mrf.mxu0
          %1587 = vdwg.mxu0
          %1588 = vmatpush.bf16.msra.mxu0 %v1484
          %1589 = vmatpush.bf16.msra.mxu0 %v1483
          %1590 = vmatpush.bf16.msra.mxu0 %v1482
          %1591 = vmatpush.bf16.msra.mxu0 %v1481
          %1592 = vmatpush.bf16.msra.mxu0 %v1480
          %1593 = vmatpush.bf16.msra.mxu0 %v1479
          %1594 = vmatpush.bf16.msra.mxu0 %v1478
          %1595 = vmatpush.bf16.msra.mxu0 %v1477
          %1596 = vmatmul.bf16.gmra.mxu0 %v1252
          %v1597 = vpop.f32.mrf.mxu0
          %v1598 = vadd.f32 %v1585, %v1597
          %v1599 = vpop.f32.mrf.mxu0
          %1600 = vdwg.mxu0
          %1601 = vmatpush.bf16.msra.mxu0 %v1492
          %1602 = vmatpush.bf16.msra.mxu0 %v1491
          %1603 = vmatpush.bf16.msra.mxu0 %v1490
          %1604 = vmatpush.bf16.msra.mxu0 %v1489
          %1605 = vmatpush.bf16.msra.mxu0 %v1488
          %1606 = vmatpush.bf16.msra.mxu0 %v1487
          %1607 = vmatpush.bf16.msra.mxu0 %v1486
          %1608 = vmatpush.bf16.msra.mxu0 %v1485
          %1609 = vmatmul.bf16.gmra.mxu0 %v1253
          %v1610 = vpop.f32.mrf.mxu0
          %v1611 = vadd.f32 %v1598, %v1610
          %v1612 = vpop.f32.mrf.mxu0
          %1613 = vdwg.mxu0
          %1614 = vmatpush.bf16.msra.mxu0 %v1500
          %1615 = vmatpush.bf16.msra.mxu0 %v1499
          %1616 = vmatpush.bf16.msra.mxu0 %v1498
          %1617 = vmatpush.bf16.msra.mxu0 %v1497
          %1618 = vmatpush.bf16.msra.mxu0 %v1496
          %1619 = vmatpush.bf16.msra.mxu0 %v1495
          %1620 = vmatpush.bf16.msra.mxu0 %v1494
          %1621 = vmatpush.bf16.msra.mxu0 %v1493
          %1622 = vmatmul.bf16.gmra.mxu0 %v1254
          %v1623 = vpop.f32.mrf.mxu0
          %v1624 = vadd.f32 %v1611, %v1623
          %v1625 = vpop.f32.mrf.mxu0
          %1626 = vdwg.mxu0
          %v1628 = vrot.slane %v1624, 7
          %vm1630 = vcmask 1040384
          %v1631 = vsel %vm1630, %v1142, %v1628
          %v1632 = vadd.f32 %v1631, %v1143
          %vm1633 = vcmask 1044480
          %v1634 = vsel %vm1633, %v1632, 0.0
          %1635 = vadd.xlane.f32.xlu0 %v1634
          %v1636 = vpop.xlane.xlu0 %1635
          %v1637 = vrcp.pop 128.0
          %v1638 = vmul.f32 128.0, %v1637
          %v1639 = vsub.f32 1.0, %v1638
          %v1640 = vmul.f32 %v1637, %v1639
          %v1641 = vadd.f32 %v1637, %v1640
          %vm1642 = vweird.f32 %v1637
          %v1643 = vsel %vm1642, %v1637, %v1641
          %v1644 = vmul.f32 %v1636, %v1643
          %v1645 = vsub.f32 %v1632, %v1644
          %v1646 = vmul.f32 %v1645, %v1645
          %v1647 = vsel %vm1633, %v1646, 0.0
          %1648 = vadd.xlane.f32.xlu0 %v1647
          %v1649 = vpop.xlane.xlu0 %1648
          %v1650 = vmul.f32 %v1649, %v1643
          %v1651 = vadd.f32 %v1650, 1e-05
          %v1652 = vrsqrt.pop %v1651
          %v1653 = vmul.f32 %v1652, %v1651
          %v1654 = vmul.f32 %v1653, %v1652
          %v1655 = vmul.f32 0.5, %v1654
          %v1656 = vsub.f32 1.5, %v1655
          %v1657 = vmul.f32 %v1652, %v1656
          %vm1658 = vweird.f32 %v1651
          %vm1659 = vweird.f32 %v1652
          %vm1660 = vmor %vm1658, %vm1659
          %v1661 = vsel %vm1660, %v1652, %v1657
          %v1662 = vmul.f32 %v1645, %v1661
          %v1664 = vperm.slane %v1144, 0
          %v1666 = vmul.f32 %v1662, %v1664
          %v1668 = vperm.slane %v1145, 0
          %v1670 = vadd.f32 %v1666, %v1668
          %1671 = vst [vmem:[#allocation2] sm:$0x1f] %v1670
        $region132: #{linear_clip_forward.1} parent=127 // pred_fallthru
          _
        %v1672 = vld [vmem:[#allocation2] sm:$0x1f]
        %v1673 = vld [vmem:[%s1075] sm:$0x1]
        %v1674 = vld [vmem:[%s1078] sm:$0x1]
        %vm1675 = vcmask 1044480
        %v1676 = vsel %vm1675, %v1672, 0.0
        %1677 = vadd.xlane.f32.xlu0 %v1676
        %v1678 = vpop.xlane.xlu0 %1677
        %v1679 = vrcp.pop 128.0
        %v1680 = vmul.f32 128.0, %v1679
        %v1681 = vsub.f32 1.0, %v1680
        %v1682 = vmul.f32 %v1679, %v1681
        %v1683 = vadd.f32 %v1679, %v1682
        %vm1684 = vweird.f32 %v1679
        %v1685 = vsel %vm1684, %v1679, %v1683
        %v1686 = vmul.f32 %v1678, %v1685
        %v1687 = vsub.f32 %v1672, %v1686
        %v1688 = vmul.f32 %v1687, %v1687
        %v1689 = vsel %vm1675, %v1688, 0.0
        %1690 = vadd.xlane.f32.xlu0 %v1689
        %v1691 = vpop.xlane.xlu0 %1690
        %v1692 = vmul.f32 %v1691, %v1685
        %v1693 = vadd.f32 %v1692, 1e-05
        %v1694 = vrsqrt.pop %v1693
        %v1695 = vmul.f32 %v1694, %v1693
        %v1696 = vmul.f32 %v1695, %v1694
        %v1697 = vmul.f32 0.5, %v1696
        %v1698 = vsub.f32 1.5, %v1697
        %v1699 = vmul.f32 %v1694, %v1698
        %vm1700 = vweird.f32 %v1693
        %vm1701 = vweird.f32 %v1694
        %vm1702 = vmor %vm1700, %vm1701
        %v1703 = vsel %vm1702, %v1694, %v1699
        %v1704 = vmul.f32 %v1687, %v1703
        %v1706 = vperm.slane %v1673, 0
        %v1708 = vmul.f32 %v1704, %v1706
        %v1710 = vperm.slane %v1674, 0
        %v1712 = vadd.f32 %v1708, %v1710
        %v1713 = vpack.c.bf16 %v1712, %v1712
        %v1714 = vld [vmem:[%s1083] sm:$0xf]
        %v1715 = vld [vmem:[%s1083 + $0x4] sm:$0xf]
        %v1716 = vld [vmem:[%s1083 + $0x8] sm:$0xf]
        %v1717 = vld [vmem:[%s1083 + $0xc] sm:$0xf]
        %v1718 = vld [vmem:[%s1083 + $0x10] sm:$0xf]
        %v1719 = vld [vmem:[%s1083 + $0x14] sm:$0xf]
        %v1720 = vld [vmem:[%s1083 + $0x18] sm:$0xf]
        %v1721 = vld [vmem:[%s1083 + $0x1c] sm:$0xf]
        %v1722 = vld [vmem:[%s1083 + $0x20] sm:$0xf]
        %v1723 = vld [vmem:[%s1083 + $0x24] sm:$0xf]
        %v1724 = vld [vmem:[%s1083 + $0x28] sm:$0xf]
        %v1725 = vld [vmem:[%s1083 + $0x2c] sm:$0xf]
        %v1726 = vld [vmem:[%s1083 + $0x30] sm:$0xf]
        %v1727 = vld [vmem:[%s1083 + $0x34] sm:$0xf]
        %v1728 = vld [vmem:[%s1083 + $0x38] sm:$0xf]
        %v1729 = vld [vmem:[%s1083 + $0x3c] sm:$0xf]
        %v1730 = vld [vmem:[%s1087] sm:$0x1]
        %v1732 = vperm.slane %v1730, 0
        %v1750 = vunpack.c.l.b16 %v1714
        %v1751 = vunpack.c.l.b16 %v1715
        %v1752 = vunpack.c.l.b16 %v1716
        %v1753 = vunpack.c.l.b16 %v1717
        %v1754 = vunpack.c.l.b16 %v1718
        %v1755 = vunpack.c.l.b16 %v1719
        %v1756 = vunpack.c.l.b16 %v1720
        %v1757 = vunpack.c.l.b16 %v1721
        %v1758 = vunpack.c.l.b16 %v1722
        %v1759 = vunpack.c.l.b16 %v1723
        %v1760 = vunpack.c.l.b16 %v1724
        %v1761 = vunpack.c.l.b16 %v1725
        %v1762 = vunpack.c.l.b16 %v1726
        %v1763 = vunpack.c.l.b16 %v1727
        %v1764 = vunpack.c.l.b16 %v1728
        %v1765 = vunpack.c.l.b16 %v1729
        %v1766 = vpack.c.b16 %v1751, %v1750
        %v1767 = vpack.c.b16 %v1753, %v1752
        %v1768 = vpack.c.b16 %v1755, %v1754
        %v1769 = vpack.c.b16 %v1757, %v1756
        %v1770 = vpack.c.b16 %v1759, %v1758
        %v1771 = vpack.c.b16 %v1761, %v1760
        %v1772 = vpack.c.b16 %v1763, %v1762
        %v1773 = vpack.c.b16 %v1765, %v1764
        %1782 = vmatpush.bf16.msra.mxu0 %v1773
        %1783 = vmatpush.bf16.msra.mxu0 %v1772
        %1784 = vmatpush.bf16.msra.mxu0 %v1771
        %1785 = vmatpush.bf16.msra.mxu0 %v1770
        %1786 = vmatpush.bf16.msra.mxu0 %v1769
        %1787 = vmatpush.bf16.msra.mxu0 %v1768
        %1788 = vmatpush.bf16.msra.mxu0 %v1767
        %1789 = vmatpush.bf16.msra.mxu0 %v1766
        %1790 = vmatmul.bf16.gmra.mxu0 %v1713
        %v1791 = vpop.f32.mrf.mxu0
        %v1792 = vadd.f32 %v1732, %v1791
        %v1793 = vpop.f32.mrf.mxu0
        %1794 = vdwg.mxu0
        %v1795 = vld [vmem:[%s1092] sm:$0xf]
        %v1796 = vld [vmem:[%s1092 + $0x4] sm:$0xf]
        %v1797 = vld [vmem:[%s1092 + $0x8] sm:$0xf]
        %v1798 = vld [vmem:[%s1092 + $0xc] sm:$0xf]
        %v1799 = vld [vmem:[%s1092 + $0x10] sm:$0xf]
        %v1800 = vld [vmem:[%s1092 + $0x14] sm:$0xf]
        %v1801 = vld [vmem:[%s1092 + $0x18] sm:$0xf]
        %v1802 = vld [vmem:[%s1092 + $0x1c] sm:$0xf]
        %v1803 = vld [vmem:[%s1092 + $0x20] sm:$0xf]
        %v1804 = vld [vmem:[%s1092 + $0x24] sm:$0xf]
        %v1805 = vld [vmem:[%s1092 + $0x28] sm:$0xf]
        %v1806 = vld [vmem:[%s1092 + $0x2c] sm:$0xf]
        %v1807 = vld [vmem:[%s1092 + $0x30] sm:$0xf]
        %v1808 = vld [vmem:[%s1092 + $0x34] sm:$0xf]
        %v1809 = vld [vmem:[%s1092 + $0x38] sm:$0xf]
        %v1810 = vld [vmem:[%s1092 + $0x3c] sm:$0xf]
        %v1811 = vld [vmem:[%s1096] sm:$0x1]
        %v1813 = vperm.slane %v1811, 0
        %v1831 = vunpack.c.l.b16 %v1795
        %v1832 = vunpack.c.l.b16 %v1796
        %v1833 = vunpack.c.l.b16 %v1797
        %v1834 = vunpack.c.l.b16 %v1798
        %v1835 = vunpack.c.l.b16 %v1799
        %v1836 = vunpack.c.l.b16 %v1800
        %v1837 = vunpack.c.l.b16 %v1801
        %v1838 = vunpack.c.l.b16 %v1802
        %v1839 = vunpack.c.l.b16 %v1803
        %v1840 = vunpack.c.l.b16 %v1804
        %v1841 = vunpack.c.l.b16 %v1805
        %v1842 = vunpack.c.l.b16 %v1806
        %v1843 = vunpack.c.l.b16 %v1807
        %v1844 = vunpack.c.l.b16 %v1808
        %v1845 = vunpack.c.l.b16 %v1809
        %v1846 = vunpack.c.l.b16 %v1810
        %v1847 = vpack.c.b16 %v1832, %v1831
        %v1848 = vpack.c.b16 %v1834, %v1833
        %v1849 = vpack.c.b16 %v1836, %v1835
        %v1850 = vpack.c.b16 %v1838, %v1837
        %v1851 = vpack.c.b16 %v1840, %v1839
        %v1852 = vpack.c.b16 %v1842, %v1841
        %v1853 = vpack.c.b16 %v1844, %v1843
        %v1854 = vpack.c.b16 %v1846, %v1845
        %1863 = vmatpush.bf16.msra.mxu0 %v1854
        %1864 = vmatpush.bf16.msra.mxu0 %v1853
        %1865 = vmatpush.bf16.msra.mxu0 %v1852
        %1866 = vmatpush.bf16.msra.mxu0 %v1851
        %1867 = vmatpush.bf16.msra.mxu0 %v1850
        %1868 = vmatpush.bf16.msra.mxu0 %v1849
        %1869 = vmatpush.bf16.msra.mxu0 %v1848
        %1870 = vmatpush.bf16.msra.mxu0 %v1847
        %1871 = vmatmul.bf16.gmra.mxu0 %v1713
        %v1872 = vpop.f32.mrf.mxu0
        %v1873 = vadd.f32 %v1813, %v1872
        %v1874 = vpop.f32.mrf.mxu0
        %1875 = vdwg.mxu0
        %v1876 = vld [vmem:[%s1101] sm:$0xf]
        %v1877 = vld [vmem:[%s1101 + $0x4] sm:$0xf]
        %v1878 = vld [vmem:[%s1101 + $0x8] sm:$0xf]
        %v1879 = vld [vmem:[%s1101 + $0xc] sm:$0xf]
        %v1880 = vld [vmem:[%s1101 + $0x10] sm:$0xf]
        %v1881 = vld [vmem:[%s1101 + $0x14] sm:$0xf]
        %v1882 = vld [vmem:[%s1101 + $0x18] sm:$0xf]
        %v1883 = vld [vmem:[%s1101 + $0x1c] sm:$0xf]
        %v1884 = vld [vmem:[%s1101 + $0x20] sm:$0xf]
        %v1885 = vld [vmem:[%s1101 + $0x24] sm:$0xf]
        %v1886 = vld [vmem:[%s1101 + $0x28] sm:$0xf]
        %v1887 = vld [vmem:[%s1101 + $0x2c] sm:$0xf]
        %v1888 = vld [vmem:[%s1101 + $0x30] sm:$0xf]
        %v1889 = vld [vmem:[%s1101 + $0x34] sm:$0xf]
        %v1890 = vld [vmem:[%s1101 + $0x38] sm:$0xf]
        %v1891 = vld [vmem:[%s1101 + $0x3c] sm:$0xf]
        %v1892 = vld [vmem:[%s1105] sm:$0x1]
        %v1894 = vperm.slane %v1892, 0
        %v1912 = vunpack.c.l.b16 %v1876
        %v1913 = vunpack.c.l.b16 %v1877
        %v1914 = vunpack.c.l.b16 %v1878
        %v1915 = vunpack.c.l.b16 %v1879
        %v1916 = vunpack.c.l.b16 %v1880
        %v1917 = vunpack.c.l.b16 %v1881
        %v1918 = vunpack.c.l.b16 %v1882
        %v1919 = vunpack.c.l.b16 %v1883
        %v1920 = vunpack.c.l.b16 %v1884
        %v1921 = vunpack.c.l.b16 %v1885
        %v1922 = vunpack.c.l.b16 %v1886
        %v1923 = vunpack.c.l.b16 %v1887
        %v1924 = vunpack.c.l.b16 %v1888
        %v1925 = vunpack.c.l.b16 %v1889
        %v1926 = vunpack.c.l.b16 %v1890
        %v1927 = vunpack.c.l.b16 %v1891
        %v1928 = vpack.c.b16 %v1913, %v1912
        %v1929 = vpack.c.b16 %v1915, %v1914
        %v1930 = vpack.c.b16 %v1917, %v1916
        %v1931 = vpack.c.b16 %v1919, %v1918
        %v1932 = vpack.c.b16 %v1921, %v1920
        %v1933 = vpack.c.b16 %v1923, %v1922
        %v1934 = vpack.c.b16 %v1925, %v1924
        %v1935 = vpack.c.b16 %v1927, %v1926
        %1944 = vmatpush.bf16.msra.mxu0 %v1935
        %1945 = vmatpush.bf16.msra.mxu0 %v1934
        %1946 = vmatpush.bf16.msra.mxu0 %v1933
        %1947 = vmatpush.bf16.msra.mxu0 %v1932
        %1948 = vmatpush.bf16.msra.mxu0 %v1931
        %1949 = vmatpush.bf16.msra.mxu0 %v1930
        %1950 = vmatpush.bf16.msra.mxu0 %v1929
        %1951 = vmatpush.bf16.msra.mxu0 %v1928
        %1952 = vmatmul.bf16.gmra.mxu0 %v1713
        %v1953 = vpop.f32.mrf.mxu0
        %v1954 = vadd.f32 %v1894, %v1953
        %v1955 = vpop.f32.mrf.mxu0
        %1956 = vdwg.mxu0
        %v1957 = vpack.c.bf16 %v1792, %v1792
        %v1958 = vpack.c.bf16 %v1873, %v1873
        %v1959 = vpack.c.bf16 %v1954, %v1954
        %vm1960 = vcmask 261120
        %v1962 = vsel %vm1960, %v1957, 0
        %v1965 = vsel %vm1960, %v1958, 0
        %1967 = vmatpush.bf16.xpose.msra.mxu0 0
        %1968 = vmatpush.bf16.xpose.msra.mxu0 0
        %1969 = vmatpush.bf16.xpose.msra.mxu0 0
        %1970 = vmatpush.bf16.xpose.msra.mxu0 0
        %1971 = vmatpush.bf16.xpose.msra.mxu0 0
        %1972 = vmatpush.bf16.xpose.msra.mxu0 0
        %1973 = vmatpush.bf16.xpose.msra.mxu0 0
        %1974 = vmatpush.bf16.xpose.msra.mxu0 %v1965
        %1975 = vmatmul.bf16.gmra.mxu0 %v1962
        %v1976 = vpop.f32.mrf.mxu0
        %v1977 = vadd.f32 0.0, %v1976
        %v1978 = vpop.f32.mrf.mxu0
        %1979 = vdwg.mxu0
        %vm1980 = vcmask 36864
        %v1981 = vsel %vm1980, %v1977, -inf
        %1982 = vmax.xlane.f32.xlu0 %v1981
        %v1983 = vpop.xlane.xlu0 %1982
        %v1984 = vsub.f32 %v1977, %v1983
        %v1985 = vmul.f32 %v1984, 1.442695
        %v1986 = vpow.pop %v1985
        %v1987 = vsel %vm1980, %v1986, 0.0
        %1988 = vadd.xlane.f32.xlu0 %v1987
        %v1989 = vpop.xlane.xlu0 %1988
        %v1990 = vrcp.pop %v1989
        %v1991 = vmul.f32 %v1986, %v1990
        %v1992 = vpack.c.bf16 %v1991, %v1991
        %vm1993 = vcmask 39936
        %v1995 = vsel %vm1993, %v1992, 0
        %vm1997 = vcmask 1041408
        %vm1998 = vcmask 1042432
        %v1999 = vsel %vm1997, 4294967295, 65535
        %v2000 = vsel %vm1998, %v1999, 0
        %v2002 = vand.u32 %v1959, %v2000
        %2004 = vmatpush.bf16.msra.mxu0 0
        %2005 = vmatpush.bf16.msra.mxu0 0
        %2006 = vmatpush.bf16.msra.mxu0 0
        %2007 = vmatpush.bf16.msra.mxu0 0
        %2008 = vmatpush.bf16.msra.mxu0 0
        %2009 = vmatpush.bf16.msra.mxu0 0
        %2010 = vmatpush.bf16.msra.mxu0 0
        %2011 = vmatpush.bf16.msra.mxu0 %v2002
        %2012 = vmatmul.bf16.gmra.mxu0 %v1995
        %v2013 = vpop.f32.mrf.mxu0
        %v2014 = vadd.f32 0.0, %v2013
        %v2015 = vpop.f32.mrf.mxu0
        %2016 = vdwg.mxu0
        %v2017 = vpack.c.bf16 %v2014, %v2014
        %v2018 = vld [vmem:[%s1110] sm:$0xf]
        %v2019 = vld [vmem:[%s1110 + $0x4] sm:$0xf]
        %v2020 = vld [vmem:[%s1110 + $0x8] sm:$0xf]
        %v2021 = vld [vmem:[%s1110 + $0xc] sm:$0xf]
        %s2022 = scalar_lea.vmem %s1083, 64
        %v2023 = vld [vmem:[%s2022] sm:$0xf]
        %v2024 = vld [vmem:[%s2022 + $0x4] sm:$0xf]
        %v2025 = vld [vmem:[%s2022 + $0x8] sm:$0xf]
        %v2026 = vld [vmem:[%s2022 + $0xc] sm:$0xf]
        %v2027 = vld [vmem:[%s2022 + $0x10] sm:$0xf]
        %v2028 = vld [vmem:[%s2022 + $0x14] sm:$0xf]
        %v2029 = vld [vmem:[%s2022 + $0x18] sm:$0xf]
        %v2030 = vld [vmem:[%s2022 + $0x1c] sm:$0xf]
        %v2031 = vld [vmem:[%s2022 + $0x20] sm:$0xf]
        %v2032 = vld [vmem:[%s2022 + $0x24] sm:$0xf]
        %v2033 = vld [vmem:[%s2022 + $0x28] sm:$0xf]
        %v2034 = vld [vmem:[%s2022 + $0x2c] sm:$0xf]
        %v2035 = vld [vmem:[%s2022 + $0x30] sm:$0xf]
        %v2036 = vld [vmem:[%s2022 + $0x34] sm:$0xf]
        %v2037 = vld [vmem:[%s2022 + $0x38] sm:$0xf]
        %v2038 = vld [vmem:[%s2022 + $0x3c] sm:$0xf]
        %s2039 = scalar_lea.vmem %s1087, 1
        %v2040 = vld [vmem:[%s2039] sm:$0x1]
        %v2042 = vperm.slane %v2040, 0
        %v2060 = vunpack.c.l.b16 %v2023
        %v2061 = vunpack.c.l.b16 %v2024
        %v2062 = vunpack.c.l.b16 %v2025
        %v2063 = vunpack.c.l.b16 %v2026
        %v2064 = vunpack.c.l.b16 %v2027
        %v2065 = vunpack.c.l.b16 %v2028
        %v2066 = vunpack.c.l.b16 %v2029
        %v2067 = vunpack.c.l.b16 %v2030
        %v2068 = vunpack.c.l.b16 %v2031
        %v2069 = vunpack.c.l.b16 %v2032
        %v2070 = vunpack.c.l.b16 %v2033
        %v2071 = vunpack.c.l.b16 %v2034
        %v2072 = vunpack.c.l.b16 %v2035
        %v2073 = vunpack.c.l.b16 %v2036
        %v2074 = vunpack.c.l.b16 %v2037
        %v2075 = vunpack.c.l.b16 %v2038
        %v2076 = vpack.c.b16 %v2061, %v2060
        %v2077 = vpack.c.b16 %v2063, %v2062
        %v2078 = vpack.c.b16 %v2065, %v2064
        %v2079 = vpack.c.b16 %v2067, %v2066
        %v2080 = vpack.c.b16 %v2069, %v2068
        %v2081 = vpack.c.b16 %v2071, %v2070
        %v2082 = vpack.c.b16 %v2073, %v2072
        %v2083 = vpack.c.b16 %v2075, %v2074
        %2092 = vmatpush.bf16.msra.mxu0 %v2083
        %2093 = vmatpush.bf16.msra.mxu0 %v2082
        %2094 = vmatpush.bf16.msra.mxu0 %v2081
        %2095 = vmatpush.bf16.msra.mxu0 %v2080
        %2096 = vmatpush.bf16.msra.mxu0 %v2079
        %2097 = vmatpush.bf16.msra.mxu0 %v2078
        %2098 = vmatpush.bf16.msra.mxu0 %v2077
        %2099 = vmatpush.bf16.msra.mxu0 %v2076
        %2100 = vmatmul.bf16.gmra.mxu0 %v1713
        %v2101 = vpop.f32.mrf.mxu0
        %v2102 = vadd.f32 %v2042, %v2101
        %v2103 = vpop.f32.mrf.mxu0
        %2104 = vdwg.mxu0
        %s2105 = scalar_lea.vmem %s1092, 64
        %v2106 = vld [vmem:[%s2105] sm:$0xf]
        %v2107 = vld [vmem:[%s2105 + $0x4] sm:$0xf]
        %v2108 = vld [vmem:[%s2105 + $0x8] sm:$0xf]
        %v2109 = vld [vmem:[%s2105 + $0xc] sm:$0xf]
        %v2110 = vld [vmem:[%s2105 + $0x10] sm:$0xf]
        %v2111 = vld [vmem:[%s2105 + $0x14] sm:$0xf]
        %v2112 = vld [vmem:[%s2105 + $0x18] sm:$0xf]
        %v2113 = vld [vmem:[%s2105 + $0x1c] sm:$0xf]
        %v2114 = vld [vmem:[%s2105 + $0x20] sm:$0xf]
        %v2115 = vld [vmem:[%s2105 + $0x24] sm:$0xf]
        %v2116 = vld [vmem:[%s2105 + $0x28] sm:$0xf]
        %v2117 = vld [vmem:[%s2105 + $0x2c] sm:$0xf]
        %v2118 = vld [vmem:[%s2105 + $0x30] sm:$0xf]
        %v2119 = vld [vmem:[%s2105 + $0x34] sm:$0xf]
        %v2120 = vld [vmem:[%s2105 + $0x38] sm:$0xf]
        %v2121 = vld [vmem:[%s2105 + $0x3c] sm:$0xf]
        %s2122 = scalar_lea.vmem %s1096, 1
        %v2123 = vld [vmem:[%s2122] sm:$0x1]
        %v2125 = vperm.slane %v2123, 0
        %v2143 = vunpack.c.l.b16 %v2106
        %v2144 = vunpack.c.l.b16 %v2107
        %v2145 = vunpack.c.l.b16 %v2108
        %v2146 = vunpack.c.l.b16 %v2109
        %v2147 = vunpack.c.l.b16 %v2110
        %v2148 = vunpack.c.l.b16 %v2111
        %v2149 = vunpack.c.l.b16 %v2112
        %v2150 = vunpack.c.l.b16 %v2113
        %v2151 = vunpack.c.l.b16 %v2114
        %v2152 = vunpack.c.l.b16 %v2115
        %v2153 = vunpack.c.l.b16 %v2116
        %v2154 = vunpack.c.l.b16 %v2117
        %v2155 = vunpack.c.l.b16 %v2118
        %v2156 = vunpack.c.l.b16 %v2119
        %v2157 = vunpack.c.l.b16 %v2120
        %v2158 = vunpack.c.l.b16 %v2121
        %v2159 = vpack.c.b16 %v2144, %v2143
        %v2160 = vpack.c.b16 %v2146, %v2145
        %v2161 = vpack.c.b16 %v2148, %v2147
        %v2162 = vpack.c.b16 %v2150, %v2149
        %v2163 = vpack.c.b16 %v2152, %v2151
        %v2164 = vpack.c.b16 %v2154, %v2153
        %v2165 = vpack.c.b16 %v2156, %v2155
        %v2166 = vpack.c.b16 %v2158, %v2157
        %2175 = vmatpush.bf16.msra.mxu0 %v2166
        %2176 = vmatpush.bf16.msra.mxu0 %v2165
        %2177 = vmatpush.bf16.msra.mxu0 %v2164
        %2178 = vmatpush.bf16.msra.mxu0 %v2163
        %2179 = vmatpush.bf16.msra.mxu0 %v2162
        %2180 = vmatpush.bf16.msra.mxu0 %v2161
        %2181 = vmatpush.bf16.msra.mxu0 %v2160
        %2182 = vmatpush.bf16.msra.mxu0 %v2159
        %2183 = vmatmul.bf16.gmra.mxu0 %v1713
        %v2184 = vpop.f32.mrf.mxu0
        %v2185 = vadd.f32 %v2125, %v2184
        %v2186 = vpop.f32.mrf.mxu0
        %2187 = vdwg.mxu0
        %s2188 = scalar_lea.vmem %s1101, 64
        %v2189 = vld [vmem:[%s2188] sm:$0xf]
        %v2190 = vld [vmem:[%s2188 + $0x4] sm:$0xf]
        %v2191 = vld [vmem:[%s2188 + $0x8] sm:$0xf]
        %v2192 = vld [vmem:[%s2188 + $0xc] sm:$0xf]
        %v2193 = vld [vmem:[%s2188 + $0x10] sm:$0xf]
        %v2194 = vld [vmem:[%s2188 + $0x14] sm:$0xf]
        %v2195 = vld [vmem:[%s2188 + $0x18] sm:$0xf]
        %v2196 = vld [vmem:[%s2188 + $0x1c] sm:$0xf]
        %v2197 = vld [vmem:[%s2188 + $0x20] sm:$0xf]
        %v2198 = vld [vmem:[%s2188 + $0x24] sm:$0xf]
        %v2199 = vld [vmem:[%s2188 + $0x28] sm:$0xf]
        %v2200 = vld [vmem:[%s2188 + $0x2c] sm:$0xf]
        %v2201 = vld [vmem:[%s2188 + $0x30] sm:$0xf]
        %v2202 = vld [vmem:[%s2188 + $0x34] sm:$0xf]
        %v2203 = vld [vmem:[%s2188 + $0x38] sm:$0xf]
        %v2204 = vld [vmem:[%s2188 + $0x3c] sm:$0xf]
        %s2205 = scalar_lea.vmem %s1105, 1
        %v2206 = vld [vmem:[%s2205] sm:$0x1]
        %v2208 = vperm.slane %v2206, 0
        %v2226 = vunpack.c.l.b16 %v2189
        %v2227 = vunpack.c.l.b16 %v2190
        %v2228 = vunpack.c.l.b16 %v2191
        %v2229 = vunpack.c.l.b16 %v2192
        %v2230 = vunpack.c.l.b16 %v2193
        %v2231 = vunpack.c.l.b16 %v2194
        %v2232 = vunpack.c.l.b16 %v2195
        %v2233 = vunpack.c.l.b16 %v2196
        %v2234 = vunpack.c.l.b16 %v2197
        %v2235 = vunpack.c.l.b16 %v2198
        %v2236 = vunpack.c.l.b16 %v2199
        %v2237 = vunpack.c.l.b16 %v2200
        %v2238 = vunpack.c.l.b16 %v2201
        %v2239 = vunpack.c.l.b16 %v2202
        %v2240 = vunpack.c.l.b16 %v2203
        %v2241 = vunpack.c.l.b16 %v2204
        %v2242 = vpack.c.b16 %v2227, %v2226
        %v2243 = vpack.c.b16 %v2229, %v2228
        %v2244 = vpack.c.b16 %v2231, %v2230
        %v2245 = vpack.c.b16 %v2233, %v2232
        %v2246 = vpack.c.b16 %v2235, %v2234
        %v2247 = vpack.c.b16 %v2237, %v2236
        %v2248 = vpack.c.b16 %v2239, %v2238
        %v2249 = vpack.c.b16 %v2241, %v2240
        %2258 = vmatpush.bf16.msra.mxu0 %v2249
        %2259 = vmatpush.bf16.msra.mxu0 %v2248
        %2260 = vmatpush.bf16.msra.mxu0 %v2247
        %2261 = vmatpush.bf16.msra.mxu0 %v2246
        %2262 = vmatpush.bf16.msra.mxu0 %v2245
        %2263 = vmatpush.bf16.msra.mxu0 %v2244
        %2264 = vmatpush.bf16.msra.mxu0 %v2243
        %2265 = vmatpush.bf16.msra.mxu0 %v2242
        %2266 = vmatmul.bf16.gmra.mxu0 %v1713
        %v2267 = vpop.f32.mrf.mxu0
        %v2268 = vadd.f32 %v2208, %v2267
        %v2269 = vpop.f32.mrf.mxu0
        %2270 = vdwg.mxu0
        %v2271 = vpack.c.bf16 %v2102, %v2102
        %v2272 = vpack.c.bf16 %v2185, %v2185
        %v2273 = vpack.c.bf16 %v2268, %v2268
        %v2275 = vsel %vm1960, %v2271, 0
        %v2278 = vsel %vm1960, %v2272, 0
        %2280 = vmatpush.bf16.xpose.msra.mxu0 0
        %2281 = vmatpush.bf16.xpose.msra.mxu0 0
        %2282 = vmatpush.bf16.xpose.msra.mxu0 0
        %2283 = vmatpush.bf16.xpose.msra.mxu0 0
        %2284 = vmatpush.bf16.xpose.msra.mxu0 0
        %2285 = vmatpush.bf16.xpose.msra.mxu0 0
        %2286 = vmatpush.bf16.xpose.msra.mxu0 0
        %2287 = vmatpush.bf16.xpose.msra.mxu0 %v2278
        %2288 = vmatmul.bf16.gmra.mxu0 %v2275
        %v2289 = vpop.f32.mrf.mxu0
        %v2290 = vadd.f32 0.0, %v2289
        %v2291 = vpop.f32.mrf.mxu0
        %2292 = vdwg.mxu0
        %v2293 = vsel %vm1980, %v2290, -inf
        %2294 = vmax.xlane.f32.xlu0 %v2293
        %v2295 = vpop.xlane.xlu0 %2294
        %v2296 = vsub.f32 %v2290, %v2295
        %v2297 = vmul.f32 %v2296, 1.442695
        %v2298 = vpow.pop %v2297
        %v2299 = vsel %vm1980, %v2298, 0.0
        %2300 = vadd.xlane.f32.xlu0 %v2299
        %v2301 = vpop.xlane.xlu0 %2300
        %v2302 = vrcp.pop %v2301
        %v2303 = vmul.f32 %v2298, %v2302
        %v2304 = vpack.c.bf16 %v2303, %v2303
        %v2306 = vsel %vm1993, %v2304, 0
        %v2309 = vand.u32 %v2273, %v2000
        %2311 = vmatpush.bf16.msra.mxu0 0
        %2312 = vmatpush.bf16.msra.mxu0 0
        %2313 = vmatpush.bf16.msra.mxu0 0
        %2314 = vmatpush.bf16.msra.mxu0 0
        %2315 = vmatpush.bf16.msra.mxu0 0
        %2316 = vmatpush.bf16.msra.mxu0 0
        %2317 = vmatpush.bf16.msra.mxu0 0
        %2318 = vmatpush.bf16.msra.mxu0 %v2309
        %2319 = vmatmul.bf16.gmra.mxu0 %v2306
        %v2320 = vpop.f32.mrf.mxu0
        %v2321 = vadd.f32 0.0, %v2320
        %v2322 = vpop.f32.mrf.mxu0
        %2323 = vdwg.mxu0
        %v2324 = vpack.c.bf16 %v2321, %v2321
        %s2325 = scalar_lea.vmem %s1110, 16
        %v2326 = vld [vmem:[%s2325] sm:$0xf]
        %v2327 = vld [vmem:[%s2325 + $0x4] sm:$0xf]
        %v2328 = vld [vmem:[%s2325 + $0x8] sm:$0xf]
        %v2329 = vld [vmem:[%s2325 + $0xc] sm:$0xf]
        %v2334 = vunpack.c.l.b16 %v2326
        %v2335 = vunpack.c.l.b16 %v2327
        %v2336 = vunpack.c.l.b16 %v2328
        %v2337 = vunpack.c.l.b16 %v2329
        %v2338 = vpack.c.b16 %v2335, %v2334
        %v2339 = vpack.c.b16 %v2337, %v2336
        %v2343 = vsel %vm1960, %v2324, 0
        %2345 = vmatpush.bf16.msra.mxu0 0
        %2346 = vmatpush.bf16.msra.mxu0 0
        %2347 = vmatpush.bf16.msra.mxu0 0
        %2348 = vmatpush.bf16.msra.mxu0 0
        %2349 = vmatpush.bf16.msra.mxu0 0
        %2350 = vmatpush.bf16.msra.mxu0 0
        %2351 = vmatpush.bf16.msra.mxu0 %v2339
        %2352 = vmatpush.bf16.msra.mxu0 %v2338
        %2353 = vmatmul.bf16.gmra.mxu0 %v2343
        %v2354 = vpop.f32.mrf.mxu0
        %v2355 = vadd.f32 0.0, %v2354
        %v2356 = vpop.f32.mrf.mxu0
        %2357 = vdwg.mxu0
        %v2362 = vunpack.c.l.b16 %v2018
        %v2363 = vunpack.c.l.b16 %v2019
        %v2364 = vunpack.c.l.b16 %v2020
        %v2365 = vunpack.c.l.b16 %v2021
        %v2366 = vpack.c.b16 %v2363, %v2362
        %v2367 = vpack.c.b16 %v2365, %v2364
        %v2371 = vsel %vm1960, %v2017, 0
        %2373 = vmatpush.bf16.msra.mxu0 0
        %2374 = vmatpush.bf16.msra.mxu0 0
        %2375 = vmatpush.bf16.msra.mxu0 0
        %2376 = vmatpush.bf16.msra.mxu0 0
        %2377 = vmatpush.bf16.msra.mxu0 0
        %2378 = vmatpush.bf16.msra.mxu0 0
        %2379 = vmatpush.bf16.msra.mxu0 %v2367
        %2380 = vmatpush.bf16.msra.mxu0 %v2366
        %2381 = vmatmul.bf16.gmra.mxu0 %v2371
        %v2382 = vpop.f32.mrf.mxu0
        %v2383 = vadd.f32 %v2355, %v2382
        %v2384 = vpop.f32.mrf.mxu0
        %2385 = vdwg.mxu0
        %s2386 = scalar_lea.vmem %s1083, 128
        %v2387 = vld [vmem:[%s2386] sm:$0xf]
        %v2388 = vld [vmem:[%s2386 + $0x4] sm:$0xf]
        %v2389 = vld [vmem:[%s2386 + $0x8] sm:$0xf]
        %v2390 = vld [vmem:[%s2386 + $0xc] sm:$0xf]
        %v2391 = vld [vmem:[%s2386 + $0x10] sm:$0xf]
        %v2392 = vld [vmem:[%s2386 + $0x14] sm:$0xf]
        %v2393 = vld [vmem:[%s2386 + $0x18] sm:$0xf]
        %v2394 = vld [vmem:[%s2386 + $0x1c] sm:$0xf]
        %v2395 = vld [vmem:[%s2386 + $0x20] sm:$0xf]
        %v2396 = vld [vmem:[%s2386 + $0x24] sm:$0xf]
        %v2397 = vld [vmem:[%s2386 + $0x28] sm:$0xf]
        %v2398 = vld [vmem:[%s2386 + $0x2c] sm:$0xf]
        %v2399 = vld [vmem:[%s2386 + $0x30] sm:$0xf]
        %v2400 = vld [vmem:[%s2386 + $0x34] sm:$0xf]
        %v2401 = vld [vmem:[%s2386 + $0x38] sm:$0xf]
        %v2402 = vld [vmem:[%s2386 + $0x3c] sm:$0xf]
        %s2403 = scalar_lea.vmem %s1087, 2
        %v2404 = vld [vmem:[%s2403] sm:$0x1]
        %v2406 = vperm.slane %v2404, 0
        %v2424 = vunpack.c.l.b16 %v2387
        %v2425 = vunpack.c.l.b16 %v2388
        %v2426 = vunpack.c.l.b16 %v2389
        %v2427 = vunpack.c.l.b16 %v2390
        %v2428 = vunpack.c.l.b16 %v2391
        %v2429 = vunpack.c.l.b16 %v2392
        %v2430 = vunpack.c.l.b16 %v2393
        %v2431 = vunpack.c.l.b16 %v2394
        %v2432 = vunpack.c.l.b16 %v2395
        %v2433 = vunpack.c.l.b16 %v2396
        %v2434 = vunpack.c.l.b16 %v2397
        %v2435 = vunpack.c.l.b16 %v2398
        %v2436 = vunpack.c.l.b16 %v2399
        %v2437 = vunpack.c.l.b16 %v2400
        %v2438 = vunpack.c.l.b16 %v2401
        %v2439 = vunpack.c.l.b16 %v2402
        %v2440 = vpack.c.b16 %v2425, %v2424
        %v2441 = vpack.c.b16 %v2427, %v2426
        %v2442 = vpack.c.b16 %v2429, %v2428
        %v2443 = vpack.c.b16 %v2431, %v2430
        %v2444 = vpack.c.b16 %v2433, %v2432
        %v2445 = vpack.c.b16 %v2435, %v2434
        %v2446 = vpack.c.b16 %v2437, %v2436
        %v2447 = vpack.c.b16 %v2439, %v2438
        %2456 = vmatpush.bf16.msra.mxu0 %v2447
        %2457 = vmatpush.bf16.msra.mxu0 %v2446
        %2458 = vmatpush.bf16.msra.mxu0 %v2445
        %2459 = vmatpush.bf16.msra.mxu0 %v2444
        %2460 = vmatpush.bf16.msra.mxu0 %v2443
        %2461 = vmatpush.bf16.msra.mxu0 %v2442
        %2462 = vmatpush.bf16.msra.mxu0 %v2441
        %2463 = vmatpush.bf16.msra.mxu0 %v2440
        %2464 = vmatmul.bf16.gmra.mxu0 %v1713
        %v2465 = vpop.f32.mrf.mxu0
        %v2466 = vadd.f32 %v2406, %v2465
        %v2467 = vpop.f32.mrf.mxu0
        %2468 = vdwg.mxu0
        %s2469 = scalar_lea.vmem %s1092, 128
        %v2470 = vld [vmem:[%s2469] sm:$0xf]
        %v2471 = vld [vmem:[%s2469 + $0x4] sm:$0xf]
        %v2472 = vld [vmem:[%s2469 + $0x8] sm:$0xf]
        %v2473 = vld [vmem:[%s2469 + $0xc] sm:$0xf]
        %v2474 = vld [vmem:[%s2469 + $0x10] sm:$0xf]
        %v2475 = vld [vmem:[%s2469 + $0x14] sm:$0xf]
        %v2476 = vld [vmem:[%s2469 + $0x18] sm:$0xf]
        %v2477 = vld [vmem:[%s2469 + $0x1c] sm:$0xf]
        %v2478 = vld [vmem:[%s2469 + $0x20] sm:$0xf]
        %v2479 = vld [vmem:[%s2469 + $0x24] sm:$0xf]
        %v2480 = vld [vmem:[%s2469 + $0x28] sm:$0xf]
        %v2481 = vld [vmem:[%s2469 + $0x2c] sm:$0xf]
        %v2482 = vld [vmem:[%s2469 + $0x30] sm:$0xf]
        %v2483 = vld [vmem:[%s2469 + $0x34] sm:$0xf]
        %v2484 = vld [vmem:[%s2469 + $0x38] sm:$0xf]
        %v2485 = vld [vmem:[%s2469 + $0x3c] sm:$0xf]
        %s2486 = scalar_lea.vmem %s1096, 2
        %v2487 = vld [vmem:[%s2486] sm:$0x1]
        %v2489 = vperm.slane %v2487, 0
        %v2507 = vunpack.c.l.b16 %v2470
        %v2508 = vunpack.c.l.b16 %v2471
        %v2509 = vunpack.c.l.b16 %v2472
        %v2510 = vunpack.c.l.b16 %v2473
        %v2511 = vunpack.c.l.b16 %v2474
        %v2512 = vunpack.c.l.b16 %v2475
        %v2513 = vunpack.c.l.b16 %v2476
        %v2514 = vunpack.c.l.b16 %v2477
        %v2515 = vunpack.c.l.b16 %v2478
        %v2516 = vunpack.c.l.b16 %v2479
        %v2517 = vunpack.c.l.b16 %v2480
        %v2518 = vunpack.c.l.b16 %v2481
        %v2519 = vunpack.c.l.b16 %v2482
        %v2520 = vunpack.c.l.b16 %v2483
        %v2521 = vunpack.c.l.b16 %v2484
        %v2522 = vunpack.c.l.b16 %v2485
        %v2523 = vpack.c.b16 %v2508, %v2507
        %v2524 = vpack.c.b16 %v2510, %v2509
        %v2525 = vpack.c.b16 %v2512, %v2511
        %v2526 = vpack.c.b16 %v2514, %v2513
        %v2527 = vpack.c.b16 %v2516, %v2515
        %v2528 = vpack.c.b16 %v2518, %v2517
        %v2529 = vpack.c.b16 %v2520, %v2519
        %v2530 = vpack.c.b16 %v2522, %v2521
        %2539 = vmatpush.bf16.msra.mxu0 %v2530
        %2540 = vmatpush.bf16.msra.mxu0 %v2529
        %2541 = vmatpush.bf16.msra.mxu0 %v2528
        %2542 = vmatpush.bf16.msra.mxu0 %v2527
        %2543 = vmatpush.bf16.msra.mxu0 %v2526
        %2544 = vmatpush.bf16.msra.mxu0 %v2525
        %2545 = vmatpush.bf16.msra.mxu0 %v2524
        %2546 = vmatpush.bf16.msra.mxu0 %v2523
        %2547 = vmatmul.bf16.gmra.mxu0 %v1713
        %v2548 = vpop.f32.mrf.mxu0
        %v2549 = vadd.f32 %v2489, %v2548
        %v2550 = vpop.f32.mrf.mxu0
        %2551 = vdwg.mxu0
        %s2552 = scalar_lea.vmem %s1101, 128
        %v2553 = vld [vmem:[%s2552] sm:$0xf]
        %v2554 = vld [vmem:[%s2552 + $0x4] sm:$0xf]
        %v2555 = vld [vmem:[%s2552 + $0x8] sm:$0xf]
        %v2556 = vld [vmem:[%s2552 + $0xc] sm:$0xf]
        %v2557 = vld [vmem:[%s2552 + $0x10] sm:$0xf]
        %v2558 = vld [vmem:[%s2552 + $0x14] sm:$0xf]
        %v2559 = vld [vmem:[%s2552 + $0x18] sm:$0xf]
        %v2560 = vld [vmem:[%s2552 + $0x1c] sm:$0xf]
        %v2561 = vld [vmem:[%s2552 + $0x20] sm:$0xf]
        %v2562 = vld [vmem:[%s2552 + $0x24] sm:$0xf]
        %v2563 = vld [vmem:[%s2552 + $0x28] sm:$0xf]
        %v2564 = vld [vmem:[%s2552 + $0x2c] sm:$0xf]
        %v2565 = vld [vmem:[%s2552 + $0x30] sm:$0xf]
        %v2566 = vld [vmem:[%s2552 + $0x34] sm:$0xf]
        %v2567 = vld [vmem:[%s2552 + $0x38] sm:$0xf]
        %v2568 = vld [vmem:[%s2552 + $0x3c] sm:$0xf]
        %s2569 = scalar_lea.vmem %s1105, 2
        %v2570 = vld [vmem:[%s2569] sm:$0x1]
        %v2572 = vperm.slane %v2570, 0
        %v2590 = vunpack.c.l.b16 %v2553
        %v2591 = vunpack.c.l.b16 %v2554
        %v2592 = vunpack.c.l.b16 %v2555
        %v2593 = vunpack.c.l.b16 %v2556
        %v2594 = vunpack.c.l.b16 %v2557
        %v2595 = vunpack.c.l.b16 %v2558
        %v2596 = vunpack.c.l.b16 %v2559
        %v2597 = vunpack.c.l.b16 %v2560
        %v2598 = vunpack.c.l.b16 %v2561
        %v2599 = vunpack.c.l.b16 %v2562
        %v2600 = vunpack.c.l.b16 %v2563
        %v2601 = vunpack.c.l.b16 %v2564
        %v2602 = vunpack.c.l.b16 %v2565
        %v2603 = vunpack.c.l.b16 %v2566
        %v2604 = vunpack.c.l.b16 %v2567
        %v2605 = vunpack.c.l.b16 %v2568
        %v2606 = vpack.c.b16 %v2591, %v2590
        %v2607 = vpack.c.b16 %v2593, %v2592
        %v2608 = vpack.c.b16 %v2595, %v2594
        %v2609 = vpack.c.b16 %v2597, %v2596
        %v2610 = vpack.c.b16 %v2599, %v2598
        %v2611 = vpack.c.b16 %v2601, %v2600
        %v2612 = vpack.c.b16 %v2603, %v2602
        %v2613 = vpack.c.b16 %v2605, %v2604
        %2622 = vmatpush.bf16.msra.mxu0 %v2613
        %2623 = vmatpush.bf16.msra.mxu0 %v2612
        %2624 = vmatpush.bf16.msra.mxu0 %v2611
        %2625 = vmatpush.bf16.msra.mxu0 %v2610
        %2626 = vmatpush.bf16.msra.mxu0 %v2609
        %2627 = vmatpush.bf16.msra.mxu0 %v2608
        %2628 = vmatpush.bf16.msra.mxu0 %v2607
        %2629 = vmatpush.bf16.msra.mxu0 %v2606
        %2630 = vmatmul.bf16.gmra.mxu0 %v1713
        %v2631 = vpop.f32.mrf.mxu0
        %v2632 = vadd.f32 %v2572, %v2631
        %v2633 = vpop.f32.mrf.mxu0
        %2634 = vdwg.mxu0
        %v2635 = vpack.c.bf16 %v2466, %v2466
        %v2636 = vpack.c.bf16 %v2549, %v2549
        %v2637 = vpack.c.bf16 %v2632, %v2632
        %v2639 = vsel %vm1960, %v2635, 0
        %v2642 = vsel %vm1960, %v2636, 0
        %2644 = vmatpush.bf16.xpose.msra.mxu0 0
        %2645 = vmatpush.bf16.xpose.msra.mxu0 0
        %2646 = vmatpush.bf16.xpose.msra.mxu0 0
        %2647 = vmatpush.bf16.xpose.msra.mxu0 0
        %2648 = vmatpush.bf16.xpose.msra.mxu0 0
        %2649 = vmatpush.bf16.xpose.msra.mxu0 0
        %2650 = vmatpush.bf16.xpose.msra.mxu0 0
        %2651 = vmatpush.bf16.xpose.msra.mxu0 %v2642
        %2652 = vmatmul.bf16.gmra.mxu0 %v2639
        %v2653 = vpop.f32.mrf.mxu0
        %v2654 = vadd.f32 0.0, %v2653
        %v2655 = vpop.f32.mrf.mxu0
        %2656 = vdwg.mxu0
        %v2657 = vsel %vm1980, %v2654, -inf
        %2658 = vmax.xlane.f32.xlu0 %v2657
        %v2659 = vpop.xlane.xlu0 %2658
        %v2660 = vsub.f32 %v2654, %v2659
        %v2661 = vmul.f32 %v2660, 1.442695
        %v2662 = vpow.pop %v2661
        %v2663 = vsel %vm1980, %v2662, 0.0
        %2664 = vadd.xlane.f32.xlu0 %v2663
        %v2665 = vpop.xlane.xlu0 %2664
        %v2666 = vrcp.pop %v2665
        %v2667 = vmul.f32 %v2662, %v2666
        %v2668 = vpack.c.bf16 %v2667, %v2667
        %v2670 = vsel %vm1993, %v2668, 0
        %v2673 = vand.u32 %v2637, %v2000
        %2675 = vmatpush.bf16.msra.mxu0 0
        %2676 = vmatpush.bf16.msra.mxu0 0
        %2677 = vmatpush.bf16.msra.mxu0 0
        %2678 = vmatpush.bf16.msra.mxu0 0
        %2679 = vmatpush.bf16.msra.mxu0 0
        %2680 = vmatpush.bf16.msra.mxu0 0
        %2681 = vmatpush.bf16.msra.mxu0 0
        %2682 = vmatpush.bf16.msra.mxu0 %v2673
        %2683 = vmatmul.bf16.gmra.mxu0 %v2670
        %v2684 = vpop.f32.mrf.mxu0
        %v2685 = vadd.f32 0.0, %v2684
        %v2686 = vpop.f32.mrf.mxu0
        %2687 = vdwg.mxu0
        %v2688 = vpack.c.bf16 %v2685, %v2685
        %s2689 = scalar_lea.vmem %s1110, 32
        %v2690 = vld [vmem:[%s2689] sm:$0xf]
        %v2691 = vld [vmem:[%s2689 + $0x4] sm:$0xf]
        %v2692 = vld [vmem:[%s2689 + $0x8] sm:$0xf]
        %v2693 = vld [vmem:[%s2689 + $0xc] sm:$0xf]
        %v2698 = vunpack.c.l.b16 %v2690
        %v2699 = vunpack.c.l.b16 %v2691
        %v2700 = vunpack.c.l.b16 %v2692
        %v2701 = vunpack.c.l.b16 %v2693
        %v2702 = vpack.c.b16 %v2699, %v2698
        %v2703 = vpack.c.b16 %v2701, %v2700
        %v2707 = vsel %vm1960, %v2688, 0
        %2709 = vmatpush.bf16.msra.mxu0 0
        %2710 = vmatpush.bf16.msra.mxu0 0
        %2711 = vmatpush.bf16.msra.mxu0 0
        %2712 = vmatpush.bf16.msra.mxu0 0
        %2713 = vmatpush.bf16.msra.mxu0 0
        %2714 = vmatpush.bf16.msra.mxu0 0
        %2715 = vmatpush.bf16.msra.mxu0 %v2703
        %2716 = vmatpush.bf16.msra.mxu0 %v2702
        %2717 = vmatmul.bf16.gmra.mxu0 %v2707
        %v2718 = vpop.f32.mrf.mxu0
        %v2719 = vadd.f32 0.0, %v2718
        %v2720 = vpop.f32.mrf.mxu0
        %2721 = vdwg.mxu0
        %v2722 = vadd.f32 %v2383, %v2719
        %s2723 = scalar_lea.vmem %s1083, 192
        %v2724 = vld [vmem:[%s2723] sm:$0xf]
        %v2725 = vld [vmem:[%s2723 + $0x4] sm:$0xf]
        %v2726 = vld [vmem:[%s2723 + $0x8] sm:$0xf]
        %v2727 = vld [vmem:[%s2723 + $0xc] sm:$0xf]
        %v2728 = vld [vmem:[%s2723 + $0x10] sm:$0xf]
        %v2729 = vld [vmem:[%s2723 + $0x14] sm:$0xf]
        %v2730 = vld [vmem:[%s2723 + $0x18] sm:$0xf]
        %v2731 = vld [vmem:[%s2723 + $0x1c] sm:$0xf]
        %v2732 = vld [vmem:[%s2723 + $0x20] sm:$0xf]
        %v2733 = vld [vmem:[%s2723 + $0x24] sm:$0xf]
        %v2734 = vld [vmem:[%s2723 + $0x28] sm:$0xf]
        %v2735 = vld [vmem:[%s2723 + $0x2c] sm:$0xf]
        %v2736 = vld [vmem:[%s2723 + $0x30] sm:$0xf]
        %v2737 = vld [vmem:[%s2723 + $0x34] sm:$0xf]
        %v2738 = vld [vmem:[%s2723 + $0x38] sm:$0xf]
        %v2739 = vld [vmem:[%s2723 + $0x3c] sm:$0xf]
        %s2740 = scalar_lea.vmem %s1087, 3
        %v2741 = vld [vmem:[%s2740] sm:$0x1]
        %v2743 = vperm.slane %v2741, 0
        %v2761 = vunpack.c.l.b16 %v2724
        %v2762 = vunpack.c.l.b16 %v2725
        %v2763 = vunpack.c.l.b16 %v2726
        %v2764 = vunpack.c.l.b16 %v2727
        %v2765 = vunpack.c.l.b16 %v2728
        %v2766 = vunpack.c.l.b16 %v2729
        %v2767 = vunpack.c.l.b16 %v2730
        %v2768 = vunpack.c.l.b16 %v2731
        %v2769 = vunpack.c.l.b16 %v2732
        %v2770 = vunpack.c.l.b16 %v2733
        %v2771 = vunpack.c.l.b16 %v2734
        %v2772 = vunpack.c.l.b16 %v2735
        %v2773 = vunpack.c.l.b16 %v2736
        %v2774 = vunpack.c.l.b16 %v2737
        %v2775 = vunpack.c.l.b16 %v2738
        %v2776 = vunpack.c.l.b16 %v2739
        %v2777 = vpack.c.b16 %v2762, %v2761
        %v2778 = vpack.c.b16 %v2764, %v2763
        %v2779 = vpack.c.b16 %v2766, %v2765
        %v2780 = vpack.c.b16 %v2768, %v2767
        %v2781 = vpack.c.b16 %v2770, %v2769
        %v2782 = vpack.c.b16 %v2772, %v2771
        %v2783 = vpack.c.b16 %v2774, %v2773
        %v2784 = vpack.c.b16 %v2776, %v2775
        %2793 = vmatpush.bf16.msra.mxu0 %v2784
        %2794 = vmatpush.bf16.msra.mxu0 %v2783
        %2795 = vmatpush.bf16.msra.mxu0 %v2782
        %2796 = vmatpush.bf16.msra.mxu0 %v2781
        %2797 = vmatpush.bf16.msra.mxu0 %v2780
        %2798 = vmatpush.bf16.msra.mxu0 %v2779
        %2799 = vmatpush.bf16.msra.mxu0 %v2778
        %2800 = vmatpush.bf16.msra.mxu0 %v2777
        %2801 = vmatmul.bf16.gmra.mxu0 %v1713
        %v2802 = vpop.f32.mrf.mxu0
        %v2803 = vadd.f32 %v2743, %v2802
        %v2804 = vpop.f32.mrf.mxu0
        %2805 = vdwg.mxu0
        %s2806 = scalar_lea.vmem %s1092, 192
        %v2807 = vld [vmem:[%s2806] sm:$0xf]
        %v2808 = vld [vmem:[%s2806 + $0x4] sm:$0xf]
        %v2809 = vld [vmem:[%s2806 + $0x8] sm:$0xf]
        %v2810 = vld [vmem:[%s2806 + $0xc] sm:$0xf]
        %v2811 = vld [vmem:[%s2806 + $0x10] sm:$0xf]
        %v2812 = vld [vmem:[%s2806 + $0x14] sm:$0xf]
        %v2813 = vld [vmem:[%s2806 + $0x18] sm:$0xf]
        %v2814 = vld [vmem:[%s2806 + $0x1c] sm:$0xf]
        %v2815 = vld [vmem:[%s2806 + $0x20] sm:$0xf]
        %v2816 = vld [vmem:[%s2806 + $0x24] sm:$0xf]
        %v2817 = vld [vmem:[%s2806 + $0x28] sm:$0xf]
        %v2818 = vld [vmem:[%s2806 + $0x2c] sm:$0xf]
        %v2819 = vld [vmem:[%s2806 + $0x30] sm:$0xf]
        %v2820 = vld [vmem:[%s2806 + $0x34] sm:$0xf]
        %v2821 = vld [vmem:[%s2806 + $0x38] sm:$0xf]
        %v2822 = vld [vmem:[%s2806 + $0x3c] sm:$0xf]
        %s2823 = scalar_lea.vmem %s1096, 3
        %v2824 = vld [vmem:[%s2823] sm:$0x1]
        %v2826 = vperm.slane %v2824, 0
        %v2844 = vunpack.c.l.b16 %v2807
        %v2845 = vunpack.c.l.b16 %v2808
        %v2846 = vunpack.c.l.b16 %v2809
        %v2847 = vunpack.c.l.b16 %v2810
        %v2848 = vunpack.c.l.b16 %v2811
        %v2849 = vunpack.c.l.b16 %v2812
        %v2850 = vunpack.c.l.b16 %v2813
        %v2851 = vunpack.c.l.b16 %v2814
        %v2852 = vunpack.c.l.b16 %v2815
        %v2853 = vunpack.c.l.b16 %v2816
        %v2854 = vunpack.c.l.b16 %v2817
        %v2855 = vunpack.c.l.b16 %v2818
        %v2856 = vunpack.c.l.b16 %v2819
        %v2857 = vunpack.c.l.b16 %v2820
        %v2858 = vunpack.c.l.b16 %v2821
        %v2859 = vunpack.c.l.b16 %v2822
        %v2860 = vpack.c.b16 %v2845, %v2844
        %v2861 = vpack.c.b16 %v2847, %v2846
        %v2862 = vpack.c.b16 %v2849, %v2848
        %v2863 = vpack.c.b16 %v2851, %v2850
        %v2864 = vpack.c.b16 %v2853, %v2852
        %v2865 = vpack.c.b16 %v2855, %v2854
        %v2866 = vpack.c.b16 %v2857, %v2856
        %v2867 = vpack.c.b16 %v2859, %v2858
        %2876 = vmatpush.bf16.msra.mxu0 %v2867
        %2877 = vmatpush.bf16.msra.mxu0 %v2866
        %2878 = vmatpush.bf16.msra.mxu0 %v2865
        %2879 = vmatpush.bf16.msra.mxu0 %v2864
        %2880 = vmatpush.bf16.msra.mxu0 %v2863
        %2881 = vmatpush.bf16.msra.mxu0 %v2862
        %2882 = vmatpush.bf16.msra.mxu0 %v2861
        %2883 = vmatpush.bf16.msra.mxu0 %v2860
        %2884 = vmatmul.bf16.gmra.mxu0 %v1713
        %v2885 = vpop.f32.mrf.mxu0
        %v2886 = vadd.f32 %v2826, %v2885
        %v2887 = vpop.f32.mrf.mxu0
        %2888 = vdwg.mxu0
        %s2889 = scalar_lea.vmem %s1101, 192
        %v2890 = vld [vmem:[%s2889] sm:$0xf]
        %v2891 = vld [vmem:[%s2889 + $0x4] sm:$0xf]
        %v2892 = vld [vmem:[%s2889 + $0x8] sm:$0xf]
        %v2893 = vld [vmem:[%s2889 + $0xc] sm:$0xf]
        %v2894 = vld [vmem:[%s2889 + $0x10] sm:$0xf]
        %v2895 = vld [vmem:[%s2889 + $0x14] sm:$0xf]
        %v2896 = vld [vmem:[%s2889 + $0x18] sm:$0xf]
        %v2897 = vld [vmem:[%s2889 + $0x1c] sm:$0xf]
        %v2898 = vld [vmem:[%s2889 + $0x20] sm:$0xf]
        %v2899 = vld [vmem:[%s2889 + $0x24] sm:$0xf]
        %v2900 = vld [vmem:[%s2889 + $0x28] sm:$0xf]
        %v2901 = vld [vmem:[%s2889 + $0x2c] sm:$0xf]
        %v2902 = vld [vmem:[%s2889 + $0x30] sm:$0xf]
        %v2903 = vld [vmem:[%s2889 + $0x34] sm:$0xf]
        %v2904 = vld [vmem:[%s2889 + $0x38] sm:$0xf]
        %v2905 = vld [vmem:[%s2889 + $0x3c] sm:$0xf]
        %s2906 = scalar_lea.vmem %s1105, 3
        %v2907 = vld [vmem:[%s2906] sm:$0x1]
        %v2909 = vperm.slane %v2907, 0
        %v2927 = vunpack.c.l.b16 %v2890
        %v2928 = vunpack.c.l.b16 %v2891
        %v2929 = vunpack.c.l.b16 %v2892
        %v2930 = vunpack.c.l.b16 %v2893
        %v2931 = vunpack.c.l.b16 %v2894
        %v2932 = vunpack.c.l.b16 %v2895
        %v2933 = vunpack.c.l.b16 %v2896
        %v2934 = vunpack.c.l.b16 %v2897
        %v2935 = vunpack.c.l.b16 %v2898
        %v2936 = vunpack.c.l.b16 %v2899
        %v2937 = vunpack.c.l.b16 %v2900
        %v2938 = vunpack.c.l.b16 %v2901
        %v2939 = vunpack.c.l.b16 %v2902
        %v2940 = vunpack.c.l.b16 %v2903
        %v2941 = vunpack.c.l.b16 %v2904
        %v2942 = vunpack.c.l.b16 %v2905
        %v2943 = vpack.c.b16 %v2928, %v2927
        %v2944 = vpack.c.b16 %v2930, %v2929
        %v2945 = vpack.c.b16 %v2932, %v2931
        %v2946 = vpack.c.b16 %v2934, %v2933
        %v2947 = vpack.c.b16 %v2936, %v2935
        %v2948 = vpack.c.b16 %v2938, %v2937
        %v2949 = vpack.c.b16 %v2940, %v2939
        %v2950 = vpack.c.b16 %v2942, %v2941
        %2959 = vmatpush.bf16.msra.mxu0 %v2950
        %2960 = vmatpush.bf16.msra.mxu0 %v2949
        %2961 = vmatpush.bf16.msra.mxu0 %v2948
        %2962 = vmatpush.bf16.msra.mxu0 %v2947
        %2963 = vmatpush.bf16.msra.mxu0 %v2946
        %2964 = vmatpush.bf16.msra.mxu0 %v2945
        %2965 = vmatpush.bf16.msra.mxu0 %v2944
        %2966 = vmatpush.bf16.msra.mxu0 %v2943
        %2967 = vmatmul.bf16.gmra.mxu0 %v1713
        %v2968 = vpop.f32.mrf.mxu0
        %v2969 = vadd.f32 %v2909, %v2968
        %v2970 = vpop.f32.mrf.mxu0
        %2971 = vdwg.mxu0
        %v2972 = vpack.c.bf16 %v2803, %v2803
        %v2973 = vpack.c.bf16 %v2886, %v2886
        %v2974 = vpack.c.bf16 %v2969, %v2969
        %v2976 = vsel %vm1960, %v2972, 0
        %v2979 = vsel %vm1960, %v2973, 0
        %2981 = vmatpush.bf16.xpose.msra.mxu0 0
        %2982 = vmatpush.bf16.xpose.msra.mxu0 0
        %2983 = vmatpush.bf16.xpose.msra.mxu0 0
        %2984 = vmatpush.bf16.xpose.msra.mxu0 0
        %2985 = vmatpush.bf16.xpose.msra.mxu0 0
        %2986 = vmatpush.bf16.xpose.msra.mxu0 0
        %2987 = vmatpush.bf16.xpose.msra.mxu0 0
        %2988 = vmatpush.bf16.xpose.msra.mxu0 %v2979
        %2989 = vmatmul.bf16.gmra.mxu0 %v2976
        %v2990 = vpop.f32.mrf.mxu0
        %v2991 = vadd.f32 0.0, %v2990
        %v2992 = vpop.f32.mrf.mxu0
        %2993 = vdwg.mxu0
        %v2994 = vsel %vm1980, %v2991, -inf
        %2995 = vmax.xlane.f32.xlu0 %v2994
        %v2996 = vpop.xlane.xlu0 %2995
        %v2997 = vsub.f32 %v2991, %v2996
        %v2998 = vmul.f32 %v2997, 1.442695
        %v2999 = vpow.pop %v2998
        %v3000 = vsel %vm1980, %v2999, 0.0
        %3001 = vadd.xlane.f32.xlu0 %v3000
        %v3002 = vpop.xlane.xlu0 %3001
        %v3003 = vrcp.pop %v3002
        %v3004 = vmul.f32 %v2999, %v3003
        %v3005 = vpack.c.bf16 %v3004, %v3004
        %v3007 = vsel %vm1993, %v3005, 0
        %v3010 = vand.u32 %v2974, %v2000
        %3012 = vmatpush.bf16.msra.mxu0 0
        %3013 = vmatpush.bf16.msra.mxu0 0
        %3014 = vmatpush.bf16.msra.mxu0 0
        %3015 = vmatpush.bf16.msra.mxu0 0
        %3016 = vmatpush.bf16.msra.mxu0 0
        %3017 = vmatpush.bf16.msra.mxu0 0
        %3018 = vmatpush.bf16.msra.mxu0 0
        %3019 = vmatpush.bf16.msra.mxu0 %v3010
        %3020 = vmatmul.bf16.gmra.mxu0 %v3007
        %v3021 = vpop.f32.mrf.mxu0
        %v3022 = vadd.f32 0.0, %v3021
        %v3023 = vpop.f32.mrf.mxu0
        %3024 = vdwg.mxu0
        %v3025 = vpack.c.bf16 %v3022, %v3022
        %s3026 = scalar_lea.vmem %s1110, 48
        %v3027 = vld [vmem:[%s3026] sm:$0xf]
        %v3028 = vld [vmem:[%s3026 + $0x4] sm:$0xf]
        %v3029 = vld [vmem:[%s3026 + $0x8] sm:$0xf]
        %v3030 = vld [vmem:[%s3026 + $0xc] sm:$0xf]
        %v3035 = vunpack.c.l.b16 %v3027
        %v3036 = vunpack.c.l.b16 %v3028
        %v3037 = vunpack.c.l.b16 %v3029
        %v3038 = vunpack.c.l.b16 %v3030
        %v3039 = vpack.c.b16 %v3036, %v3035
        %v3040 = vpack.c.b16 %v3038, %v3037
        %v3044 = vsel %vm1960, %v3025, 0
        %3046 = vmatpush.bf16.msra.mxu0 0
        %3047 = vmatpush.bf16.msra.mxu0 0
        %3048 = vmatpush.bf16.msra.mxu0 0
        %3049 = vmatpush.bf16.msra.mxu0 0
        %3050 = vmatpush.bf16.msra.mxu0 0
        %3051 = vmatpush.bf16.msra.mxu0 0
        %3052 = vmatpush.bf16.msra.mxu0 %v3040
        %3053 = vmatpush.bf16.msra.mxu0 %v3039
        %3054 = vmatmul.bf16.gmra.mxu0 %v3044
        %v3055 = vpop.f32.mrf.mxu0
        %v3056 = vadd.f32 0.0, %v3055
        %v3057 = vpop.f32.mrf.mxu0
        %3058 = vdwg.mxu0
        %v3059 = vadd.f32 %v2722, %v3056
        %v3060 = vadd.f32 %v1672, %v3059
        %v3061 = vld [vmem:[%s1113] sm:$0x1]
        %v3063 = vperm.slane %v3061, 0
        %v3065 = vadd.f32 %v3060, %v3063
        %v3066 = vld [vmem:[%s1116] sm:$0x1]
        %v3067 = vld [vmem:[%s1119] sm:$0x1]
        %v3068 = vsel %vm1675, %v3065, 0.0
        %3069 = vadd.xlane.f32.xlu0 %v3068
        %v3070 = vpop.xlane.xlu0 %3069
        %v3071 = vmul.f32 %v3070, %v1685
        %v3072 = vsub.f32 %v3065, %v3071
        %v3073 = vmul.f32 %v3072, %v3072
        %v3074 = vsel %vm1675, %v3073, 0.0
        %3075 = vadd.xlane.f32.xlu0 %v3074
        %v3076 = vpop.xlane.xlu0 %3075
        %v3077 = vmul.f32 %v3076, %v1685
        %v3078 = vadd.f32 %v3077, 1e-05
        %v3079 = vrsqrt.pop %v3078
        %v3080 = vmul.f32 %v3079, %v3078
        %v3081 = vmul.f32 %v3080, %v3079
        %v3082 = vmul.f32 0.5, %v3081
        %v3083 = vsub.f32 1.5, %v3082
        %v3084 = vmul.f32 %v3079, %v3083
        %vm3085 = vweird.f32 %v3078
        %vm3086 = vweird.f32 %v3079
        %vm3087 = vmor %vm3085, %vm3086
        %v3088 = vsel %vm3087, %v3079, %v3084
        %v3089 = vmul.f32 %v3072, %v3088
        %v3091 = vperm.slane %v3066, 0
        %v3093 = vmul.f32 %v3089, %v3091
        %v3095 = vperm.slane %v3067, 0
        %v3097 = vadd.f32 %v3093, %v3095
        %v3098 = vpack.c.bf16 %v3097, %v3097
        %v3099 = vld [vmem:[%s1124] sm:$0xff]
        %v3100 = vld [vmem:[%s1124 + $0x8] sm:$0xff]
        %v3101 = vld [vmem:[%s1124 + $0x10] sm:$0xff]
        %v3102 = vld [vmem:[%s1124 + $0x18] sm:$0xff]
        %v3103 = vld [vmem:[%s1124 + $0x20] sm:$0xff]
        %v3104 = vld [vmem:[%s1124 + $0x28] sm:$0xff]
        %v3105 = vld [vmem:[%s1124 + $0x30] sm:$0xff]
        %v3106 = vld [vmem:[%s1124 + $0x38] sm:$0xff]
        %v3107 = vld [vmem:[%s1124 + $0x40] sm:$0xff]
        %v3108 = vld [vmem:[%s1124 + $0x48] sm:$0xff]
        %v3109 = vld [vmem:[%s1124 + $0x50] sm:$0xff]
        %v3110 = vld [vmem:[%s1124 + $0x58] sm:$0xff]
        %v3111 = vld [vmem:[%s1124 + $0x60] sm:$0xff]
        %v3112 = vld [vmem:[%s1124 + $0x68] sm:$0xff]
        %v3113 = vld [vmem:[%s1124 + $0x70] sm:$0xff]
        %v3114 = vld [vmem:[%s1124 + $0x78] sm:$0xff]
        %v3115 = vld [vmem:[%s1124 + $0x80] sm:$0xff]
        %v3116 = vld [vmem:[%s1124 + $0x88] sm:$0xff]
        %v3117 = vld [vmem:[%s1124 + $0x90] sm:$0xff]
        %v3118 = vld [vmem:[%s1124 + $0x98] sm:$0xff]
        %v3119 = vld [vmem:[%s1124 + $0xa0] sm:$0xff]
        %v3120 = vld [vmem:[%s1124 + $0xa8] sm:$0xff]
        %v3121 = vld [vmem:[%s1124 + $0xb0] sm:$0xff]
        %v3122 = vld [vmem:[%s1124 + $0xb8] sm:$0xff]
        %v3123 = vld [vmem:[%s1124 + $0xc0] sm:$0xff]
        %v3124 = vld [vmem:[%s1124 + $0xc8] sm:$0xff]
        %v3125 = vld [vmem:[%s1124 + $0xd0] sm:$0xff]
        %v3126 = vld [vmem:[%s1124 + $0xd8] sm:$0xff]
        %v3127 = vld [vmem:[%s1124 + $0xe0] sm:$0xff]
        %v3128 = vld [vmem:[%s1124 + $0xe8] sm:$0xff]
        %v3129 = vld [vmem:[%s1124 + $0xf0] sm:$0xff]
        %v3130 = vld [vmem:[%s1124 + $0xf8] sm:$0xff]
        %v3131 = vld [vmem:[%s1128] sm:$0xf]
        %v3133 = vperm.slane %v3131, 0
        %v3134 = vperm.slane %v3131, 1
        %v3135 = vperm.slane %v3131, 2
        %v3136 = vperm.slane %v3131, 3
        %v3173 = vunpack.c.l.b16 %v3099
        %v3174 = vunpack.c.h.b16 %v3099
        %v3175 = vunpack.c.l.b16 %v3100
        %v3176 = vunpack.c.h.b16 %v3100
        %v3177 = vunpack.c.l.b16 %v3101
        %v3178 = vunpack.c.h.b16 %v3101
        %v3179 = vunpack.c.l.b16 %v3102
        %v3180 = vunpack.c.h.b16 %v3102
        %v3181 = vunpack.c.l.b16 %v3103
        %v3182 = vunpack.c.h.b16 %v3103
        %v3183 = vunpack.c.l.b16 %v3104
        %v3184 = vunpack.c.h.b16 %v3104
        %v3185 = vunpack.c.l.b16 %v3105
        %v3186 = vunpack.c.h.b16 %v3105
        %v3187 = vunpack.c.l.b16 %v3106
        %v3188 = vunpack.c.h.b16 %v3106
        %v3189 = vunpack.c.l.b16 %v3107
        %v3190 = vunpack.c.h.b16 %v3107
        %v3191 = vunpack.c.l.b16 %v3108
        %v3192 = vunpack.c.h.b16 %v3108
        %v3193 = vunpack.c.l.b16 %v3109
        %v3194 = vunpack.c.h.b16 %v3109
        %v3195 = vunpack.c.l.b16 %v3110
        %v3196 = vunpack.c.h.b16 %v3110
        %v3197 = vunpack.c.l.b16 %v3111
        %v3198 = vunpack.c.h.b16 %v3111
        %v3199 = vunpack.c.l.b16 %v3112
        %v3200 = vunpack.c.h.b16 %v3112
        %v3201 = vunpack.c.l.b16 %v3113
        %v3202 = vunpack.c.h.b16 %v3113
        %v3203 = vunpack.c.l.b16 %v3114
        %v3204 = vunpack.c.h.b16 %v3114
        %v3205 = vunpack.c.l.b16 %v3115
        %v3206 = vunpack.c.h.b16 %v3115
        %v3207 = vunpack.c.l.b16 %v3116
        %v3208 = vunpack.c.h.b16 %v3116
        %v3209 = vunpack.c.l.b16 %v3117
        %v3210 = vunpack.c.h.b16 %v3117
        %v3211 = vunpack.c.l.b16 %v3118
        %v3212 = vunpack.c.h.b16 %v3118
        %v3213 = vunpack.c.l.b16 %v3119
        %v3214 = vunpack.c.h.b16 %v3119
        %v3215 = vunpack.c.l.b16 %v3120
        %v3216 = vunpack.c.h.b16 %v3120
        %v3217 = vunpack.c.l.b16 %v3121
        %v3218 = vunpack.c.h.b16 %v3121
        %v3219 = vunpack.c.l.b16 %v3122
        %v3220 = vunpack.c.h.b16 %v3122
        %v3221 = vunpack.c.l.b16 %v3123
        %v3222 = vunpack.c.h.b16 %v3123
        %v3223 = vunpack.c.l.b16 %v3124
        %v3224 = vunpack.c.h.b16 %v3124
        %v3225 = vunpack.c.l.b16 %v3125
        %v3226 = vunpack.c.h.b16 %v3125
        %v3227 = vunpack.c.l.b16 %v3126
        %v3228 = vunpack.c.h.b16 %v3126
        %v3229 = vunpack.c.l.b16 %v3127
        %v3230 = vunpack.c.h.b16 %v3127
        %v3231 = vunpack.c.l.b16 %v3128
        %v3232 = vunpack.c.h.b16 %v3128
        %v3233 = vunpack.c.l.b16 %v3129
        %v3234 = vunpack.c.h.b16 %v3129
        %v3235 = vunpack.c.l.b16 %v3130
        %v3236 = vunpack.c.h.b16 %v3130
        %v3237 = vpack.c.b16 %v3177, %v3173
        %v3238 = vpack.c.b16 %v3178, %v3174
        %v3239 = vpack.c.b16 %v3179, %v3175
        %v3240 = vpack.c.b16 %v3180, %v3176
        %v3241 = vpack.c.b16 %v3185, %v3181
        %v3242 = vpack.c.b16 %v3186, %v3182
        %v3243 = vpack.c.b16 %v3187, %v3183
        %v3244 = vpack.c.b16 %v3188, %v3184
        %v3245 = vpack.c.b16 %v3193, %v3189
        %v3246 = vpack.c.b16 %v3194, %v3190
        %v3247 = vpack.c.b16 %v3195, %v3191
        %v3248 = vpack.c.b16 %v3196, %v3192
        %v3249 = vpack.c.b16 %v3201, %v3197
        %v3250 = vpack.c.b16 %v3202, %v3198
        %v3251 = vpack.c.b16 %v3203, %v3199
        %v3252 = vpack.c.b16 %v3204, %v3200
        %v3253 = vpack.c.b16 %v3209, %v3205
        %v3254 = vpack.c.b16 %v3210, %v3206
        %v3255 = vpack.c.b16 %v3211, %v3207
        %v3256 = vpack.c.b16 %v3212, %v3208
        %v3257 = vpack.c.b16 %v3217, %v3213
        %v3258 = vpack.c.b16 %v3218, %v3214
        %v3259 = vpack.c.b16 %v3219, %v3215
        %v3260 = vpack.c.b16 %v3220, %v3216
        %v3261 = vpack.c.b16 %v3225, %v3221
        %v3262 = vpack.c.b16 %v3226, %v3222
        %v3263 = vpack.c.b16 %v3227, %v3223
        %v3264 = vpack.c.b16 %v3228, %v3224
        %v3265 = vpack.c.b16 %v3233, %v3229
        %v3266 = vpack.c.b16 %v3234, %v3230
        %v3267 = vpack.c.b16 %v3235, %v3231
        %v3268 = vpack.c.b16 %v3236, %v3232
        %3301 = vmatpush.bf16.msra.mxu0 %v3265
        %3302 = vmatpush.bf16.msra.mxu0 %v3261
        %3303 = vmatpush.bf16.msra.mxu0 %v3257
        %3304 = vmatpush.bf16.msra.mxu0 %v3253
        %3305 = vmatpush.bf16.msra.mxu0 %v3249
        %3306 = vmatpush.bf16.msra.mxu0 %v3245
        %3307 = vmatpush.bf16.msra.mxu0 %v3241
        %3308 = vmatpush.bf16.msra.mxu0 %v3237
        %3309 = vmatmul.bf16.gmra.mxu0 %v3098
        %v3310 = vpop.f32.mrf.mxu0
        %v3311 = vadd.f32 %v3133, %v3310
        %v3312 = vpop.f32.mrf.mxu0
        %3313 = vdwg.mxu0
        %3314 = vmatpush.bf16.msra.mxu0 %v3266
        %3315 = vmatpush.bf16.msra.mxu0 %v3262
        %3316 = vmatpush.bf16.msra.mxu0 %v3258
        %3317 = vmatpush.bf16.msra.mxu0 %v3254
        %3318 = vmatpush.bf16.msra.mxu0 %v3250
        %3319 = vmatpush.bf16.msra.mxu0 %v3246
        %3320 = vmatpush.bf16.msra.mxu0 %v3242
        %3321 = vmatpush.bf16.msra.mxu0 %v3238
        %3322 = vmatmul.bf16.gmra.mxu0 %v3098
        %v3323 = vpop.f32.mrf.mxu0
        %v3324 = vadd.f32 %v3134, %v3323
        %v3325 = vpop.f32.mrf.mxu0
        %3326 = vdwg.mxu0
        %3327 = vmatpush.bf16.msra.mxu0 %v3267
        %3328 = vmatpush.bf16.msra.mxu0 %v3263
        %3329 = vmatpush.bf16.msra.mxu0 %v3259
        %3330 = vmatpush.bf16.msra.mxu0 %v3255
        %3331 = vmatpush.bf16.msra.mxu0 %v3251
        %3332 = vmatpush.bf16.msra.mxu0 %v3247
        %3333 = vmatpush.bf16.msra.mxu0 %v3243
        %3334 = vmatpush.bf16.msra.mxu0 %v3239
        %3335 = vmatmul.bf16.gmra.mxu0 %v3098
        %v3336 = vpop.f32.mrf.mxu0
        %v3337 = vadd.f32 %v3135, %v3336
        %v3338 = vpop.f32.mrf.mxu0
        %3339 = vdwg.mxu0
        %3340 = vmatpush.bf16.msra.mxu0 %v3268
        %3341 = vmatpush.bf16.msra.mxu0 %v3264
        %3342 = vmatpush.bf16.msra.mxu0 %v3260
        %3343 = vmatpush.bf16.msra.mxu0 %v3256
        %3344 = vmatpush.bf16.msra.mxu0 %v3252
        %3345 = vmatpush.bf16.msra.mxu0 %v3248
        %3346 = vmatpush.bf16.msra.mxu0 %v3244
        %3347 = vmatpush.bf16.msra.mxu0 %v3240
        %3348 = vmatmul.bf16.gmra.mxu0 %v3098
        %v3349 = vpop.f32.mrf.mxu0
        %v3350 = vadd.f32 %v3136, %v3349
        %v3351 = vpop.f32.mrf.mxu0
        %3352 = vdwg.mxu0
        %v3353 = vmul.f32 %v3311, 1.702
        %v3354 = vmul.f32 %v3324, 1.702
        %v3355 = vmul.f32 %v3337, 1.702
        %v3356 = vmul.f32 %v3350, 1.702
        %v3357 = vxor.u32 %v3353, 2147483648
        %v3358 = vxor.u32 %v3354, 2147483648
        %v3359 = vxor.u32 %v3355, 2147483648
        %v3360 = vxor.u32 %v3356, 2147483648
        %v3361 = vmul.f32 %v3357, 1.442695
        %v3362 = vpow.pop %v3361
        %v3363 = vmul.f32 %v3358, 1.442695
        %v3364 = vpow.pop %v3363
        %v3365 = vmul.f32 %v3359, 1.442695
        %v3366 = vpow.pop %v3365
        %v3367 = vmul.f32 %v3360, 1.442695
        %v3368 = vpow.pop %v3367
        %v3369 = vadd.f32 %v3362, 1.0
        %v3370 = vadd.f32 %v3364, 1.0
        %v3371 = vadd.f32 %v3366, 1.0
        %v3372 = vadd.f32 %v3368, 1.0
        %v3373 = vrcp.pop %v3369
        %v3374 = vmul.f32 %v3369, %v3373
        %v3375 = vsub.f32 1.0, %v3374
        %v3376 = vmul.f32 %v3373, %v3375
        %v3377 = vadd.f32 %v3373, %v3376
        %vm3378 = vweird.f32 %v3369
        %vm3379 = vweird.f32 %v3373
        %vm3380 = vmor %vm3378, %vm3379
        %v3381 = vsel %vm3380, %v3373, %v3377
        %v3382 = vand.u32 2147483647, %v3369
        %vm3383 = vcmp.eq.f32.partialorder %v3382, 8.507059e+37
        %v3384 = vand.u32 %v3369, 2147483648
        %v3385 = vor.u32 1.1754944e-38, %v3384
        %v3386 = vsel %vm3383, %v3385, %v3381
        %v3387 = vmul.f32 1.0, %v3386
        %v3388 = vrcp.pop %v3370
        %v3389 = vmul.f32 %v3370, %v3388
        %v3390 = vsub.f32 1.0, %v3389
        %v3391 = vmul.f32 %v3388, %v3390
        %v3392 = vadd.f32 %v3388, %v3391
        %vm3393 = vweird.f32 %v3370
        %vm3394 = vweird.f32 %v3388
        %vm3395 = vmor %vm3393, %vm3394
        %v3396 = vsel %vm3395, %v3388, %v3392
        %v3397 = vand.u32 2147483647, %v3370
        %vm3398 = vcmp.eq.f32.partialorder %v3397, 8.507059e+37
        %v3399 = vand.u32 %v3370, 2147483648
        %v3400 = vor.u32 1.1754944e-38, %v3399
        %v3401 = vsel %vm3398, %v3400, %v3396
        %v3402 = vmul.f32 1.0, %v3401
        %v3403 = vrcp.pop %v3371
        %v3404 = vmul.f32 %v3371, %v3403
        %v3405 = vsub.f32 1.0, %v3404
        %v3406 = vmul.f32 %v3403, %v3405
        %v3407 = vadd.f32 %v3403, %v3406
        %vm3408 = vweird.f32 %v3371
        %vm3409 = vweird.f32 %v3403
        %vm3410 = vmor %vm3408, %vm3409
        %v3411 = vsel %vm3410, %v3403, %v3407
        %v3412 = vand.u32 2147483647, %v3371
        %vm3413 = vcmp.eq.f32.partialorder %v3412, 8.507059e+37
        %v3414 = vand.u32 %v3371, 2147483648
        %v3415 = vor.u32 1.1754944e-38, %v3414
        %v3416 = vsel %vm3413, %v3415, %v3411
        %v3417 = vmul.f32 1.0, %v3416
        %v3418 = vrcp.pop %v3372
        %v3419 = vmul.f32 %v3372, %v3418
        %v3420 = vsub.f32 1.0, %v3419
        %v3421 = vmul.f32 %v3418, %v3420
        %v3422 = vadd.f32 %v3418, %v3421
        %vm3423 = vweird.f32 %v3372
        %vm3424 = vweird.f32 %v3418
        %vm3425 = vmor %vm3423, %vm3424
        %v3426 = vsel %vm3425, %v3418, %v3422
        %v3427 = vand.u32 2147483647, %v3372
        %vm3428 = vcmp.eq.f32.partialorder %v3427, 8.507059e+37
        %v3429 = vand.u32 %v3372, 2147483648
        %v3430 = vor.u32 1.1754944e-38, %v3429
        %v3431 = vsel %vm3428, %v3430, %v3426
        %v3432 = vmul.f32 1.0, %v3431
        %v3433 = vmul.f32 %v3311, %v3387
        %v3434 = vmul.f32 %v3324, %v3402
        %v3435 = vmul.f32 %v3337, %v3417
        %v3436 = vmul.f32 %v3350, %v3432
        %v3437 = vpack.c.bf16 %v3433, %v3433
        %v3438 = vpack.c.bf16 %v3434, %v3434
        %v3439 = vpack.c.bf16 %v3435, %v3435
        %v3440 = vpack.c.bf16 %v3436, %v3436
        %v3441 = vld [vmem:[%s1133] sm:$0xf]
        %v3442 = vld [vmem:[%s1133 + $0x4] sm:$0xf]
        %v3443 = vld [vmem:[%s1133 + $0x8] sm:$0xf]
        %v3444 = vld [vmem:[%s1133 + $0xc] sm:$0xf]
        %v3445 = vld [vmem:[%s1133 + $0x10] sm:$0xf]
        %v3446 = vld [vmem:[%s1133 + $0x14] sm:$0xf]
        %v3447 = vld [vmem:[%s1133 + $0x18] sm:$0xf]
        %v3448 = vld [vmem:[%s1133 + $0x1c] sm:$0xf]
        %v3449 = vld [vmem:[%s1133 + $0x20] sm:$0xf]
        %v3450 = vld [vmem:[%s1133 + $0x24] sm:$0xf]
        %v3451 = vld [vmem:[%s1133 + $0x28] sm:$0xf]
        %v3452 = vld [vmem:[%s1133 + $0x2c] sm:$0xf]
        %v3453 = vld [vmem:[%s1133 + $0x30] sm:$0xf]
        %v3454 = vld [vmem:[%s1133 + $0x34] sm:$0xf]
        %v3455 = vld [vmem:[%s1133 + $0x38] sm:$0xf]
        %v3456 = vld [vmem:[%s1133 + $0x3c] sm:$0xf]
        %v3457 = vld [vmem:[%s1133 + $0x40] sm:$0xf]
        %v3458 = vld [vmem:[%s1133 + $0x44] sm:$0xf]
        %v3459 = vld [vmem:[%s1133 + $0x48] sm:$0xf]
        %v3460 = vld [vmem:[%s1133 + $0x4c] sm:$0xf]
        %v3461 = vld [vmem:[%s1133 + $0x50] sm:$0xf]
        %v3462 = vld [vmem:[%s1133 + $0x54] sm:$0xf]
        %v3463 = vld [vmem:[%s1133 + $0x58] sm:$0xf]
        %v3464 = vld [vmem:[%s1133 + $0x5c] sm:$0xf]
        %v3465 = vld [vmem:[%s1133 + $0x60] sm:$0xf]
        %v3466 = vld [vmem:[%s1133 + $0x64] sm:$0xf]
        %v3467 = vld [vmem:[%s1133 + $0x68] sm:$0xf]
        %v3468 = vld [vmem:[%s1133 + $0x6c] sm:$0xf]
        %v3469 = vld [vmem:[%s1133 + $0x70] sm:$0xf]
        %v3470 = vld [vmem:[%s1133 + $0x74] sm:$0xf]
        %v3471 = vld [vmem:[%s1133 + $0x78] sm:$0xf]
        %v3472 = vld [vmem:[%s1133 + $0x7c] sm:$0xf]
        %v3473 = vld [vmem:[%s1133 + $0x80] sm:$0xf]
        %v3474 = vld [vmem:[%s1133 + $0x84] sm:$0xf]
        %v3475 = vld [vmem:[%s1133 + $0x88] sm:$0xf]
        %v3476 = vld [vmem:[%s1133 + $0x8c] sm:$0xf]
        %v3477 = vld [vmem:[%s1133 + $0x90] sm:$0xf]
        %v3478 = vld [vmem:[%s1133 + $0x94] sm:$0xf]
        %v3479 = vld [vmem:[%s1133 + $0x98] sm:$0xf]
        %v3480 = vld [vmem:[%s1133 + $0x9c] sm:$0xf]
        %v3481 = vld [vmem:[%s1133 + $0xa0] sm:$0xf]
        %v3482 = vld [vmem:[%s1133 + $0xa4] sm:$0xf]
        %v3483 = vld [vmem:[%s1133 + $0xa8] sm:$0xf]
        %v3484 = vld [vmem:[%s1133 + $0xac] sm:$0xf]
        %v3485 = vld [vmem:[%s1133 + $0xb0] sm:$0xf]
        %v3486 = vld [vmem:[%s1133 + $0xb4] sm:$0xf]
        %v3487 = vld [vmem:[%s1133 + $0xb8] sm:$0xf]
        %v3488 = vld [vmem:[%s1133 + $0xbc] sm:$0xf]
        %v3489 = vld [vmem:[%s1133 + $0xc0] sm:$0xf]
        %v3490 = vld [vmem:[%s1133 + $0xc4] sm:$0xf]
        %v3491 = vld [vmem:[%s1133 + $0xc8] sm:$0xf]
        %v3492 = vld [vmem:[%s1133 + $0xcc] sm:$0xf]
        %v3493 = vld [vmem:[%s1133 + $0xd0] sm:$0xf]
        %v3494 = vld [vmem:[%s1133 + $0xd4] sm:$0xf]
        %v3495 = vld [vmem:[%s1133 + $0xd8] sm:$0xf]
        %v3496 = vld [vmem:[%s1133 + $0xdc] sm:$0xf]
        %v3497 = vld [vmem:[%s1133 + $0xe0] sm:$0xf]
        %v3498 = vld [vmem:[%s1133 + $0xe4] sm:$0xf]
        %v3499 = vld [vmem:[%s1133 + $0xe8] sm:$0xf]
        %v3500 = vld [vmem:[%s1133 + $0xec] sm:$0xf]
        %v3501 = vld [vmem:[%s1133 + $0xf0] sm:$0xf]
        %v3502 = vld [vmem:[%s1133 + $0xf4] sm:$0xf]
        %v3503 = vld [vmem:[%s1133 + $0xf8] sm:$0xf]
        %v3504 = vld [vmem:[%s1133 + $0xfc] sm:$0xf]
        %v3505 = vld [vmem:[%s1136] sm:$0x1]
        %v3507 = vperm.slane %v3505, 0
        %v3573 = vunpack.c.l.b16 %v3441
        %v3574 = vunpack.c.l.b16 %v3442
        %v3575 = vunpack.c.l.b16 %v3443
        %v3576 = vunpack.c.l.b16 %v3444
        %v3577 = vunpack.c.l.b16 %v3445
        %v3578 = vunpack.c.l.b16 %v3446
        %v3579 = vunpack.c.l.b16 %v3447
        %v3580 = vunpack.c.l.b16 %v3448
        %v3581 = vunpack.c.l.b16 %v3449
        %v3582 = vunpack.c.l.b16 %v3450
        %v3583 = vunpack.c.l.b16 %v3451
        %v3584 = vunpack.c.l.b16 %v3452
        %v3585 = vunpack.c.l.b16 %v3453
        %v3586 = vunpack.c.l.b16 %v3454
        %v3587 = vunpack.c.l.b16 %v3455
        %v3588 = vunpack.c.l.b16 %v3456
        %v3589 = vunpack.c.l.b16 %v3457
        %v3590 = vunpack.c.l.b16 %v3458
        %v3591 = vunpack.c.l.b16 %v3459
        %v3592 = vunpack.c.l.b16 %v3460
        %v3593 = vunpack.c.l.b16 %v3461
        %v3594 = vunpack.c.l.b16 %v3462
        %v3595 = vunpack.c.l.b16 %v3463
        %v3596 = vunpack.c.l.b16 %v3464
        %v3597 = vunpack.c.l.b16 %v3465
        %v3598 = vunpack.c.l.b16 %v3466
        %v3599 = vunpack.c.l.b16 %v3467
        %v3600 = vunpack.c.l.b16 %v3468
        %v3601 = vunpack.c.l.b16 %v3469
        %v3602 = vunpack.c.l.b16 %v3470
        %v3603 = vunpack.c.l.b16 %v3471
        %v3604 = vunpack.c.l.b16 %v3472
        %v3605 = vunpack.c.l.b16 %v3473
        %v3606 = vunpack.c.l.b16 %v3474
        %v3607 = vunpack.c.l.b16 %v3475
        %v3608 = vunpack.c.l.b16 %v3476
        %v3609 = vunpack.c.l.b16 %v3477
        %v3610 = vunpack.c.l.b16 %v3478
        %v3611 = vunpack.c.l.b16 %v3479
        %v3612 = vunpack.c.l.b16 %v3480
        %v3613 = vunpack.c.l.b16 %v3481
        %v3614 = vunpack.c.l.b16 %v3482
        %v3615 = vunpack.c.l.b16 %v3483
        %v3616 = vunpack.c.l.b16 %v3484
        %v3617 = vunpack.c.l.b16 %v3485
        %v3618 = vunpack.c.l.b16 %v3486
        %v3619 = vunpack.c.l.b16 %v3487
        %v3620 = vunpack.c.l.b16 %v3488
        %v3621 = vunpack.c.l.b16 %v3489
        %v3622 = vunpack.c.l.b16 %v3490
        %v3623 = vunpack.c.l.b16 %v3491
        %v3624 = vunpack.c.l.b16 %v3492
        %v3625 = vunpack.c.l.b16 %v3493
        %v3626 = vunpack.c.l.b16 %v3494
        %v3627 = vunpack.c.l.b16 %v3495
        %v3628 = vunpack.c.l.b16 %v3496
        %v3629 = vunpack.c.l.b16 %v3497
        %v3630 = vunpack.c.l.b16 %v3498
        %v3631 = vunpack.c.l.b16 %v3499
        %v3632 = vunpack.c.l.b16 %v3500
        %v3633 = vunpack.c.l.b16 %v3501
        %v3634 = vunpack.c.l.b16 %v3502
        %v3635 = vunpack.c.l.b16 %v3503
        %v3636 = vunpack.c.l.b16 %v3504
        %v3637 = vpack.c.b16 %v3574, %v3573
        %v3638 = vpack.c.b16 %v3576, %v3575
        %v3639 = vpack.c.b16 %v3578, %v3577
        %v3640 = vpack.c.b16 %v3580, %v3579
        %v3641 = vpack.c.b16 %v3582, %v3581
        %v3642 = vpack.c.b16 %v3584, %v3583
        %v3643 = vpack.c.b16 %v3586, %v3585
        %v3644 = vpack.c.b16 %v3588, %v3587
        %v3645 = vpack.c.b16 %v3590, %v3589
        %v3646 = vpack.c.b16 %v3592, %v3591
        %v3647 = vpack.c.b16 %v3594, %v3593
        %v3648 = vpack.c.b16 %v3596, %v3595
        %v3649 = vpack.c.b16 %v3598, %v3597
        %v3650 = vpack.c.b16 %v3600, %v3599
        %v3651 = vpack.c.b16 %v3602, %v3601
        %v3652 = vpack.c.b16 %v3604, %v3603
        %v3653 = vpack.c.b16 %v3606, %v3605
        %v3654 = vpack.c.b16 %v3608, %v3607
        %v3655 = vpack.c.b16 %v3610, %v3609
        %v3656 = vpack.c.b16 %v3612, %v3611
        %v3657 = vpack.c.b16 %v3614, %v3613
        %v3658 = vpack.c.b16 %v3616, %v3615
        %v3659 = vpack.c.b16 %v3618, %v3617
        %v3660 = vpack.c.b16 %v3620, %v3619
        %v3661 = vpack.c.b16 %v3622, %v3621
        %v3662 = vpack.c.b16 %v3624, %v3623
        %v3663 = vpack.c.b16 %v3626, %v3625
        %v3664 = vpack.c.b16 %v3628, %v3627
        %v3665 = vpack.c.b16 %v3630, %v3629
        %v3666 = vpack.c.b16 %v3632, %v3631
        %v3667 = vpack.c.b16 %v3634, %v3633
        %v3668 = vpack.c.b16 %v3636, %v3635
        %3701 = vmatpush.bf16.msra.mxu0 %v3644
        %3702 = vmatpush.bf16.msra.mxu0 %v3643
        %3703 = vmatpush.bf16.msra.mxu0 %v3642
        %3704 = vmatpush.bf16.msra.mxu0 %v3641
        %3705 = vmatpush.bf16.msra.mxu0 %v3640
        %3706 = vmatpush.bf16.msra.mxu0 %v3639
        %3707 = vmatpush.bf16.msra.mxu0 %v3638
        %3708 = vmatpush.bf16.msra.mxu0 %v3637
        %3709 = vmatmul.bf16.gmra.mxu0 %v3437
        %v3710 = vpop.f32.mrf.mxu0
        %v3711 = vadd.f32 %v3507, %v3710
        %v3712 = vpop.f32.mrf.mxu0
        %3713 = vdwg.mxu0
        %3714 = vmatpush.bf16.msra.mxu0 %v3652
        %3715 = vmatpush.bf16.msra.mxu0 %v3651
        %3716 = vmatpush.bf16.msra.mxu0 %v3650
        %3717 = vmatpush.bf16.msra.mxu0 %v3649
        %3718 = vmatpush.bf16.msra.mxu0 %v3648
        %3719 = vmatpush.bf16.msra.mxu0 %v3647
        %3720 = vmatpush.bf16.msra.mxu0 %v3646
        %3721 = vmatpush.bf16.msra.mxu0 %v3645
        %3722 = vmatmul.bf16.gmra.mxu0 %v3438
        %v3723 = vpop.f32.mrf.mxu0
        %v3724 = vadd.f32 %v3711, %v3723
        %v3725 = vpop.f32.mrf.mxu0
        %3726 = vdwg.mxu0
        %3727 = vmatpush.bf16.msra.mxu0 %v3660
        %3728 = vmatpush.bf16.msra.mxu0 %v3659
        %3729 = vmatpush.bf16.msra.mxu0 %v3658
        %3730 = vmatpush.bf16.msra.mxu0 %v3657
        %3731 = vmatpush.bf16.msra.mxu0 %v3656
        %3732 = vmatpush.bf16.msra.mxu0 %v3655
        %3733 = vmatpush.bf16.msra.mxu0 %v3654
        %3734 = vmatpush.bf16.msra.mxu0 %v3653
        %3735 = vmatmul.bf16.gmra.mxu0 %v3439
        %v3736 = vpop.f32.mrf.mxu0
        %v3737 = vadd.f32 %v3724, %v3736
        %v3738 = vpop.f32.mrf.mxu0
        %3739 = vdwg.mxu0
        %3740 = vmatpush.bf16.msra.mxu0 %v3668
        %3741 = vmatpush.bf16.msra.mxu0 %v3667
        %3742 = vmatpush.bf16.msra.mxu0 %v3666
        %3743 = vmatpush.bf16.msra.mxu0 %v3665
        %3744 = vmatpush.bf16.msra.mxu0 %v3664
        %3745 = vmatpush.bf16.msra.mxu0 %v3663
        %3746 = vmatpush.bf16.msra.mxu0 %v3662
        %3747 = vmatpush.bf16.msra.mxu0 %v3661
        %3748 = vmatmul.bf16.gmra.mxu0 %v3440
        %v3749 = vpop.f32.mrf.mxu0
        %v3750 = vadd.f32 %v3737, %v3749
        %v3751 = vpop.f32.mrf.mxu0
        %3752 = vdwg.mxu0
        %v3753 = vadd.f32 %v3065, %v3750
        %3754 = vst [vmem:[#allocation2] sm:$0x1f] %v3753
        %p3755 = scmp.eq.s32.totalorder %s51, 1
        // Predicated region
        $region133: #{linear_clip_forward.1} parent=127 // pred_check
          %p3756 = pneg %p3755
        $region134: #{linear_clip_forward.1} parent=127 // pred_check_branch
          %3758 = sbr.rel (%p3756) target = $region136
        $region135: #{linear_clip_forward.1} parent=127 // pred_region
          %v3759 = vld [vmem:[#allocation2] sm:$0x1]
          %v3760 = vld [vmem:[%s22] sm:$0x1]
          %v3761 = vld [vmem:[%s23] sm:$0x1]
          %vm3762 = vcmask 1040384
          %v3763 = vsel %vm3762, %v3759, 0.0
          %3764 = vadd.xlane.f32.xlu0 %v3763
          %v3765 = vpop.xlane.xlu0 %3764
          %v3766 = vmul.f32 %v3765, %v1685
          %v3767 = vsub.f32 %v3759, %v3766
          %v3768 = vmul.f32 %v3767, %v3767
          %v3769 = vsel %vm3762, %v3768, 0.0
          %3770 = vadd.xlane.f32.xlu0 %v3769
          %v3771 = vpop.xlane.xlu0 %3770
          %v3772 = vmul.f32 %v3771, %v1685
          %v3773 = vadd.f32 %v3772, 1e-05
          %v3774 = vrsqrt.pop %v3773
          %v3775 = vmul.f32 %v3774, %v3773
          %v3776 = vmul.f32 %v3775, %v3774
          %v3777 = vmul.f32 0.5, %v3776
          %v3778 = vsub.f32 1.5, %v3777
          %v3779 = vmul.f32 %v3774, %v3778
          %vm3780 = vweird.f32 %v3773
          %vm3781 = vweird.f32 %v3774
          %vm3782 = vmor %vm3780, %vm3781
          %v3783 = vsel %vm3782, %v3774, %v3779
          %v3784 = vmul.f32 %v3767, %v3783
          %v3785 = vmul.f32 %v3784, %v3760
          %v3786 = vadd.f32 %v3785, %v3761
          %v3787 = vpack.c.bf16 %v3786, %v3786
          %v3788 = vld [vmem:[%s24] sm:$0xf]
          %v3789 = vld [vmem:[%s24 + $0x4] sm:$0xf]
          %v3790 = vld [vmem:[%s24 + $0x8] sm:$0xf]
          %v3791 = vld [vmem:[%s24 + $0xc] sm:$0xf]
          %v3792 = vld [vmem:[%s24 + $0x10] sm:$0xf]
          %v3793 = vld [vmem:[%s24 + $0x14] sm:$0xf]
          %v3794 = vld [vmem:[%s24 + $0x18] sm:$0xf]
          %v3795 = vld [vmem:[%s24 + $0x1c] sm:$0xf]
          %v3796 = vld [vmem:[%s24 + $0x20] sm:$0xf]
          %v3797 = vld [vmem:[%s24 + $0x24] sm:$0xf]
          %v3798 = vld [vmem:[%s24 + $0x28] sm:$0xf]
          %v3799 = vld [vmem:[%s24 + $0x2c] sm:$0xf]
          %v3800 = vld [vmem:[%s24 + $0x30] sm:$0xf]
          %v3801 = vld [vmem:[%s24 + $0x34] sm:$0xf]
          %v3802 = vld [vmem:[%s24 + $0x38] sm:$0xf]
          %v3803 = vld [vmem:[%s24 + $0x3c] sm:$0xf]
          %v3820 = vunpack.c.l.b16 %v3788
          %v3821 = vunpack.c.l.b16 %v3789
          %v3822 = vunpack.c.l.b16 %v3790
          %v3823 = vunpack.c.l.b16 %v3791
          %v3824 = vunpack.c.l.b16 %v3792
          %v3825 = vunpack.c.l.b16 %v3793
          %v3826 = vunpack.c.l.b16 %v3794
          %v3827 = vunpack.c.l.b16 %v3795
          %v3828 = vunpack.c.l.b16 %v3796
          %v3829 = vunpack.c.l.b16 %v3797
          %v3830 = vunpack.c.l.b16 %v3798
          %v3831 = vunpack.c.l.b16 %v3799
          %v3832 = vunpack.c.l.b16 %v3800
          %v3833 = vunpack.c.l.b16 %v3801
          %v3834 = vunpack.c.l.b16 %v3802
          %v3835 = vunpack.c.l.b16 %v3803
          %v3836 = vpack.c.b16 %v3821, %v3820
          %v3837 = vpack.c.b16 %v3823, %v3822
          %v3838 = vpack.c.b16 %v3825, %v3824
          %v3839 = vpack.c.b16 %v3827, %v3826
          %v3840 = vpack.c.b16 %v3829, %v3828
          %v3841 = vpack.c.b16 %v3831, %v3830
          %v3842 = vpack.c.b16 %v3833, %v3832
          %v3843 = vpack.c.b16 %v3835, %v3834
          %3852 = vmatpush.bf16.msra.mxu0 %v3843
          %3853 = vmatpush.bf16.msra.mxu0 %v3842
          %3854 = vmatpush.bf16.msra.mxu0 %v3841
          %3855 = vmatpush.bf16.msra.mxu0 %v3840
          %3856 = vmatpush.bf16.msra.mxu0 %v3839
          %3857 = vmatpush.bf16.msra.mxu0 %v3838
          %3858 = vmatpush.bf16.msra.mxu0 %v3837
          %3859 = vmatpush.bf16.msra.mxu0 %v3836
          %3860 = vmatmul.bf16.gmra.mxu0 %v3787
          %v3861 = vpop.f32.mrf.mxu0
          %v3862 = vadd.f32 0.0, %v3861
          %v3863 = vpop.f32.mrf.mxu0
          %3864 = vdwg.mxu0
          %v3865 = vmul.f32 %v3862, %v3862
          %v3866 = vsel %vm3762, %v3865, 0.0
          %3867 = vadd.xlane.f32.xlu0 %v3866
          %v3868 = vpop.xlane.xlu0 %3867
          %v3869 = vadd.f32 %v3868, 1e-12
          %v3870 = vrsqrt.pop %v3869
          %v3871 = vmul.f32 %v3870, %v3869
          %v3872 = vmul.f32 %v3871, %v3870
          %v3873 = vmul.f32 0.5, %v3872
          %v3874 = vsub.f32 1.5, %v3873
          %v3875 = vmul.f32 %v3870, %v3874
          %vm3876 = vweird.f32 %v3869
          %vm3877 = vweird.f32 %v3870
          %vm3878 = vmor %vm3876, %vm3877
          %v3879 = vsel %vm3878, %v3870, %v3875
          %v3880 = vmul.f32 %v3862, %v3879
          %3881 = vst [vmem:[%s1061] sm:$0x1] %v3880
          %v3882 = vld [vmem:[%s25] sm:$0xff]
          %v3883 = vld [vmem:[%s25 + $0x8] sm:$0xff]
          %v3884 = vld [vmem:[%s25 + $0x10] sm:$0xff]
          %v3885 = vld [vmem:[%s25 + $0x18] sm:$0xff]
          %v3886 = vld [vmem:[%s25 + $0x20] sm:$0xff]
          %v3887 = vld [vmem:[%s25 + $0x28] sm:$0xff]
          %v3888 = vld [vmem:[%s25 + $0x30] sm:$0xff]
          %v3889 = vld [vmem:[%s25 + $0x38] sm:$0xff]
          %v3890 = vld [vmem:[%s25 + $0x40] sm:$0xff]
          %v3891 = vld [vmem:[%s25 + $0x48] sm:$0xff]
          %v3892 = vld [vmem:[%s25 + $0x50] sm:$0xff]
          %v3893 = vld [vmem:[%s25 + $0x58] sm:$0xff]
          %v3894 = vld [vmem:[%s25 + $0x60] sm:$0xff]
          %v3895 = vld [vmem:[%s25 + $0x68] sm:$0xff]
          %v3896 = vld [vmem:[%s25 + $0x70] sm:$0xff]
          %v3897 = vld [vmem:[%s25 + $0x78] sm:$0xff]
          %v3898 = vld [vmem:[%s26] sm:$0x1]
          %3899 = vmatpush.msra.mxu0 %v3897
          %3900 = vmatpush.msra.mxu0 %v3896
          %3901 = vmatpush.msra.mxu0 %v3895
          %3902 = vmatpush.msra.mxu0 %v3894
          %3903 = vmatpush.msra.mxu0 %v3893
          %3904 = vmatpush.msra.mxu0 %v3892
          %3905 = vmatpush.msra.mxu0 %v3891
          %3906 = vmatpush.msra.mxu0 %v3890
          %3907 = vmatpush.msra.mxu0 %v3889
          %3908 = vmatpush.msra.mxu0 %v3888
          %3909 = vmatpush.msra.mxu0 %v3887
          %3910 = vmatpush.msra.mxu0 %v3886
          %3911 = vmatpush.msra.mxu0 %v3885
          %3912 = vmatpush.msra.mxu0 %v3884
          %3913 = vmatpush.msra.mxu0 %v3883
          %3914 = vmatpush.msra.mxu0 %v3882
          %3915 = vmatmul.f32.gmra.mxu0 %v3880
          %v3916 = vpop.f32.mrf.mxu0
          %v3917 = vadd.f32 %v3898, %v3916
          %3918 = vdwg.mxu0
          %3919 = vst [vmem:[%s1067] sm:$0x1] %v3917
        $region136: #{linear_clip_forward.1} parent=127 // pred_fallthru
          _
        %s3920 = sand.u32 %s718, 1
        %s3921 = scalar_lea.sflag [#allocation4], %s3920
        %s3922 = sand.u32 %s718, 1
        %s3923 = scalar_lea.vmem [#allocation3], %s3922
        %s3924 = sand.u32 %s744, 1
        %s3925 = scalar_lea.sflag [#allocation6], %s3924
        %s3926 = sand.u32 %s744, 1
        %s3927 = scalar_lea.vmem [#allocation5], %s3926
        // Predicated region
        $region137: #{linear_clip_forward.1} parent=127 // pred_check
          %p3928 = pneg %p728
        $region138: #{linear_clip_forward.1} parent=127 // pred_check_branch
          %3930 = sbr.rel (%p3928) target = $region140
        $region139: #{linear_clip_forward.1} parent=127 // pred_region
          %3932 = vsyncadd %s3921, 0
          %s3933 = scalar_lea.hbm %s27, %s50
          %s3935 = sshll.u32 %s3923, 4
          %s3936 = int_to_ptr.vmem [resolvable:$true] %s3935
          %s3937 = sshll.u32 %s3933, 4
          %s3938 = int_to_ptr.hbm [resolvable:$true] %s3937
          %3940 = dma.vmem_to_hbm [thread:$0]  %s3936, 16, %s3938, %s3921
        $region140: #{linear_clip_forward.1} parent=127 // pred_fallthru
          _
        // Predicated region
        $region141: #{linear_clip_forward.1} parent=127 // pred_check
          %p3941 = pneg %p754
        $region142: #{linear_clip_forward.1} parent=127 // pred_check_branch
          %3943 = sbr.rel (%p3941) target = $region144
        $region143: #{linear_clip_forward.1} parent=127 // pred_region
          %3945 = vsyncadd %s3925, 0
          %s3946 = scalar_lea.hbm %s28, %s50
          %s3948 = sshll.u32 %s3927, 4
          %s3949 = int_to_ptr.vmem [resolvable:$true] %s3948
          %s3950 = sshll.u32 %s3946, 4
          %s3951 = int_to_ptr.hbm [resolvable:$true] %s3950
          %3953 = dma.vmem_to_hbm [thread:$0]  %s3949, 16, %s3951, %s3925
        $region144: #{linear_clip_forward.1} parent=127 // pred_fallthru
          _
      $region128: #{linear_clip_forward.1} parent=5 // pred_fallthru
        _
      %p3954 = scmp.le.s32.totalorder 2, %s41
      // Predicated region
      $region145: #{linear_clip_forward.1} parent=5 // pred_check
        %p3955 = pneg %p3954
      $region146: #{linear_clip_forward.1} parent=5 // pred_check_branch
        %3957 = sbr.rel (%p3955) target = $region148
      $region147: #{linear_clip_forward.1} parent=5 // pred_region
        %s3958 = ssub.s32 %s41, 2
        // Predicated region
        $region149: #{linear_clip_forward.1} parent=147 // pred_check
          %p3959 = pneg %p734
        $region150: #{linear_clip_forward.1} parent=147 // pred_check_branch
          %3961 = sbr.rel (%p3959) target = $region152
        $region151: #{linear_clip_forward.1} parent=147 // pred_region
          %s3962 = sand.u32 %s719, 1
          %s3963 = scalar_lea.sflag [#allocation4], %s3962
          %s3964 = sand.u32 %s719, 1
          %s3965 = scalar_lea.vmem [#allocation3], %s3964
          %3967 = dma.done %s3963, 16
        $region152: #{linear_clip_forward.1} parent=147 // pred_fallthru
          _
        // Predicated region
        $region153: #{linear_clip_forward.1} parent=147 // pred_check
          %p3968 = pneg %p760
        $region154: #{linear_clip_forward.1} parent=147 // pred_check_branch
          %3970 = sbr.rel (%p3968) target = $region156
        $region155: #{linear_clip_forward.1} parent=147 // pred_region
          %s3971 = sand.u32 %s745, 1
          %s3972 = scalar_lea.sflag [#allocation6], %s3971
          %s3973 = sand.u32 %s745, 1
          %s3974 = scalar_lea.vmem [#allocation5], %s3973
          %3976 = dma.done %s3972, 16
        $region156: #{linear_clip_forward.1} parent=147 // pred_fallthru
          _
      $region148: #{linear_clip_forward.1} parent=5 // pred_fallthru
        _
    $region6: #{linear_clip_forward.1} parent=1 // loop_footer
      %s45 = sadd.s32 1, %s41
    $region7: #{linear_clip_forward.1} parent=1 // loop_footer_branch
      %40 = sbr.rel target = $region3
    $region8: #{linear_clip_forward.1} parent=1 // loop_exit
      _
    %3977 = vsyncpa [#allocation4], 1
    %s3978 = scalar_lea.sflag [#allocation4], 1
    %3979 = vsyncpa %s3978, 1
    %3980 = vsyncpa [#allocation6], 1
    %s3981 = scalar_lea.sflag [#allocation6], 1
    %3982 = vsyncpa %s3981, 1

</llo_original>
